<compile_context>
chip_gen: v7x
topology: tpu7x:2x2x1
jax: 0.10.0
libtpu: 0.0.40
codegen_flags: <defaults>
</compile_context>

<pallas_src>
import math
import functools

import jax
import jax.numpy as jnp
from jax.experimental import pallas as pl
from jax.experimental.pallas import tpu as pltpu


_NEG_INF = -1e30                      # causal-mask fill value (f32 score space)


@functools.lru_cache(maxsize=None)
def _vmem_limit_bytes():
    """Generation-aware scoped-VMEM budget (~54 MiB on v7x, ~108 MiB on v5e/v6e)."""
    try:
        cap = int(pltpu.get_tpu_info().vmem_capacity_bytes)
        return max(48 * 1024 * 1024, min(112 * 1024 * 1024, int(cap * 0.85)))
    except Exception:
        return 64 * 1024 * 1024       # conservative fallback (fits every gen)


def _compiler_params(semantics):
    return pltpu.CompilerParams(dimension_semantics=semantics,
                                vmem_limit_bytes=_vmem_limit_bytes())


def _rep_spec(shape):
    """Grid-invariant weight: constant index_map + single VMEM buffer."""
    zeros = (0,) * len(shape)
    idx = lambda *args, _z=zeros: _z
    if hasattr(pl, "Buffered"):
        try:
            return pl.BlockSpec(shape, idx, pipeline_mode=pl.Buffered(1))
        except TypeError:
            pass
    return pl.BlockSpec(shape, idx)


def _round_up(n, m):
    return ((n + m - 1) // m) * m


def _choose_tile(n, target, multiple):
    """Largest divisor of n that is <= target and a multiple of `multiple`."""
    if n <= target:
        return n
    fallback = None
    for t in range(target, 0, -1):
        if n % t == 0:
            if t % multiple == 0:
                return t
            if fallback is None:
                fallback = t
    return fallback if fallback is not None else n


# ----------------------------- in-kernel math ------------------------------

def _layernorm(x, w, b, eps=1e-5):
    mu = jnp.mean(x, axis=-1, keepdims=True)
    var = jnp.mean((x - mu) ** 2, axis=-1, keepdims=True)
    return (x - mu) * jax.lax.rsqrt(var + eps) * w + b


def _gelu_tanh(x):
    # GPT-2 uses the tanh-approximate GELU.
    return 0.5 * x * (1.0 + jnp.tanh(jnp.sqrt(2.0 / jnp.pi) * (x + 0.044715 * x ** 3)))


# ------------------------------- kernels ------------------------------------

def qkv_kernel(x_ref, lnw, lnb, wqkv, bqkv, q_ref, k_ref, v_ref, *, n_head):
    x = x_ref[0]                                           # (TT, C)
    C = x.shape[-1]
    hd = C // n_head
    scale = 1.0 / math.sqrt(hd)
    h = _layernorm(x.astype(jnp.float32), lnw[...], lnb[...]).astype(wqkv.dtype)
    qkv = jnp.dot(h, wqkv[...], preferred_element_type=jnp.float32) + bqkv[...]
    # Split heads in-kernel with static lane slices; emits (H, TT, hd) blocks
    # directly so no XLA-level (B,T,C)->(B,H,T,hd) transpose/HBM round trip.
    for hh in range(n_head):
        q_ref[0, hh] = (qkv[:, hh * hd:(hh + 1) * hd] * scale).astype(q_ref.dtype)
        k_ref[0, hh] = qkv[:, C + hh * hd:C + (hh + 1) * hd].astype(k_ref.dtype)
        v_ref[0, hh] = qkv[:, 2 * C + hh * hd:2 * C + (hh + 1) * hd].astype(v_ref.dtype)


def attn_kernel(x_ref, q_ref, k_ref, v_ref, wproj_ref, bproj_ref, o_ref,
                m_sc, l_sc, acc_sc):
    qi = pl.program_id(1)
    ki = pl.program_id(2)

    @pl.when(ki == 0)
    def _init():
        m_sc[...] = jnp.full(m_sc.shape, _NEG_INF, jnp.float32)
        l_sc[...] = jnp.zeros(l_sc.shape, jnp.float32)
        acc_sc[...] = jnp.zeros(acc_sc.shape, jnp.float32)

    @pl.when(ki <= qi)                       # future KV tiles: no compute (and no DMA
    def _update():                           # either -- their index_map is clamped)
        q = q_ref[0]                         # (H, TQ, hd), already pre-scaled
        k = k_ref[0]                         # (H, TK, hd)
        v = v_ref[0]                         # (H, TK, hd)
        tq, tk = q.shape[1], k.shape[1]
        s = jnp.einsum("hqd,hkd->hqk", q, k,
                       preferred_element_type=jnp.float32)        # (H, TQ, TK)
        row = qi * tq + jax.lax.broadcasted_iota(jnp.int32, (tq, tk), 0)
        col = ki * tk + jax.lax.broadcasted_iota(jnp.int32, (tq, tk), 1)
        s = jnp.where((col <= row)[None], s, _NEG_INF)
        m_prev = m_sc[...]
        m_new = jnp.maximum(m_prev, jnp.max(s, axis=-1, keepdims=True))
        alpha = jnp.exp(m_prev - m_new)
        p = jnp.exp(s - m_new)                                    # (H, TQ, TK) f32
        l_sc[...] = alpha * l_sc[...] + jnp.sum(p, axis=-1, keepdims=True)
        acc_sc[...] = alpha * acc_sc[...] + jnp.einsum(
            "hqk,hkd->hqd", p.astype(v.dtype), v,
            preferred_element_type=jnp.float32)
        m_sc[...] = m_new

    @pl.when(ki == qi)                       # diagonal tile = last contributing tile
    def _finalize():
        n_head = acc_sc.shape[0]
        inv = pl.reciprocal(l_sc[...], approx=True)               # (H, TQ, 1)
        y = (acc_sc[...] * inv).astype(wproj_ref.dtype)           # (H, TQ, hd)
        # Out-projection: accumulate per-head matmuls straight into an f32
        # (TQ, C) tile on the MXU -- no (H, TQ, C) intermediate, no XLU head-sum.
        proj = jnp.dot(y[0], wproj_ref[0], preferred_element_type=jnp.float32)
        for h in range(1, n_head):
            proj = proj + jnp.dot(y[h], wproj_ref[h],
                                  preferred_element_type=jnp.float32)
        proj = proj + bproj_ref[...]                              # (TQ, C)
        o_ref[0] = (x_ref[0].astype(jnp.float32) + proj).astype(o_ref.dtype)


def mlp_kernel(x_ref, lnw, lnb, wfc, bfc, wfc2, bfc2, o_ref, h_sc, acc_sc):
    f = pl.program_id(2)

    @pl.when(f == 0)
    def _init():
        x = x_ref[0].astype(jnp.float32)                   # (TT, C)
        h_sc[...] = _layernorm(x, lnw[...], lnb[...]).astype(h_sc.dtype)
        acc_sc[...] = jnp.zeros(acc_sc.shape, jnp.float32)

    # One hidden-dim tile: fc -> GELU -> proj, accumulated in f32.
    a = jnp.dot(h_sc[...], wfc[...], preferred_element_type=jnp.float32) + bfc[...]
    g = _gelu_tanh(a).astype(wfc2.dtype)                   # GELU in f32, cast for MXU
    acc_sc[...] += jnp.dot(g, wfc2[...], preferred_element_type=jnp.float32)

    @pl.when(f == pl.num_programs(2) - 1)
    def _fin():
        y = acc_sc[...] + bfc2[...]
        o_ref[0] = (x_ref[0].astype(jnp.float32) + y).astype(o_ref.dtype)


def head_kernel(x_ref, lnw, lnb, wte_ref, o_ref):
    x = x_ref[0]                                           # (TT, C)
    h = _layernorm(x.astype(jnp.float32), lnw[...], lnb[...]).astype(wte_ref.dtype)
    # h @ wte_tile.T without materializing the transpose.
    o_ref[0] = jax.lax.dot_general(
        h, wte_ref[...],
        dimension_numbers=(((1,), (1,)), ((), ())),
        preferred_element_type=jnp.float32).astype(o_ref.dtype)   # (TT, TV)


# ------------------------------- wrappers ------------------------------------

def qkv_call(x, lnw, lnb, wqkv, bqkv, *, n_head, tile_t):
    B, T, C = x.shape
    hd = C // n_head
    xspec = pl.BlockSpec((1, tile_t, C), lambda b, t: (b, t, 0))
    hspec = pl.BlockSpec((1, n_head, tile_t, hd), lambda b, t: (b, 0, t, 0))
    return pl.pallas_call(
        functools.partial(qkv_kernel, n_head=n_head),
        out_shape=(jax.ShapeDtypeStruct((B, n_head, T, hd), x.dtype),) * 3,
        grid=(B, T // tile_t),
        in_specs=[xspec, _rep_spec(lnw.shape), _rep_spec(lnb.shape),
                  _rep_spec(wqkv.shape), _rep_spec(bqkv.shape)],
        out_specs=(hspec, hspec, hspec),
        compiler_params=_compiler_params(("parallel", "parallel")),
    )(x, lnw, lnb, wqkv, bqkv)


def attn_call(x, q, k, v, wproj3, bproj, *, tile_t):
    B, T, C = x.shape
    _, H, _, hd = q.shape
    nt = T // tile_t
    xq_spec = pl.BlockSpec((1, tile_t, C), lambda b, qi, ki: (b, qi, 0))
    q_spec = pl.BlockSpec((1, H, tile_t, hd), lambda b, qi, ki: (b, 0, qi, 0))
    # Clamp future (fully-masked) KV tiles onto the diagonal tile: the pipeline
    # dedups the repeated block index, so masked tiles cost zero HBM traffic.
    kv_spec = pl.BlockSpec((1, H, tile_t, hd),
                           lambda b, qi, ki: (b, 0, jnp.minimum(ki, qi), 0))
    return pl.pallas_call(
        attn_kernel,
        out_shape=jax.ShapeDtypeStruct((B, T, C), x.dtype),
        grid=(B, nt, nt),
        in_specs=[xq_spec, q_spec, kv_spec, kv_spec,
                  _rep_spec(wproj3.shape), _rep_spec(bproj.shape)],
        out_specs=xq_spec,
        scratch_shapes=[pltpu.VMEM((H, tile_t, 1), jnp.float32),   # running max
                        pltpu.VMEM((H, tile_t, 1), jnp.float32),   # running sum
                        pltpu.VMEM((H, tile_t, hd), jnp.float32)], # output acc
        compiler_params=_compiler_params(("parallel", "parallel", "arbitrary")),
    )(x, q, k, v, wproj3, bproj)


def mlp_call(x, lnw, lnb, wfc, bfc, wfc2, bfc2, *, tile_t, tile_f):
    B, T, C = x.shape
    F = wfc.shape[1]                                       # 4*C
    xspec = pl.BlockSpec((1, tile_t, C), lambda b, t, f: (b, t, 0))
    return pl.pallas_call(
        mlp_kernel,
        out_shape=jax.ShapeDtypeStruct((B, T, C), x.dtype),
        grid=(B, T // tile_t, F // tile_f),
        in_specs=[xspec,
                  _rep_spec(lnw.shape), _rep_spec(lnb.shape),
                  pl.BlockSpec((C, tile_f), lambda b, t, f: (0, f)),
                  pl.BlockSpec((1, tile_f), lambda b, t, f: (0, f)),
                  pl.BlockSpec((tile_f, C), lambda b, t, f: (f, 0)),
                  _rep_spec(bfc2.shape)],
        out_specs=xspec,
        scratch_shapes=[pltpu.VMEM((tile_t, C), wfc.dtype),        # LN(x), cached
                        pltpu.VMEM((tile_t, C), jnp.float32)],     # f32 accumulator
        compiler_params=_compiler_params(("parallel", "parallel", "arbitrary")),
    )(x, lnw, lnb, wfc, bfc, wfc2, bfc2)


def head_call(x, lnw, lnb, wte, *, tile_t, tile_v):
    B, T, C = x.shape
    V = wte.shape[0]
    return pl.pallas_call(
        head_kernel,
        out_shape=jax.ShapeDtypeStruct((B, T, V), jnp.float32),
        # Vocab axis outermost: each wte tile is fetched from HBM exactly once
        # and reused across every (batch, token-tile) inner step.
        grid=(V // tile_v, B, T // tile_t),
        in_specs=[pl.BlockSpec((1, tile_t, C), lambda vv, b, t: (b, t, 0)),
                  _rep_spec(lnw.shape), _rep_spec(lnb.shape),
                  pl.BlockSpec((tile_v, C), lambda vv, b, t: (vv, 0))],
        out_specs=pl.BlockSpec((1, tile_t, tile_v), lambda vv, b, t: (b, t, vv)),
        compiler_params=_compiler_params(("parallel", "parallel", "parallel")),
    )(x, lnw, lnb, wte)


# -------------------------------- full model --------------------------------

@functools.partial(jax.jit, static_argnames=("n_head",))
def gpt2_forward(idx, params, n_head):
    wte, wpe = params["wte"], params["wpe"]
    B, T = idx.shape
    V, C = wte.shape
    hd = C // n_head
    assert T <= wpe.shape[0], "sequence longer than block size"

    # Pad T to a multiple of 16 (bf16 sublane tiling) and V to a multiple of
    # 128 (lane tiling); causal masking keeps real rows bit-identical and the
    # padded logits are sliced off at the end.
    T_pad = _round_up(T, 16)
    V_pad = _round_up(V, 128)
    tile_t = _choose_tile(T_pad, 512, 16)
    tile_v = _choose_tile(V_pad, 2048, 128)
    tile_f = _choose_tile(4 * C, 2048, 128)

    x = wte[idx] + wpe[:T][None]                 # embedding gathers (JAX glue)
    if T_pad != T:
        x = jnp.pad(x, ((0, 0), (0, T_pad - T), (0, 0)))

    for (l1w, l1b, wqkv, bqkv, wp, bp,
         l2w, l2b, wfc, bfc, wf2, bf2) in params["blocks"]:
        q, k, v = qkv_call(x, l1w, l1b, wqkv, bqkv, n_head=n_head, tile_t=tile_t)
        x = attn_call(x, q, k, v, wp.reshape(n_head, hd, C), bp, tile_t=tile_t)
        x = mlp_call(x, l2w, l2b, wfc, bfc, wf2, bf2, tile_t=tile_t, tile_f=tile_f)

    wte_head = wte if V_pad == V else jnp.pad(wte, ((0, V_pad - V), (0, 0)))
    logits = head_call(x, params["lnf_w"], params["lnf_b"], wte_head,
                       tile_t=tile_t, tile_v=tile_v)
    # TODO(synk): optional cross-entropy `loss` branch (targets) not implemented.
    return logits[:, :T, :V]


# ------------------------ deterministic parameter init ----------------------

def init_params(key, vocab_size, block_size, n_layer, n_embd):
    std = 0.02
    proj_std = std * (2 * n_layer) ** -0.5       # WEIGHT_SCALE_INIT residual projs
    keys = iter(jax.random.split(key, 2 + 6 * n_layer))

    def nrm(shape, s):
        return (s * jax.random.normal(next(keys), shape)).astype(jnp.float32)

    params = {
        "wte": nrm((vocab_size, n_embd), std),   # tied with lm_head
        "wpe": nrm((block_size, n_embd), std),
        "lnf_w": jnp.ones((1, n_embd), jnp.float32),
        "lnf_b": jnp.zeros((1, n_embd), jnp.float32),
        "blocks": [],
    }
    for _ in range(n_layer):
        lp = (
            jnp.ones((1, n_embd), jnp.float32),                 # ln1 w
            jnp.zeros((1, n_embd), jnp.float32),                # ln1 b
            nrm((n_embd, 3 * n_embd), std),                     # c_attn W
            jnp.zeros((1, 3 * n_embd), jnp.float32),            # c_attn b
            nrm((n_embd, n_embd), proj_std),                    # attn c_proj W
            jnp.zeros((1, n_embd), jnp.float32),                # attn c_proj b
            jnp.ones((1, n_embd), jnp.float32),                 # ln2 w
            jnp.zeros((1, n_embd), jnp.float32),                # ln2 b
            nrm((n_embd, 4 * n_embd), std),                     # mlp c_fc W
            jnp.zeros((1, 4 * n_embd), jnp.float32),            # mlp c_fc b
            nrm((4 * n_embd, n_embd), proj_std),                # mlp c_proj W
            jnp.zeros((1, n_embd), jnp.float32),                # mlp c_proj b
        )
        params["blocks"].append(lp)
    return params


def cast_params(params, dtype):
    """Cast matmul weights + embeddings to `dtype`; LN params & biases stay f32."""
    if dtype == jnp.float32:
        return params

    def cast_block(lp):
        (l1w, l1b, wqkv, bqkv, wp, bp, l2w, l2b, wfc, bfc, wf2, bf2) = lp
        return (l1w, l1b, wqkv.astype(dtype), bqkv, wp.astype(dtype), bp,
                l2w, l2b, wfc.astype(dtype), bfc, wf2.astype(dtype), bf2)

    return {"wte": params["wte"].astype(dtype),
            "wpe": params["wpe"].astype(dtype),
            "lnf_w": params["lnf_w"], "lnf_b": params["lnf_b"],
            "blocks": [cast_block(lp) for lp in params["blocks"]]}


# ------------------------------ pure-JAX reference ---------------------------

def reference_forward(idx, params, n_head):
    wte, wpe = params["wte"], params["wpe"]
    B, T = idx.shape
    C = wte.shape[1]
    hd = C // n_head
    x = wte[idx] + wpe[:T][None]
    causal = jnp.tril(jnp.ones((T, T), bool))
    for (l1w, l1b, wqkv, bqkv, wp, bp, l2w, l2b, wfc, bfc, wf2, bf2) in params["blocks"]:
        h = _layernorm(x, l1w, l1b)
        qkv = h @ wqkv + bqkv
        q, k, v = jnp.split(qkv, 3, axis=-1)
        q = q.reshape(B, T, n_head, hd).transpose(0, 2, 1, 3)
        k = k.reshape(B, T, n_head, hd).transpose(0, 2, 1, 3)
        v = v.reshape(B, T, n_head, hd).transpose(0, 2, 1, 3)
        att = jnp.einsum("bhqd,bhkd->bhqk", q, k) / math.sqrt(hd)
        att = jnp.where(causal, att, -1e30)
        att = jax.nn.softmax(att, axis=-1)
        y = jnp.einsum("bhqk,bhkd->bhqd", att, v).transpose(0, 2, 1, 3).reshape(B, T, C)
        x = x + y @ wp + bp
        h = _layernorm(x, l2w, l2b)
        x = x + _gelu_tanh(h @ wfc + bfc) @ wf2 + bf2
    x = _layernorm(x, params["lnf_w"], params["lnf_b"])
    return x @ wte.T


# ------------------------------------ main -----------------------------------

if __name__ == "__main__":
    vocab_size, block_size, n_layer, n_head, n_embd = 128, 16, 2, 4, 32
    B, T = 2, 8

    key = jax.random.PRNGKey(0)
    pkey, ikey = jax.random.split(key)
    params = init_params(pkey, vocab_size, block_size, n_layer, n_embd)
    idx = jax.random.randint(ikey, (B, T), 0, vocab_size, dtype=jnp.int32)

    ref = reference_forward(idx, params, n_head)

    # f32 run (tight check; also exercises the T-padding path since T=8 -> 16)
    logits32 = jax.block_until_ready(gpt2_forward(idx, params, n_head=n_head))
    assert logits32.shape == (B, T, vocab_size)
    assert jnp.allclose(logits32, ref, atol=5e-3, rtol=5e-3), "f32 mismatch vs reference"

    # bf16 weights/activations (f32 accumulation) run (loose check)
    bf16_params = cast_params(params, jnp.bfloat16)
    logits_bf16 = jax.block_until_ready(gpt2_forward(idx, bf16_params, n_head=n_head))
    assert logits_bf16.shape == (B, T, vocab_size)
    assert bool(jnp.all(jnp.isfinite(logits_bf16)))
    assert jnp.allclose(logits_bf16, ref, atol=5e-2, rtol=5e-2), "bf16 mismatch vs reference"

    print("KERNEL_OK")
</pallas_src>

<mosaic_0001>
module attributes {stable_mosaic.version = 11 : i64} {
  func.func @head_kernel(%arg0: i32, %arg1: i32, %arg2: i32, %arg3: memref<1x16x32xf32, #tpu.memory_space<vmem>>, %arg4: memref<1x32xf32, #tpu.memory_space<vmem>>, %arg5: memref<1x32xf32, #tpu.memory_space<vmem>>, %arg6: memref<128x32xf32, #tpu.memory_space<vmem>>, %arg7: memref<1x16x128xf32, #tpu.memory_space<vmem>>) attributes {dimension_semantics = [#tpu.dimension_semantics<parallel>, #tpu.dimension_semantics<parallel>, #tpu.dimension_semantics<parallel>], iteration_bounds = array<i64: 1, 2, 1>, scalar_prefetch = 0 : i64, scratch_operands = 0 : i64, tpu.core_type = #tpu.core_type<tc>, window_params = [{transform_indices = @transform_0, window_bounds = array<i64: 1, 16, 32>}, {pipeline_mode = #tpu.pipeline_mode<synchronous>, transform_indices = @transform_1, window_bounds = array<i64: 1, 32>}, {pipeline_mode = #tpu.pipeline_mode<synchronous>, transform_indices = @transform_2, window_bounds = array<i64: 1, 32>}, {transform_indices = @transform_3, window_bounds = array<i64: 128, 32>}, {transform_indices = @transform_4, window_bounds = array<i64: 1, 16, 128>}]} {
    %c0 = arith.constant 0 : index
    %c0_0 = arith.constant 0 : index
    %c0_1 = arith.constant 0 : index
    %0 = vector.load %arg3[%c0, %c0_0, %c0_1] : memref<1x16x32xf32, #tpu.memory_space<vmem>>, vector<1x16x32xf32>
    %1 = vector.shape_cast %0 : vector<1x16x32xf32> to vector<16x32xf32>
    %c0_2 = arith.constant 0 : index
    %c0_3 = arith.constant 0 : index
    %2 = vector.load %arg4[%c0_2, %c0_3] : memref<1x32xf32, #tpu.memory_space<vmem>>, vector<1x32xf32>
    %c0_4 = arith.constant 0 : index
    %c0_5 = arith.constant 0 : index
    %3 = vector.load %arg5[%c0_4, %c0_5] : memref<1x32xf32, #tpu.memory_space<vmem>>, vector<1x32xf32>
    %cst = arith.constant dense<0.000000e+00> : vector<16xf32>
    %4 = vector.multi_reduction <add>, %1, %cst [1] : vector<16x32xf32> to vector<16xf32>
    %5 = vector.shape_cast %4 : vector<16xf32> to vector<16x1xf32>
    %cst_6 = arith.constant 3.200000e+01 : f32
    %6 = vector.broadcast %cst_6 : f32 to vector<16x1xf32>
    %7 = arith.divf %5, %6 : vector<16x1xf32>
    %8 = vector.broadcast %7 : vector<16x1xf32> to vector<16x32xf32>
    %9 = arith.subf %1, %8 : vector<16x32xf32>
    %10 = arith.mulf %9, %9 : vector<16x32xf32>
    %cst_7 = arith.constant dense<0.000000e+00> : vector<16xf32>
    %11 = vector.multi_reduction <add>, %10, %cst_7 [1] : vector<16x32xf32> to vector<16xf32>
    %12 = vector.shape_cast %11 : vector<16xf32> to vector<16x1xf32>
    %cst_8 = arith.constant 3.200000e+01 : f32
    %13 = vector.broadcast %cst_8 : f32 to vector<16x1xf32>
    %14 = arith.divf %12, %13 : vector<16x1xf32>
    %15 = vector.broadcast %7 : vector<16x1xf32> to vector<16x32xf32>
    %16 = arith.subf %1, %15 : vector<16x32xf32>
    %cst_9 = arith.constant 9.99999974E-6 : f32
    %17 = vector.broadcast %cst_9 : f32 to vector<16x1xf32>
    %18 = arith.addf %14, %17 : vector<16x1xf32>
    %19 = math.rsqrt %18 : vector<16x1xf32>
    %20 = vector.broadcast %19 : vector<16x1xf32> to vector<16x32xf32>
    %21 = arith.mulf %16, %20 : vector<16x32xf32>
    %22 = vector.broadcast %2 : vector<1x32xf32> to vector<16x32xf32>
    %23 = arith.mulf %21, %22 : vector<16x32xf32>
    %24 = vector.broadcast %3 : vector<1x32xf32> to vector<16x32xf32>
    %25 = arith.addf %23, %24 : vector<16x32xf32>
    %c0_10 = arith.constant 0 : index
    %c0_11 = arith.constant 0 : index
    %26 = vector.load %arg6[%c0_10, %c0_11] : memref<128x32xf32, #tpu.memory_space<vmem>>, vector<128x32xf32>
    %cst_12 = arith.constant dense<0.000000e+00> : vector<16x128xf32>
    %27 = tpu.matmul %25, %26, %cst_12 {dimension_numbers = #tpu.dot_dimension_numbers<[1], [1], [0], [0], [0, 0, 1, 0], [], []>} : vector<16x32xf32>, vector<128x32xf32>, vector<16x128xf32> -> vector<16x128xf32>
    %c0_13 = arith.constant 0 : index
    %c0_14 = arith.constant 0 : index
    %c0_15 = arith.constant 0 : index
    %28 = vector.load %arg7[%c0_13, %c0_14, %c0_15] : memref<1x16x128xf32, #tpu.memory_space<vmem>>, vector<1x16x128xf32>
    %29 = vector.shape_cast %28 : vector<1x16x128xf32> to vector<16x128xf32>
    %30 = vector.shape_cast %27 : vector<16x128xf32> to vector<1x16x128xf32>
    tpu.vector_store %arg7[%c0_13, %c0_14, %c0_15], %30 {strides = array<i32>} : memref<1x16x128xf32, #tpu.memory_space<vmem>>, vector<1x16x128xf32>,
    return
  }
  func.func @transform_0(%arg0: i32, %arg1: i32, %arg2: i32) -> (i32, i32, i32) {
    %c0_i32 = arith.constant 0 : i32
    %c0_i32_0 = arith.constant 0 : i32
    return %arg1, %arg2, %c0_i32 : i32, i32, i32
  }
  func.func @transform_1(%arg0: i32, %arg1: i32, %arg2: i32) -> (i32, i32) {
    %c0_i32 = arith.constant 0 : i32
    %c0_i32_0 = arith.constant 0 : i32
    %c0_i32_1 = arith.constant 0 : i32
    return %c0_i32, %c0_i32_0 : i32, i32
  }
  func.func @transform_2(%arg0: i32, %arg1: i32, %arg2: i32) -> (i32, i32) {
    %c0_i32 = arith.constant 0 : i32
    %c0_i32_0 = arith.constant 0 : i32
    %c0_i32_1 = arith.constant 0 : i32
    return %c0_i32, %c0_i32_0 : i32, i32
  }
  func.func @transform_3(%arg0: i32, %arg1: i32, %arg2: i32) -> (i32, i32) {
    %c0_i32 = arith.constant 0 : i32
    %c0_i32_0 = arith.constant 0 : i32
    return %arg0, %c0_i32 : i32, i32
  }
  func.func @transform_4(%arg0: i32, %arg1: i32, %arg2: i32) -> (i32, i32, i32) {
    %c0_i32 = arith.constant 0 : i32
    return %arg1, %arg2, %arg0 : i32, i32, i32
  }
}

module attributes {stable_mosaic.version = 11 : i64} {
  func.func @attn_kernel(%arg0: i32, %arg1: i32, %arg2: i32, %arg3: memref<1x16x32xf32, #tpu.memory_space<vmem>>, %arg4: memref<1x4x16x8xf32, #tpu.memory_space<vmem>>, %arg5: memref<1x4x16x8xf32, #tpu.memory_space<vmem>>, %arg6: memref<1x4x16x8xf32, #tpu.memory_space<vmem>>, %arg7: memref<4x8x32xf32, #tpu.memory_space<vmem>>, %arg8: memref<1x32xf32, #tpu.memory_space<vmem>>, %arg9: memref<1x16x32xf32, #tpu.memory_space<vmem>>, %arg10: memref<4x16x1xf32, #tpu.memory_space<vmem>>, %arg11: memref<4x16x1xf32, #tpu.memory_space<vmem>>, %arg12: memref<4x16x8xf32, #tpu.memory_space<vmem>>) attributes {dimension_semantics = [#tpu.dimension_semantics<parallel>, #tpu.dimension_semantics<parallel>, #tpu.dimension_semantics<arbitrary>], iteration_bounds = array<i64: 2, 1, 1>, scalar_prefetch = 0 : i64, scratch_operands = 3 : i64, tpu.core_type = #tpu.core_type<tc>, window_params = [{transform_indices = @transform_0, window_bounds = array<i64: 1, 16, 32>}, {transform_indices = @transform_1, window_bounds = array<i64: 1, 4, 16, 8>}, {transform_indices = @transform_2, window_bounds = array<i64: 1, 4, 16, 8>}, {transform_indices = @transform_3, window_bounds = array<i64: 1, 4, 16, 8>}, {pipeline_mode = #tpu.pipeline_mode<synchronous>, transform_indices = @transform_4, window_bounds = array<i64: 4, 8, 32>}, {pipeline_mode = #tpu.pipeline_mode<synchronous>, transform_indices = @transform_5, window_bounds = array<i64: 1, 32>}, {transform_indices = @transform_6, window_bounds = array<i64: 1, 16, 32>}]} {
    %c0_i32 = arith.constant 0 : i32
    %0 = arith.cmpi eq, %arg2, %c0_i32 : i32
    %1 = arith.extui %0 : i1 to i32
    %c0_i32_0 = arith.constant 0 : i32
    %2 = arith.cmpi ne, %1, %c0_i32_0 : i32
    scf.if %2 {
      %cst = arith.constant -1.000000e+30 : f32
      %9 = vector.broadcast %cst : f32 to vector<4x16x1xf32>
      %c0 = arith.constant 0 : index
      %c0_3 = arith.constant 0 : index
      %c0_4 = arith.constant 0 : index
      %10 = vector.load %arg10[%c0, %c0_3, %c0_4] : memref<4x16x1xf32, #tpu.memory_space<vmem>>, vector<4x16x1xf32>
      tpu.vector_store %arg10[%c0, %c0_3, %c0_4], %9 {strides = array<i32>} : memref<4x16x1xf32, #tpu.memory_space<vmem>>, vector<4x16x1xf32>,
      %cst_5 = arith.constant 0.000000e+00 : f32
      %11 = vector.broadcast %cst_5 : f32 to vector<4x16x1xf32>
      %c0_6 = arith.constant 0 : index
      %c0_7 = arith.constant 0 : index
      %c0_8 = arith.constant 0 : index
      %12 = vector.load %arg11[%c0_6, %c0_7, %c0_8] : memref<4x16x1xf32, #tpu.memory_space<vmem>>, vector<4x16x1xf32>
      tpu.vector_store %arg11[%c0_6, %c0_7, %c0_8], %11 {strides = array<i32>} : memref<4x16x1xf32, #tpu.memory_space<vmem>>, vector<4x16x1xf32>,
      %cst_9 = arith.constant 0.000000e+00 : f32
      %13 = vector.broadcast %cst_9 : f32 to vector<4x16x8xf32>
      %c0_10 = arith.constant 0 : index
      %c0_11 = arith.constant 0 : index
      %c0_12 = arith.constant 0 : index
      %14 = vector.load %arg12[%c0_10, %c0_11, %c0_12] : memref<4x16x8xf32, #tpu.memory_space<vmem>>, vector<4x16x8xf32>
      tpu.vector_store %arg12[%c0_10, %c0_11, %c0_12], %13 {strides = array<i32>} : memref<4x16x8xf32, #tpu.memory_space<vmem>>, vector<4x16x8xf32>,
    } else {
    }
    %3 = arith.cmpi sle, %arg2, %arg1 : i32
    %4 = arith.extui %3 : i1 to i32
    %c0_i32_1 = arith.constant 0 : i32
    %5 = arith.cmpi ne, %4, %c0_i32_1 : i32
    scf.if %5 {
      %c0 = arith.constant 0 : index
      %c0_3 = arith.constant 0 : index
      %c0_4 = arith.constant 0 : index
      %c0_5 = arith.constant 0 : index
      %9 = vector.load %arg4[%c0, %c0_3, %c0_4, %c0_5] : memref<1x4x16x8xf32, #tpu.memory_space<vmem>>, vector<1x4x16x8xf32>
      %10 = vector.shape_cast %9 : vector<1x4x16x8xf32> to vector<4x16x8xf32>
      %c0_6 = arith.constant 0 : index
      %c0_7 = arith.constant 0 : index
      %c0_8 = arith.constant 0 : index
      %c0_9 = arith.constant 0 : index
      %11 = vector.load %arg5[%c0_6, %c0_7, %c0_8, %c0_9] : memref<1x4x16x8xf32, #tpu.memory_space<vmem>>, vector<1x4x16x8xf32>
      %12 = vector.shape_cast %11 : vector<1x4x16x8xf32> to vector<4x16x8xf32>
      %c0_10 = arith.constant 0 : index
      %c0_11 = arith.constant 0 : index
      %c0_12 = arith.constant 0 : index
      %c0_13 = arith.constant 0 : index
      %13 = vector.load %arg6[%c0_10, %c0_11, %c0_12, %c0_13] : memref<1x4x16x8xf32, #tpu.memory_space<vmem>>, vector<1x4x16x8xf32>
      %14 = vector.shape_cast %13 : vector<1x4x16x8xf32> to vector<4x16x8xf32>
      "tpu.trace_start"() <{level = 10 : i32, message = "hqd,hkd->hqk"}> : () -> ()
      %cst = arith.constant dense<0.000000e+00> : vector<4x16x16xf32>
      %15 = tpu.matmul %10, %12, %cst {dimension_numbers = #tpu.dot_dimension_numbers<[2], [2], [1], [1], [0, 0, 0, 1, 1, 1], [0], [0]>} : vector<4x16x8xf32>, vector<4x16x8xf32>, vector<4x16x16xf32> -> vector<4x16x16xf32>
      "tpu.trace_stop"() : () -> ()
      %c16_i32 = arith.constant 16 : i32
      %16 = arith.muli %arg1, %c16_i32 : i32
      %17 = tpu.iota {dimensions = array<i32: 0>} : vector<16x16xi32>
      %18 = vector.broadcast %16 : i32 to vector<16x16xi32>
      %19 = arith.addi %18, %17 : vector<16x16xi32>
      %c16_i32_14 = arith.constant 16 : i32
      %20 = arith.muli %arg2, %c16_i32_14 : i32
      %21 = tpu.iota {dimensions = array<i32: 1>} : vector<16x16xi32>
      %22 = vector.broadcast %20 : i32 to vector<16x16xi32>
      %23 = arith.addi %22, %21 : vector<16x16xi32>
      %24 = arith.cmpi sle, %23, %19 : vector<16x16xi32>
      %25 = vector.shape_cast %24 : vector<16x16xi1> to vector<1x16x16xi1>
      %cst_15 = arith.constant -1.000000e+30 : f32
      %26 = vector.shape_cast %25 : vector<1x16x16xi1> to vector<1x16x16xi1>
      %27 = vector.broadcast %26 : vector<1x16x16xi1> to vector<4x16x16xi1>
      %28 = vector.broadcast %cst_15 : f32 to vector<4x16x16xf32>
      %29 = arith.select %27, %15, %28 : vector<4x16x16xi1>, vector<4x16x16xf32>
      %c0_16 = arith.constant 0 : index
      %c0_17 = arith.constant 0 : index
      %c0_18 = arith.constant 0 : index
      %30 = vector.load %arg10[%c0_16, %c0_17, %c0_18] : memref<4x16x1xf32, #tpu.memory_space<vmem>>, vector<4x16x1xf32>
      %cst_19 = arith.constant dense<0xFF800000> : vector<4x16xf32>
      %31 = vector.multi_reduction <maximumf>, %29, %cst_19 [2] : vector<4x16x16xf32> to vector<4x16xf32>
      %32 = vector.shape_cast %31 : vector<4x16xf32> to vector<4x16x1xf32>
      %33 = arith.maximumf %30, %32 : vector<4x16x1xf32>
      %34 = arith.subf %30, %33 : vector<4x16x1xf32>
      %35 = math.exp %34 : vector<4x16x1xf32>
      %36 = vector.broadcast %33 : vector<4x16x1xf32> to vector<4x16x16xf32>
      %37 = arith.subf %29, %36 : vector<4x16x16xf32>
      %38 = math.exp %37 : vector<4x16x16xf32>
      %c0_20 = arith.constant 0 : index
      %c0_21 = arith.constant 0 : index
      %c0_22 = arith.constant 0 : index
      %39 = vector.load %arg11[%c0_20, %c0_21, %c0_22] : memref<4x16x1xf32, #tpu.memory_space<vmem>>, vector<4x16x1xf32>
      %40 = arith.mulf %35, %39 : vector<4x16x1xf32>
      %cst_23 = arith.constant dense<0.000000e+00> : vector<4x16xf32>
      %41 = vector.multi_reduction <add>, %38, %cst_23 [2] : vector<4x16x16xf32> to vector<4x16xf32>
      %42 = vector.shape_cast %41 : vector<4x16xf32> to vector<4x16x1xf32>
      %43 = arith.addf %40, %42 : vector<4x16x1xf32>
      %c0_24 = arith.constant 0 : index
      %c0_25 = arith.constant 0 : index
      %c0_26 = arith.constant 0 : index
      %44 = vector.load %arg11[%c0_24, %c0_25, %c0_26] : memref<4x16x1xf32, #tpu.memory_space<vmem>>, vector<4x16x1xf32>
      tpu.vector_store %arg11[%c0_24, %c0_25, %c0_26], %43 {strides = array<i32>} : memref<4x16x1xf32, #tpu.memory_space<vmem>>, vector<4x16x1xf32>,
      %c0_27 = arith.constant 0 : index
      %c0_28 = arith.constant 0 : index
      %c0_29 = arith.constant 0 : index
      %45 = vector.load %arg12[%c0_27, %c0_28, %c0_29] : memref<4x16x8xf32, #tpu.memory_space<vmem>>, vector<4x16x8xf32>
      %46 = vector.broadcast %35 : vector<4x16x1xf32> to vector<4x16x8xf32>
      %47 = arith.mulf %46, %45 : vector<4x16x8xf32>
      "tpu.trace_start"() <{level = 10 : i32, message = "hqk,hkd->hqd"}> : () -> ()
      %cst_30 = arith.constant dense<0.000000e+00> : vector<4x16x8xf32>
      %48 = tpu.matmul %38, %14, %cst_30 {dimension_numbers = #tpu.dot_dimension_numbers<[2], [1], [1], [2], [0, 0, 0, 1, 1, 2], [0], [0]>} : vector<4x16x16xf32>, vector<4x16x8xf32>, vector<4x16x8xf32> -> vector<4x16x8xf32>
      "tpu.trace_stop"() : () -> ()
      %49 = arith.addf %47, %48 : vector<4x16x8xf32>
      %c0_31 = arith.constant 0 : index
      %c0_32 = arith.constant 0 : index
      %c0_33 = arith.constant 0 : index
      %50 = vector.load %arg12[%c0_31, %c0_32, %c0_33] : memref<4x16x8xf32, #tpu.memory_space<vmem>>, vector<4x16x8xf32>
      tpu.vector_store %arg12[%c0_31, %c0_32, %c0_33], %49 {strides = array<i32>} : memref<4x16x8xf32, #tpu.memory_space<vmem>>, vector<4x16x8xf32>,
      %c0_34 = arith.constant 0 : index
      %c0_35 = arith.constant 0 : index
      %c0_36 = arith.constant 0 : index
      %51 = vector.load %arg10[%c0_34, %c0_35, %c0_36] : memref<4x16x1xf32, #tpu.memory_space<vmem>>, vector<4x16x1xf32>
      tpu.vector_store %arg10[%c0_34, %c0_35, %c0_36], %33 {strides = array<i32>} : memref<4x16x1xf32, #tpu.memory_space<vmem>>, vector<4x16x1xf32>,
    } else {
    }
    %6 = arith.cmpi eq, %arg2, %arg1 : i32
    %7 = arith.extui %6 : i1 to i32
    %c0_i32_2 = arith.constant 0 : i32
    %8 = arith.cmpi ne, %7, %c0_i32_2 : i32
    scf.if %8 {
      %c0 = arith.constant 0 : index
      %c0_3 = arith.constant 0 : index
      %c0_4 = arith.constant 0 : index
      %9 = vector.load %arg11[%c0, %c0_3, %c0_4] : memref<4x16x1xf32, #tpu.memory_space<vmem>>, vector<4x16x1xf32>
      %10 = tpu.reciprocal %9 {approx = true} : vector<4x16x1xf32> -> vector<4x16x1xf32>
      %c0_5 = arith.constant 0 : index
      %c0_6 = arith.constant 0 : index
      %c0_7 = arith.constant 0 : index
      %11 = vector.load %arg12[%c0_5, %c0_6, %c0_7] : memref<4x16x8xf32, #tpu.memory_space<vmem>>, vector<4x16x8xf32>
      %12 = vector.broadcast %10 : vector<4x16x1xf32> to vector<4x16x8xf32>
      %13 = arith.mulf %11, %12 : vector<4x16x8xf32>
      %14 = vector.extract_strided_slice %13 {offsets = [0, 0, 0], sizes = [1, 16, 8], strides = [1, 1, 1]} : vector<4x16x8xf32> to vector<1x16x8xf32>
      %15 = vector.shape_cast %14 : vector<1x16x8xf32> to vector<16x8xf32>
      %c0_8 = arith.constant 0 : index
      %c0_9 = arith.constant 0 : index
      %c0_10 = arith.constant 0 : index
      %16 = vector.load %arg7[%c0_8, %c0_9, %c0_10] : memref<4x8x32xf32, #tpu.memory_space<vmem>>, vector<1x8x32xf32>
      %17 = vector.shape_cast %16 : vector<1x8x32xf32> to vector<8x32xf32>
      %cst = arith.constant dense<0.000000e+00> : vector<16x32xf32>
      %18 = tpu.matmul %15, %17, %cst {dimension_numbers = #tpu.dot_dimension_numbers<[1], [0], [0], [1], [0, 0, 1, 1], [], []>} : vector<16x8xf32>, vector<8x32xf32>, vector<16x32xf32> -> vector<16x32xf32>
      %19 = vector.extract_strided_slice %13 {offsets = [1, 0, 0], sizes = [1, 16, 8], strides = [1, 1, 1]} : vector<4x16x8xf32> to vector<1x16x8xf32>
      %20 = vector.shape_cast %19 : vector<1x16x8xf32> to vector<16x8xf32>
      %c1 = arith.constant 1 : index
      %c0_11 = arith.constant 0 : index
      %c0_12 = arith.constant 0 : index
      %21 = vector.load %arg7[%c1, %c0_11, %c0_12] : memref<4x8x32xf32, #tpu.memory_space<vmem>>, vector<1x8x32xf32>
      %22 = vector.shape_cast %21 : vector<1x8x32xf32> to vector<8x32xf32>
      %cst_13 = arith.constant dense<0.000000e+00> : vector<16x32xf32>
      %23 = tpu.matmul %20, %22, %cst_13 {dimension_numbers = #tpu.dot_dimension_numbers<[1], [0], [0], [1], [0, 0, 1, 1], [], []>} : vector<16x8xf32>, vector<8x32xf32>, vector<16x32xf32> -> vector<16x32xf32>
      %24 = arith.addf %18, %23 : vector<16x32xf32>
      %25 = vector.extract_strided_slice %13 {offsets = [2, 0, 0], sizes = [1, 16, 8], strides = [1, 1, 1]} : vector<4x16x8xf32> to vector<1x16x8xf32>
      %26 = vector.shape_cast %25 : vector<1x16x8xf32> to vector<16x8xf32>
      %c2 = arith.constant 2 : index
      %c0_14 = arith.constant 0 : index
      %c0_15 = arith.constant 0 : index
      %27 = vector.load %arg7[%c2, %c0_14, %c0_15] : memref<4x8x32xf32, #tpu.memory_space<vmem>>, vector<1x8x32xf32>
      %28 = vector.shape_cast %27 : vector<1x8x32xf32> to vector<8x32xf32>
      %cst_16 = arith.constant dense<0.000000e+00> : vector<16x32xf32>
      %29 = tpu.matmul %26, %28, %cst_16 {dimension_numbers = #tpu.dot_dimension_numbers<[1], [0], [0], [1], [0, 0, 1, 1], [], []>} : vector<16x8xf32>, vector<8x32xf32>, vector<16x32xf32> -> vector<16x32xf32>
      %30 = arith.addf %24, %29 : vector<16x32xf32>
      %31 = vector.extract_strided_slice %13 {offsets = [3, 0, 0], sizes = [1, 16, 8], strides = [1, 1, 1]} : vector<4x16x8xf32> to vector<1x16x8xf32>
      %32 = vector.shape_cast %31 : vector<1x16x8xf32> to vector<16x8xf32>
      %c3 = arith.constant 3 : index
      %c0_17 = arith.constant 0 : index
      %c0_18 = arith.constant 0 : index
      %33 = vector.load %arg7[%c3, %c0_17, %c0_18] : memref<4x8x32xf32, #tpu.memory_space<vmem>>, vector<1x8x32xf32>
      %34 = vector.shape_cast %33 : vector<1x8x32xf32> to vector<8x32xf32>
      %cst_19 = arith.constant dense<0.000000e+00> : vector<16x32xf32>
      %35 = tpu.matmul %32, %34, %cst_19 {dimension_numbers = #tpu.dot_dimension_numbers<[1], [0], [0], [1], [0, 0, 1, 1], [], []>} : vector<16x8xf32>, vector<8x32xf32>, vector<16x32xf32> -> vector<16x32xf32>
      %36 = arith.addf %30, %35 : vector<16x32xf32>
      %c0_20 = arith.constant 0 : index
      %c0_21 = arith.constant 0 : index
      %37 = vector.load %arg8[%c0_20, %c0_21] : memref<1x32xf32, #tpu.memory_space<vmem>>, vector<1x32xf32>
      %38 = vector.broadcast %37 : vector<1x32xf32> to vector<16x32xf32>
      %39 = arith.addf %36, %38 : vector<16x32xf32>
      %c0_22 = arith.constant 0 : index
      %c0_23 = arith.constant 0 : index
      %c0_24 = arith.constant 0 : index
      %40 = vector.load %arg3[%c0_22, %c0_23, %c0_24] : memref<1x16x32xf32, #tpu.memory_space<vmem>>, vector<1x16x32xf32>
      %41 = vector.shape_cast %40 : vector<1x16x32xf32> to vector<16x32xf32>
      %42 = arith.addf %41, %39 : vector<16x32xf32>
      %c0_25 = arith.constant 0 : index
      %c0_26 = arith.constant 0 : index
      %c0_27 = arith.constant 0 : index
      %43 = vector.load %arg9[%c0_25, %c0_26, %c0_27] : memref<1x16x32xf32, #tpu.memory_space<vmem>>, vector<1x16x32xf32>
      %44 = vector.shape_cast %43 : vector<1x16x32xf32> to vector<16x32xf32>
      %45 = vector.shape_cast %42 : vector<16x32xf32> to vector<1x16x32xf32>
      tpu.vector_store %arg9[%c0_25, %c0_26, %c0_27], %45 {strides = array<i32>} : memref<1x16x32xf32, #tpu.memory_space<vmem>>, vector<1x16x32xf32>,
    } else {
    }
    return
  }
  func.func @transform_0(%arg0: i32, %arg1: i32, %arg2: i32) -> (i32, i32, i32) {
    %c0_i32 = arith.constant 0 : i32
    %c0_i32_0 = arith.constant 0 : i32
    return %arg0, %arg1, %c0_i32 : i32, i32, i32
  }
  func.func @transform_1(%arg0: i32, %arg1: i32, %arg2: i32) -> (i32, i32, i32, i32) {
    %c0_i32 = arith.constant 0 : i32
    %c0_i32_0 = arith.constant 0 : i32
    %c0_i32_1 = arith.constant 0 : i32
    return %arg0, %c0_i32, %arg1, %c0_i32_0 : i32, i32, i32, i32
  }
  func.func @transform_2(%arg0: i32, %arg1: i32, %arg2: i32) -> (i32, i32, i32, i32) {
    %0 = arith.minsi %arg2, %arg1 : i32
    %c0_i32 = arith.constant 0 : i32
    %c0_i32_0 = arith.constant 0 : i32
    %c0_i32_1 = arith.constant 0 : i32
    return %arg0, %c0_i32, %0, %c0_i32_0 : i32, i32, i32, i32
  }
  func.func @transform_3(%arg0: i32, %arg1: i32, %arg2: i32) -> (i32, i32, i32, i32) {
    %0 = arith.minsi %arg2, %arg1 : i32
    %c0_i32 = arith.constant 0 : i32
    %c0_i32_0 = arith.constant 0 : i32
    %c0_i32_1 = arith.constant 0 : i32
    return %arg0, %c0_i32, %0, %c0_i32_0 : i32, i32, i32, i32
  }
  func.func @transform_4(%arg0: i32, %arg1: i32, %arg2: i32) -> (i32, i32, i32) {
    %c0_i32 = arith.constant 0 : i32
    %c0_i32_0 = arith.constant 0 : i32
    %c0_i32_1 = arith.constant 0 : i32
    %c0_i32_2 = arith.constant 0 : i32
    return %c0_i32, %c0_i32_0, %c0_i32_1 : i32, i32, i32
  }
  func.func @transform_5(%arg0: i32, %arg1: i32, %arg2: i32) -> (i32, i32) {
    %c0_i32 = arith.constant 0 : i32
    %c0_i32_0 = arith.constant 0 : i32
    %c0_i32_1 = arith.constant 0 : i32
    return %c0_i32, %c0_i32_0 : i32, i32
  }
  func.func @transform_6(%arg0: i32, %arg1: i32, %arg2: i32) -> (i32, i32, i32) {
    %c0_i32 = arith.constant 0 : i32
    %c0_i32_0 = arith.constant 0 : i32
    return %arg0, %arg1, %c0_i32 : i32, i32, i32
  }
}

module attributes {stable_mosaic.version = 11 : i64} {
  func.func @qkv_kernel(%arg0: i32, %arg1: i32, %arg2: memref<1x16x32xf32, #tpu.memory_space<vmem>>, %arg3: memref<1x32xf32, #tpu.memory_space<vmem>>, %arg4: memref<1x32xf32, #tpu.memory_space<vmem>>, %arg5: memref<32x96xf32, #tpu.memory_space<vmem>>, %arg6: memref<1x96xf32, #tpu.memory_space<vmem>>, %arg7: memref<1x4x16x8xf32, #tpu.memory_space<vmem>>, %arg8: memref<1x4x16x8xf32, #tpu.memory_space<vmem>>, %arg9: memref<1x4x16x8xf32, #tpu.memory_space<vmem>>) attributes {dimension_semantics = [#tpu.dimension_semantics<parallel>, #tpu.dimension_semantics<parallel>], iteration_bounds = array<i64: 2, 1>, scalar_prefetch = 0 : i64, scratch_operands = 0 : i64, tpu.core_type = #tpu.core_type<tc>, window_params = [{transform_indices = @transform_0, window_bounds = array<i64: 1, 16, 32>}, {pipeline_mode = #tpu.pipeline_mode<synchronous>, transform_indices = @transform_1, window_bounds = array<i64: 1, 32>}, {pipeline_mode = #tpu.pipeline_mode<synchronous>, transform_indices = @transform_2, window_bounds = array<i64: 1, 32>}, {pipeline_mode = #tpu.pipeline_mode<synchronous>, transform_indices = @transform_3, window_bounds = array<i64: 32, 96>}, {pipeline_mode = #tpu.pipeline_mode<synchronous>, transform_indices = @transform_4, window_bounds = array<i64: 1, 96>}, {transform_indices = @transform_5, window_bounds = array<i64: 1, 4, 16, 8>}, {transform_indices = @transform_6, window_bounds = array<i64: 1, 4, 16, 8>}, {transform_indices = @transform_7, window_bounds = array<i64: 1, 4, 16, 8>}]} {
    %c0 = arith.constant 0 : index
    %c0_0 = arith.constant 0 : index
    %c0_1 = arith.constant 0 : index
    %0 = vector.load %arg2[%c0, %c0_0, %c0_1] : memref<1x16x32xf32, #tpu.memory_space<vmem>>, vector<1x16x32xf32>
    %1 = vector.shape_cast %0 : vector<1x16x32xf32> to vector<16x32xf32>
    %c0_2 = arith.constant 0 : index
    %c0_3 = arith.constant 0 : index
    %2 = vector.load %arg3[%c0_2, %c0_3] : memref<1x32xf32, #tpu.memory_space<vmem>>, vector<1x32xf32>
    %c0_4 = arith.constant 0 : index
    %c0_5 = arith.constant 0 : index
    %3 = vector.load %arg4[%c0_4, %c0_5] : memref<1x32xf32, #tpu.memory_space<vmem>>, vector<1x32xf32>
    %cst = arith.constant dense<0.000000e+00> : vector<16xf32>
    %4 = vector.multi_reduction <add>, %1, %cst [1] : vector<16x32xf32> to vector<16xf32>
    %5 = vector.shape_cast %4 : vector<16xf32> to vector<16x1xf32>
    %cst_6 = arith.constant 3.200000e+01 : f32
    %6 = vector.broadcast %cst_6 : f32 to vector<16x1xf32>
    %7 = arith.divf %5, %6 : vector<16x1xf32>
    %8 = vector.broadcast %7 : vector<16x1xf32> to vector<16x32xf32>
    %9 = arith.subf %1, %8 : vector<16x32xf32>
    %10 = arith.mulf %9, %9 : vector<16x32xf32>
    %cst_7 = arith.constant dense<0.000000e+00> : vector<16xf32>
    %11 = vector.multi_reduction <add>, %10, %cst_7 [1] : vector<16x32xf32> to vector<16xf32>
    %12 = vector.shape_cast %11 : vector<16xf32> to vector<16x1xf32>
    %cst_8 = arith.constant 3.200000e+01 : f32
    %13 = vector.broadcast %cst_8 : f32 to vector<16x1xf32>
    %14 = arith.divf %12, %13 : vector<16x1xf32>
    %15 = vector.broadcast %7 : vector<16x1xf32> to vector<16x32xf32>
    %16 = arith.subf %1, %15 : vector<16x32xf32>
    %cst_9 = arith.constant 9.99999974E-6 : f32
    %17 = vector.broadcast %cst_9 : f32 to vector<16x1xf32>
    %18 = arith.addf %14, %17 : vector<16x1xf32>
    %19 = math.rsqrt %18 : vector<16x1xf32>
    %20 = vector.broadcast %19 : vector<16x1xf32> to vector<16x32xf32>
    %21 = arith.mulf %16, %20 : vector<16x32xf32>
    %22 = vector.broadcast %2 : vector<1x32xf32> to vector<16x32xf32>
    %23 = arith.mulf %21, %22 : vector<16x32xf32>
    %24 = vector.broadcast %3 : vector<1x32xf32> to vector<16x32xf32>
    %25 = arith.addf %23, %24 : vector<16x32xf32>
    %c0_10 = arith.constant 0 : index
    %c0_11 = arith.constant 0 : index
    %26 = vector.load %arg5[%c0_10, %c0_11] : memref<32x96xf32, #tpu.memory_space<vmem>>, vector<32x96xf32>
    %cst_12 = arith.constant dense<0.000000e+00> : vector<16x96xf32>
    %27 = tpu.matmul %25, %26, %cst_12 {dimension_numbers = #tpu.dot_dimension_numbers<[1], [0], [0], [1], [0, 0, 1, 1], [], []>} : vector<16x32xf32>, vector<32x96xf32>, vector<16x96xf32> -> vector<16x96xf32>
    %c0_13 = arith.constant 0 : index
    %c0_14 = arith.constant 0 : index
    %28 = vector.load %arg6[%c0_13, %c0_14] : memref<1x96xf32, #tpu.memory_space<vmem>>, vector<1x96xf32>
    %29 = vector.broadcast %28 : vector<1x96xf32> to vector<16x96xf32>
    %30 = arith.addf %27, %29 : vector<16x96xf32>
    %31 = vector.extract_strided_slice %30 {offsets = [0, 0], sizes = [16, 8], strides = [1, 1]} : vector<16x96xf32> to vector<16x8xf32>
    %cst_15 = arith.constant 0.353553385 : f32
    %32 = vector.broadcast %cst_15 : f32 to vector<16x8xf32>
    %33 = arith.mulf %31, %32 : vector<16x8xf32>
    %c0_16 = arith.constant 0 : index
    %c0_17 = arith.constant 0 : index
    %c0_18 = arith.constant 0 : index
    %c0_19 = arith.constant 0 : index
    %34 = vector.load %arg7[%c0_16, %c0_17, %c0_18, %c0_19] : memref<1x4x16x8xf32, #tpu.memory_space<vmem>>, vector<1x1x16x8xf32>
    %35 = vector.shape_cast %34 : vector<1x1x16x8xf32> to vector<16x8xf32>
    %36 = vector.shape_cast %33 : vector<16x8xf32> to vector<1x1x16x8xf32>
    tpu.vector_store %arg7[%c0_16, %c0_17, %c0_18, %c0_19], %36 {strides = array<i32>} : memref<1x4x16x8xf32, #tpu.memory_space<vmem>>, vector<1x1x16x8xf32>,
    %37 = vector.extract_strided_slice %30 {offsets = [0, 32], sizes = [16, 8], strides = [1, 1]} : vector<16x96xf32> to vector<16x8xf32>
    %c0_20 = arith.constant 0 : index
    %c0_21 = arith.constant 0 : index
    %c0_22 = arith.constant 0 : index
    %c0_23 = arith.constant 0 : index
    %38 = vector.load %arg8[%c0_20, %c0_21, %c0_22, %c0_23] : memref<1x4x16x8xf32, #tpu.memory_space<vmem>>, vector<1x1x16x8xf32>
    %39 = vector.shape_cast %38 : vector<1x1x16x8xf32> to vector<16x8xf32>
    %40 = vector.shape_cast %37 : vector<16x8xf32> to vector<1x1x16x8xf32>
    tpu.vector_store %arg8[%c0_20, %c0_21, %c0_22, %c0_23], %40 {strides = array<i32>} : memref<1x4x16x8xf32, #tpu.memory_space<vmem>>, vector<1x1x16x8xf32>,
    %41 = vector.extract_strided_slice %30 {offsets = [0, 64], sizes = [16, 8], strides = [1, 1]} : vector<16x96xf32> to vector<16x8xf32>
    %c0_24 = arith.constant 0 : index
    %c0_25 = arith.constant 0 : index
    %c0_26 = arith.constant 0 : index
    %c0_27 = arith.constant 0 : index
    %42 = vector.load %arg9[%c0_24, %c0_25, %c0_26, %c0_27] : memref<1x4x16x8xf32, #tpu.memory_space<vmem>>, vector<1x1x16x8xf32>
    %43 = vector.shape_cast %42 : vector<1x1x16x8xf32> to vector<16x8xf32>
    %44 = vector.shape_cast %41 : vector<16x8xf32> to vector<1x1x16x8xf32>
    tpu.vector_store %arg9[%c0_24, %c0_25, %c0_26, %c0_27], %44 {strides = array<i32>} : memref<1x4x16x8xf32, #tpu.memory_space<vmem>>, vector<1x1x16x8xf32>,
    %45 = vector.extract_strided_slice %30 {offsets = [0, 8], sizes = [16, 8], strides = [1, 1]} : vector<16x96xf32> to vector<16x8xf32>
    %cst_28 = arith.constant 0.353553385 : f32
    %46 = vector.broadcast %cst_28 : f32 to vector<16x8xf32>
    %47 = arith.mulf %45, %46 : vector<16x8xf32>
    %c0_29 = arith.constant 0 : index
    %c1 = arith.constant 1 : index
    %c0_30 = arith.constant 0 : index
    %c0_31 = arith.constant 0 : index
    %48 = vector.load %arg7[%c0_29, %c1, %c0_30, %c0_31] : memref<1x4x16x8xf32, #tpu.memory_space<vmem>>, vector<1x1x16x8xf32>
    %49 = vector.shape_cast %48 : vector<1x1x16x8xf32> to vector<16x8xf32>
    %50 = vector.shape_cast %47 : vector<16x8xf32> to vector<1x1x16x8xf32>
    tpu.vector_store %arg7[%c0_29, %c1, %c0_30, %c0_31], %50 {strides = array<i32>} : memref<1x4x16x8xf32, #tpu.memory_space<vmem>>, vector<1x1x16x8xf32>,
    %51 = vector.extract_strided_slice %30 {offsets = [0, 40], sizes = [16, 8], strides = [1, 1]} : vector<16x96xf32> to vector<16x8xf32>
    %c0_32 = arith.constant 0 : index
    %c1_33 = arith.constant 1 : index
    %c0_34 = arith.constant 0 : index
    %c0_35 = arith.constant 0 : index
    %52 = vector.load %arg8[%c0_32, %c1_33, %c0_34, %c0_35] : memref<1x4x16x8xf32, #tpu.memory_space<vmem>>, vector<1x1x16x8xf32>
    %53 = vector.shape_cast %52 : vector<1x1x16x8xf32> to vector<16x8xf32>
    %54 = vector.shape_cast %51 : vector<16x8xf32> to vector<1x1x16x8xf32>
    tpu.vector_store %arg8[%c0_32, %c1_33, %c0_34, %c0_35], %54 {strides = array<i32>} : memref<1x4x16x8xf32, #tpu.memory_space<vmem>>, vector<1x1x16x8xf32>,
    %55 = vector.extract_strided_slice %30 {offsets = [0, 72], sizes = [16, 8], strides = [1, 1]} : vector<16x96xf32> to vector<16x8xf32>
    %c0_36 = arith.constant 0 : index
    %c1_37 = arith.constant 1 : index
    %c0_38 = arith.constant 0 : index
    %c0_39 = arith.constant 0 : index
    %56 = vector.load %arg9[%c0_36, %c1_37, %c0_38, %c0_39] : memref<1x4x16x8xf32, #tpu.memory_space<vmem>>, vector<1x1x16x8xf32>
    %57 = vector.shape_cast %56 : vector<1x1x16x8xf32> to vector<16x8xf32>
    %58 = vector.shape_cast %55 : vector<16x8xf32> to vector<1x1x16x8xf32>
    tpu.vector_store %arg9[%c0_36, %c1_37, %c0_38, %c0_39], %58 {strides = array<i32>} : memref<1x4x16x8xf32, #tpu.memory_space<vmem>>, vector<1x1x16x8xf32>,
    %59 = vector.extract_strided_slice %30 {offsets = [0, 16], sizes = [16, 8], strides = [1, 1]} : vector<16x96xf32> to vector<16x8xf32>
    %cst_40 = arith.constant 0.353553385 : f32
    %60 = vector.broadcast %cst_40 : f32 to vector<16x8xf32>
    %61 = arith.mulf %59, %60 : vector<16x8xf32>
    %c0_41 = arith.constant 0 : index
    %c2 = arith.constant 2 : index
    %c0_42 = arith.constant 0 : index
    %c0_43 = arith.constant 0 : index
    %62 = vector.load %arg7[%c0_41, %c2, %c0_42, %c0_43] : memref<1x4x16x8xf32, #tpu.memory_space<vmem>>, vector<1x1x16x8xf32>
    %63 = vector.shape_cast %62 : vector<1x1x16x8xf32> to vector<16x8xf32>
    %64 = vector.shape_cast %61 : vector<16x8xf32> to vector<1x1x16x8xf32>
    tpu.vector_store %arg7[%c0_41, %c2, %c0_42, %c0_43], %64 {strides = array<i32>} : memref<1x4x16x8xf32, #tpu.memory_space<vmem>>, vector<1x1x16x8xf32>,
    %65 = vector.extract_strided_slice %30 {offsets = [0, 48], sizes = [16, 8], strides = [1, 1]} : vector<16x96xf32> to vector<16x8xf32>
    %c0_44 = arith.constant 0 : index
    %c2_45 = arith.constant 2 : index
    %c0_46 = arith.constant 0 : index
    %c0_47 = arith.constant 0 : index
    %66 = vector.load %arg8[%c0_44, %c2_45, %c0_46, %c0_47] : memref<1x4x16x8xf32, #tpu.memory_space<vmem>>, vector<1x1x16x8xf32>
    %67 = vector.shape_cast %66 : vector<1x1x16x8xf32> to vector<16x8xf32>
    %68 = vector.shape_cast %65 : vector<16x8xf32> to vector<1x1x16x8xf32>
    tpu.vector_store %arg8[%c0_44, %c2_45, %c0_46, %c0_47], %68 {strides = array<i32>} : memref<1x4x16x8xf32, #tpu.memory_space<vmem>>, vector<1x1x16x8xf32>,
    %69 = vector.extract_strided_slice %30 {offsets = [0, 80], sizes = [16, 8], strides = [1, 1]} : vector<16x96xf32> to vector<16x8xf32>
    %c0_48 = arith.constant 0 : index
    %c2_49 = arith.constant 2 : index
    %c0_50 = arith.constant 0 : index
    %c0_51 = arith.constant 0 : index
    %70 = vector.load %arg9[%c0_48, %c2_49, %c0_50, %c0_51] : memref<1x4x16x8xf32, #tpu.memory_space<vmem>>, vector<1x1x16x8xf32>
    %71 = vector.shape_cast %70 : vector<1x1x16x8xf32> to vector<16x8xf32>
    %72 = vector.shape_cast %69 : vector<16x8xf32> to vector<1x1x16x8xf32>
    tpu.vector_store %arg9[%c0_48, %c2_49, %c0_50, %c0_51], %72 {strides = array<i32>} : memref<1x4x16x8xf32, #tpu.memory_space<vmem>>, vector<1x1x16x8xf32>,
    %73 = vector.extract_strided_slice %30 {offsets = [0, 24], sizes = [16, 8], strides = [1, 1]} : vector<16x96xf32> to vector<16x8xf32>
    %cst_52 = arith.constant 0.353553385 : f32
    %74 = vector.broadcast %cst_52 : f32 to vector<16x8xf32>
    %75 = arith.mulf %73, %74 : vector<16x8xf32>
    %c0_53 = arith.constant 0 : index
    %c3 = arith.constant 3 : index
    %c0_54 = arith.constant 0 : index
    %c0_55 = arith.constant 0 : index
    %76 = vector.load %arg7[%c0_53, %c3, %c0_54, %c0_55] : memref<1x4x16x8xf32, #tpu.memory_space<vmem>>, vector<1x1x16x8xf32>
    %77 = vector.shape_cast %76 : vector<1x1x16x8xf32> to vector<16x8xf32>
    %78 = vector.shape_cast %75 : vector<16x8xf32> to vector<1x1x16x8xf32>
    tpu.vector_store %arg7[%c0_53, %c3, %c0_54, %c0_55], %78 {strides = array<i32>} : memref<1x4x16x8xf32, #tpu.memory_space<vmem>>, vector<1x1x16x8xf32>,
    %79 = vector.extract_strided_slice %30 {offsets = [0, 56], sizes = [16, 8], strides = [1, 1]} : vector<16x96xf32> to vector<16x8xf32>
    %c0_56 = arith.constant 0 : index
    %c3_57 = arith.constant 3 : index
    %c0_58 = arith.constant 0 : index
    %c0_59 = arith.constant 0 : index
    %80 = vector.load %arg8[%c0_56, %c3_57, %c0_58, %c0_59] : memref<1x4x16x8xf32, #tpu.memory_space<vmem>>, vector<1x1x16x8xf32>
    %81 = vector.shape_cast %80 : vector<1x1x16x8xf32> to vector<16x8xf32>
    %82 = vector.shape_cast %79 : vector<16x8xf32> to vector<1x1x16x8xf32>
    tpu.vector_store %arg8[%c0_56, %c3_57, %c0_58, %c0_59], %82 {strides = array<i32>} : memref<1x4x16x8xf32, #tpu.memory_space<vmem>>, vector<1x1x16x8xf32>,
    %83 = vector.extract_strided_slice %30 {offsets = [0, 88], sizes = [16, 8], strides = [1, 1]} : vector<16x96xf32> to vector<16x8xf32>
    %c0_60 = arith.constant 0 : index
    %c3_61 = arith.constant 3 : index
    %c0_62 = arith.constant 0 : index
    %c0_63 = arith.constant 0 : index
    %84 = vector.load %arg9[%c0_60, %c3_61, %c0_62, %c0_63] : memref<1x4x16x8xf32, #tpu.memory_space<vmem>>, vector<1x1x16x8xf32>
    %85 = vector.shape_cast %84 : vector<1x1x16x8xf32> to vector<16x8xf32>
    %86 = vector.shape_cast %83 : vector<16x8xf32> to vector<1x1x16x8xf32>
    tpu.vector_store %arg9[%c0_60, %c3_61, %c0_62, %c0_63], %86 {strides = array<i32>} : memref<1x4x16x8xf32, #tpu.memory_space<vmem>>, vector<1x1x16x8xf32>,
    return
  }
  func.func @transform_0(%arg0: i32, %arg1: i32) -> (i32, i32, i32) {
    %c0_i32 = arith.constant 0 : i32
    %c0_i32_0 = arith.constant 0 : i32
    return %arg0, %arg1, %c0_i32 : i32, i32, i32
  }
  func.func @transform_1(%arg0: i32, %arg1: i32) -> (i32, i32) {
    %c0_i32 = arith.constant 0 : i32
    %c0_i32_0 = arith.constant 0 : i32
    %c0_i32_1 = arith.constant 0 : i32
    return %c0_i32, %c0_i32_0 : i32, i32
  }
  func.func @transform_2(%arg0: i32, %arg1: i32) -> (i32, i32) {
    %c0_i32 = arith.constant 0 : i32
    %c0_i32_0 = arith.constant 0 : i32
    %c0_i32_1 = arith.constant 0 : i32
    return %c0_i32, %c0_i32_0 : i32, i32
  }
  func.func @transform_3(%arg0: i32, %arg1: i32) -> (i32, i32) {
    %c0_i32 = arith.constant 0 : i32
    %c0_i32_0 = arith.constant 0 : i32
    %c0_i32_1 = arith.constant 0 : i32
    return %c0_i32, %c0_i32_0 : i32, i32
  }
  func.func @transform_4(%arg0: i32, %arg1: i32) -> (i32, i32) {
    %c0_i32 = arith.constant 0 : i32
    %c0_i32_0 = arith.constant 0 : i32
    %c0_i32_1 = arith.constant 0 : i32
    return %c0_i32, %c0_i32_0 : i32, i32
  }
  func.func @transform_5(%arg0: i32, %arg1: i32) -> (i32, i32, i32, i32) {
    %c0_i32 = arith.constant 0 : i32
    %c0_i32_0 = arith.constant 0 : i32
    %c0_i32_1 = arith.constant 0 : i32
    return %arg0, %c0_i32, %arg1, %c0_i32_0 : i32, i32, i32, i32
  }
  func.func @transform_6(%arg0: i32, %arg1: i32) -> (i32, i32, i32, i32) {
    %c0_i32 = arith.constant 0 : i32
    %c0_i32_0 = arith.constant 0 : i32
    %c0_i32_1 = arith.constant 0 : i32
    return %arg0, %c0_i32, %arg1, %c0_i32_0 : i32, i32, i32, i32
  }
  func.func @transform_7(%arg0: i32, %arg1: i32) -> (i32, i32, i32, i32) {
    %c0_i32 = arith.constant 0 : i32
    %c0_i32_0 = arith.constant 0 : i32
    %c0_i32_1 = arith.constant 0 : i32
    return %arg0, %c0_i32, %arg1, %c0_i32_0 : i32, i32, i32, i32
  }
}

module attributes {stable_mosaic.version = 11 : i64} {
  func.func @mlp_kernel(%arg0: i32, %arg1: i32, %arg2: i32, %arg3: memref<1x16x32xf32, #tpu.memory_space<vmem>>, %arg4: memref<1x32xf32, #tpu.memory_space<vmem>>, %arg5: memref<1x32xf32, #tpu.memory_space<vmem>>, %arg6: memref<32x128xf32, #tpu.memory_space<vmem>>, %arg7: memref<1x128xf32, #tpu.memory_space<vmem>>, %arg8: memref<128x32xf32, #tpu.memory_space<vmem>>, %arg9: memref<1x32xf32, #tpu.memory_space<vmem>>, %arg10: memref<1x16x32xf32, #tpu.memory_space<vmem>>, %arg11: memref<16x32xf32, #tpu.memory_space<vmem>>, %arg12: memref<16x32xf32, #tpu.memory_space<vmem>>) attributes {dimension_semantics = [#tpu.dimension_semantics<parallel>, #tpu.dimension_semantics<parallel>, #tpu.dimension_semantics<arbitrary>], iteration_bounds = array<i64: 2, 1, 1>, scalar_prefetch = 0 : i64, scratch_operands = 2 : i64, tpu.core_type = #tpu.core_type<tc>, window_params = [{transform_indices = @transform_0, window_bounds = array<i64: 1, 16, 32>}, {pipeline_mode = #tpu.pipeline_mode<synchronous>, transform_indices = @transform_1, window_bounds = array<i64: 1, 32>}, {pipeline_mode = #tpu.pipeline_mode<synchronous>, transform_indices = @transform_2, window_bounds = array<i64: 1, 32>}, {transform_indices = @transform_3, window_bounds = array<i64: 32, 128>}, {transform_indices = @transform_4, window_bounds = array<i64: 1, 128>}, {transform_indices = @transform_5, window_bounds = array<i64: 128, 32>}, {pipeline_mode = #tpu.pipeline_mode<synchronous>, transform_indices = @transform_6, window_bounds = array<i64: 1, 32>}, {transform_indices = @transform_7, window_bounds = array<i64: 1, 16, 32>}]} {
    %c0_i32 = arith.constant 0 : i32
    %0 = arith.cmpi eq, %arg2, %c0_i32 : i32
    %1 = arith.extui %0 : i1 to i32
    %c0_i32_0 = arith.constant 0 : i32
    %2 = arith.cmpi ne, %1, %c0_i32_0 : i32
    scf.if %2 {
      %c0_19 = arith.constant 0 : index
      %c0_20 = arith.constant 0 : index
      %c0_21 = arith.constant 0 : index
      %31 = vector.load %arg3[%c0_19, %c0_20, %c0_21] : memref<1x16x32xf32, #tpu.memory_space<vmem>>, vector<1x16x32xf32>
      %32 = vector.shape_cast %31 : vector<1x16x32xf32> to vector<16x32xf32>
      %c0_22 = arith.constant 0 : index
      %c0_23 = arith.constant 0 : index
      %33 = vector.load %arg4[%c0_22, %c0_23] : memref<1x32xf32, #tpu.memory_space<vmem>>, vector<1x32xf32>
      %c0_24 = arith.constant 0 : index
      %c0_25 = arith.constant 0 : index
      %34 = vector.load %arg5[%c0_24, %c0_25] : memref<1x32xf32, #tpu.memory_space<vmem>>, vector<1x32xf32>
      %cst_26 = arith.constant dense<0.000000e+00> : vector<16xf32>
      %35 = vector.multi_reduction <add>, %32, %cst_26 [1] : vector<16x32xf32> to vector<16xf32>
      %36 = vector.shape_cast %35 : vector<16xf32> to vector<16x1xf32>
      %cst_27 = arith.constant 3.200000e+01 : f32
      %37 = vector.broadcast %cst_27 : f32 to vector<16x1xf32>
      %38 = arith.divf %36, %37 : vector<16x1xf32>
      %39 = vector.broadcast %38 : vector<16x1xf32> to vector<16x32xf32>
      %40 = arith.subf %32, %39 : vector<16x32xf32>
      %41 = arith.mulf %40, %40 : vector<16x32xf32>
      %cst_28 = arith.constant dense<0.000000e+00> : vector<16xf32>
      %42 = vector.multi_reduction <add>, %41, %cst_28 [1] : vector<16x32xf32> to vector<16xf32>
      %43 = vector.shape_cast %42 : vector<16xf32> to vector<16x1xf32>
      %cst_29 = arith.constant 3.200000e+01 : f32
      %44 = vector.broadcast %cst_29 : f32 to vector<16x1xf32>
      %45 = arith.divf %43, %44 : vector<16x1xf32>
      %46 = vector.broadcast %38 : vector<16x1xf32> to vector<16x32xf32>
      %47 = arith.subf %32, %46 : vector<16x32xf32>
      %cst_30 = arith.constant 9.99999974E-6 : f32
      %48 = vector.broadcast %cst_30 : f32 to vector<16x1xf32>
      %49 = arith.addf %45, %48 : vector<16x1xf32>
      %50 = math.rsqrt %49 : vector<16x1xf32>
      %51 = vector.broadcast %50 : vector<16x1xf32> to vector<16x32xf32>
      %52 = arith.mulf %47, %51 : vector<16x32xf32>
      %53 = vector.broadcast %33 : vector<1x32xf32> to vector<16x32xf32>
      %54 = arith.mulf %52, %53 : vector<16x32xf32>
      %55 = vector.broadcast %34 : vector<1x32xf32> to vector<16x32xf32>
      %56 = arith.addf %54, %55 : vector<16x32xf32>
      %c0_31 = arith.constant 0 : index
      %c0_32 = arith.constant 0 : index
      %57 = vector.load %arg11[%c0_31, %c0_32] : memref<16x32xf32, #tpu.memory_space<vmem>>, vector<16x32xf32>
      tpu.vector_store %arg11[%c0_31, %c0_32], %56 {strides = array<i32>} : memref<16x32xf32, #tpu.memory_space<vmem>>, vector<16x32xf32>,
      %cst_33 = arith.constant 0.000000e+00 : f32
      %58 = vector.broadcast %cst_33 : f32 to vector<16x32xf32>
      %c0_34 = arith.constant 0 : index
      %c0_35 = arith.constant 0 : index
      %59 = vector.load %arg12[%c0_34, %c0_35] : memref<16x32xf32, #tpu.memory_space<vmem>>, vector<16x32xf32>
      tpu.vector_store %arg12[%c0_34, %c0_35], %58 {strides = array<i32>} : memref<16x32xf32, #tpu.memory_space<vmem>>, vector<16x32xf32>,
    } else {
    }
    %c0 = arith.constant 0 : index
    %c0_1 = arith.constant 0 : index
    %3 = vector.load %arg11[%c0, %c0_1] : memref<16x32xf32, #tpu.memory_space<vmem>>, vector<16x32xf32>
    %c0_2 = arith.constant 0 : index
    %c0_3 = arith.constant 0 : index
    %4 = vector.load %arg6[%c0_2, %c0_3] : memref<32x128xf32, #tpu.memory_space<vmem>>, vector<32x128xf32>
    %cst = arith.constant dense<0.000000e+00> : vector<16x128xf32>
    %5 = tpu.matmul %3, %4, %cst {dimension_numbers = #tpu.dot_dimension_numbers<[1], [0], [0], [1], [0, 0, 1, 1], [], []>} : vector<16x32xf32>, vector<32x128xf32>, vector<16x128xf32> -> vector<16x128xf32>
    %c0_4 = arith.constant 0 : index
    %c0_5 = arith.constant 0 : index
    %6 = vector.load %arg7[%c0_4, %c0_5] : memref<1x128xf32, #tpu.memory_space<vmem>>, vector<1x128xf32>
    %7 = vector.broadcast %6 : vector<1x128xf32> to vector<16x128xf32>
    %8 = arith.addf %5, %7 : vector<16x128xf32>
    %cst_6 = arith.constant 5.000000e-01 : f32
    %9 = vector.broadcast %cst_6 : f32 to vector<16x128xf32>
    %10 = arith.mulf %9, %8 : vector<16x128xf32>
    %cst_7 = arith.constant 0.636619746 : f32
    %11 = math.sqrt %cst_7 : f32
    %12 = arith.mulf %8, %8 : vector<16x128xf32>
    %13 = arith.mulf %8, %12 : vector<16x128xf32>
    %cst_8 = arith.constant 4.471500e-02 : f32
    %14 = vector.broadcast %cst_8 : f32 to vector<16x128xf32>
    %15 = arith.mulf %14, %13 : vector<16x128xf32>
    %16 = arith.addf %8, %15 : vector<16x128xf32>
    %17 = vector.broadcast %11 : f32 to vector<16x128xf32>
    %18 = arith.mulf %17, %16 : vector<16x128xf32>
    %19 = math.tanh %18 : vector<16x128xf32>
    %cst_9 = arith.constant 1.000000e+00 : f32
    %20 = vector.broadcast %cst_9 : f32 to vector<16x128xf32>
    %21 = arith.addf %20, %19 : vector<16x128xf32>
    %22 = arith.mulf %10, %21 : vector<16x128xf32>
    %c0_10 = arith.constant 0 : index
    %c0_11 = arith.constant 0 : index
    %23 = vector.load %arg12[%c0_10, %c0_11] : memref<16x32xf32, #tpu.memory_space<vmem>>, vector<16x32xf32>
    %c0_12 = arith.constant 0 : index
    %c0_13 = arith.constant 0 : index
    %24 = vector.load %arg8[%c0_12, %c0_13] : memref<128x32xf32, #tpu.memory_space<vmem>>, vector<128x32xf32>
    %cst_14 = arith.constant dense<0.000000e+00> : vector<16x32xf32>
    %25 = tpu.matmul %22, %24, %cst_14 {dimension_numbers = #tpu.dot_dimension_numbers<[1], [0], [0], [1], [0, 0, 1, 1], [], []>} : vector<16x128xf32>, vector<128x32xf32>, vector<16x32xf32> -> vector<16x32xf32>
    %26 = arith.addf %23, %25 : vector<16x32xf32>
    %c0_15 = arith.constant 0 : index
    %c0_16 = arith.constant 0 : index
    %27 = vector.load %arg12[%c0_15, %c0_16] : memref<16x32xf32, #tpu.memory_space<vmem>>, vector<16x32xf32>
    tpu.vector_store %arg12[%c0_15, %c0_16], %26 {strides = array<i32>} : memref<16x32xf32, #tpu.memory_space<vmem>>, vector<16x32xf32>,
    %c0_i32_17 = arith.constant 0 : i32
    %28 = arith.cmpi eq, %arg2, %c0_i32_17 : i32
    %29 = arith.extui %28 : i1 to i32
    %c0_i32_18 = arith.constant 0 : i32
    %30 = arith.cmpi ne, %29, %c0_i32_18 : i32
    scf.if %30 {
      %c0_19 = arith.constant 0 : index
      %c0_20 = arith.constant 0 : index
      %31 = vector.load %arg12[%c0_19, %c0_20] : memref<16x32xf32, #tpu.memory_space<vmem>>, vector<16x32xf32>
      %c0_21 = arith.constant 0 : index
      %c0_22 = arith.constant 0 : index
      %32 = vector.load %arg9[%c0_21, %c0_22] : memref<1x32xf32, #tpu.memory_space<vmem>>, vector<1x32xf32>
      %33 = vector.broadcast %32 : vector<1x32xf32> to vector<16x32xf32>
      %34 = arith.addf %31, %33 : vector<16x32xf32>
      %c0_23 = arith.constant 0 : index
      %c0_24 = arith.constant 0 : index
      %c0_25 = arith.constant 0 : index
      %35 = vector.load %arg3[%c0_23, %c0_24, %c0_25] : memref<1x16x32xf32, #tpu.memory_space<vmem>>, vector<1x16x32xf32>
      %36 = vector.shape_cast %35 : vector<1x16x32xf32> to vector<16x32xf32>
      %37 = arith.addf %36, %34 : vector<16x32xf32>
      %c0_26 = arith.constant 0 : index
      %c0_27 = arith.constant 0 : index
      %c0_28 = arith.constant 0 : index
      %38 = vector.load %arg10[%c0_26, %c0_27, %c0_28] : memref<1x16x32xf32, #tpu.memory_space<vmem>>, vector<1x16x32xf32>
      %39 = vector.shape_cast %38 : vector<1x16x32xf32> to vector<16x32xf32>
      %40 = vector.shape_cast %37 : vector<16x32xf32> to vector<1x16x32xf32>
      tpu.vector_store %arg10[%c0_26, %c0_27, %c0_28], %40 {strides = array<i32>} : memref<1x16x32xf32, #tpu.memory_space<vmem>>, vector<1x16x32xf32>,
    } else {
    }
    return
  }
  func.func @transform_0(%arg0: i32, %arg1: i32, %arg2: i32) -> (i32, i32, i32) {
    %c0_i32 = arith.constant 0 : i32
    %c0_i32_0 = arith.constant 0 : i32
    return %arg0, %arg1, %c0_i32 : i32, i32, i32
  }
  func.func @transform_1(%arg0: i32, %arg1: i32, %arg2: i32) -> (i32, i32) {
    %c0_i32 = arith.constant 0 : i32
    %c0_i32_0 = arith.constant 0 : i32
    %c0_i32_1 = arith.constant 0 : i32
    return %c0_i32, %c0_i32_0 : i32, i32
  }
  func.func @transform_2(%arg0: i32, %arg1: i32, %arg2: i32) -> (i32, i32) {
    %c0_i32 = arith.constant 0 : i32
    %c0_i32_0 = arith.constant 0 : i32
    %c0_i32_1 = arith.constant 0 : i32
    return %c0_i32, %c0_i32_0 : i32, i32
  }
  func.func @transform_3(%arg0: i32, %arg1: i32, %arg2: i32) -> (i32, i32) {
    %c0_i32 = arith.constant 0 : i32
    %c0_i32_0 = arith.constant 0 : i32
    return %c0_i32, %arg2 : i32, i32
  }
  func.func @transform_4(%arg0: i32, %arg1: i32, %arg2: i32) -> (i32, i32) {
    %c0_i32 = arith.constant 0 : i32
    %c0_i32_0 = arith.constant 0 : i32
    return %c0_i32, %arg2 : i32, i32
  }
  func.func @transform_5(%arg0: i32, %arg1: i32, %arg2: i32) -> (i32, i32) {
    %c0_i32 = arith.constant 0 : i32
    %c0_i32_0 = arith.constant 0 : i32
    return %arg2, %c0_i32 : i32, i32
  }
  func.func @transform_6(%arg0: i32, %arg1: i32, %arg2: i32) -> (i32, i32) {
    %c0_i32 = arith.constant 0 : i32
    %c0_i32_0 = arith.constant 0 : i32
    %c0_i32_1 = arith.constant 0 : i32
    return %c0_i32, %c0_i32_0 : i32, i32
  }
  func.func @transform_7(%arg0: i32, %arg1: i32, %arg2: i32) -> (i32, i32, i32) {
    %c0_i32 = arith.constant 0 : i32
    %c0_i32_0 = arith.constant 0 : i32
    return %arg0, %arg1, %c0_i32 : i32, i32, i32
  }
}

</mosaic_0001>

<llo_original>
// kernel: gpt2_forward.13
$region0: #{gpt2_forward.13}
  #allocation0 [shape = 'u32[]', space=smem, size = 0x4, offset = 0x4, fixed_abs, tag = 'smem constant byte address 0x4 - core index']
  #allocation1 [shape = 'u32[144,128]{1,0:T(1,128)}', space=vmem, size = 0x12000, scoped, tag = 'internal scratch']
  %s0 = inlined_call_operand.hbm [shape: f32[2,16,32], index: 0, kind: input, shape index: {}]
  %s1 = inlined_call_operand.hbm [shape: f32[1,32], index: 1, kind: input, shape index: {}]
  %s2 = inlined_call_operand.hbm [shape: f32[1,32], index: 2, kind: input, shape index: {}]
  %s3 = inlined_call_operand.hbm [shape: f32[128,32], index: 3, kind: input, shape index: {}]
  %s4 = inlined_call_operand.hbm [shape: f32[2,16,128], index: 4, kind: output, shape index: {}]
  %s5 = sld [smem:[#allocation0]]
  $region65: #{gpt2_forward.13} parent=0
    _
  %s7 = ssub.s32 1, %s5
  %s8 = scalar_select 0, %s7, %s5
  $region1: #{gpt2_forward.13} parent=0
    #allocation2 [shape = 'u8[16384]{0}', space=vmem, size = 0x4000, scoped, tag = 'input window, operand 0']
    #allocation3 [shape = 's32[2]{0}', space=sflag, size = 0x8, scoped, tag = 'scoped memory for gpt2_forward.13']
    #allocation4 [shape = 's32[2]{0}', space=sflag, size = 0x8, scoped, tag = 'scoped memory for gpt2_forward.13']
    #allocation5 [shape = 'u8[512]{0}', space=vmem, size = 0x400, scoped, tag = 'input window, operand 1, single buffered']
    #allocation6 [shape = 's32[1]{0}', space=sflag, size = 0x4, scoped, tag = 'scoped memory for gpt2_forward.13']
    #allocation7 [shape = 'u8[512]{0}', space=vmem, size = 0x400, scoped, tag = 'input window, operand 2, single buffered']
    #allocation8 [shape = 'u8[65536]{0}', space=vmem, size = 0x10000, scoped, tag = 'input window, operand 3, single buffered']
    #allocation9 [shape = 's32[1]{0}', space=sflag, size = 0x4, scoped, tag = 'scoped memory for gpt2_forward.13']
    #allocation10 [shape = 'u8[16384]{0}', space=vmem, size = 0x4000, scoped, tag = 'output window, operand 0']
    %9 = vsyncpa [#allocation3], 0
    %s10 = scalar_lea.sflag [#allocation3], 1
    %11 = vsyncpa %s10, 0
    %12 = vsyncpa [#allocation6], 0
    %13 = vsyncpa [#allocation9], 0
    %14 = vsyncpa [#allocation4], 0
    %s15 = scalar_lea.sflag [#allocation4], 1
    %16 = vsyncpa %s15, 0
    loop: start=0, step=1, limit=4
    $region2: #{gpt2_forward.13} parent=1 // loop_pre_header
      _
    $region3: #{gpt2_forward.13} parent=1 // loop_header
      %s18 = sphi 0, %s22
      %p19 = scmp.ge.s32.totalorder %s18, 4
      %s25 = sphi 0, %s44
      %s26 = sphi 0, %s40
      %s27 = sphi 0, %s36
      %s28 = sphi 0, %s25
      %s29 = sphi 0, %s26
      %s30 = sphi 0, %s27
      %s31 = sphi 0, %s28
      %s32 = sphi 0, %s29
      %s33 = sphi 0, %s30
      %s49 = sphi 0, %s51
      %s52 = sphi 0, %s49
      %s53 = sphi 0, %s52
      %s69 = sphi 0, %s53
      %s73 = sphi 0, %s73
      %s75 = sphi 0, %s73
      %s76 = sphi 0, %s75
      %s90 = sphi 0, %s76
      %s94 = sphi 0, %s94
      %s96 = sphi 0, %s94
      %s97 = sphi 0, %s96
      %s111 = sphi 0, %s97
      %s117 = sphi 0, %s119
      %s120 = sphi 0, %s117
      %s121 = sphi 0, %s120
      %s137 = sphi 0, %s121
      %s147 = sphi 0, %s149
      %s150 = sphi 0, %s147
      %s151 = sphi 0, %s150
      %s167 = sphi 0, %s151
    $region4: #{gpt2_forward.13} parent=1 // loop_header_branch
      %21 = sbr.rel (%p19) target = $region8
    $region5: #{gpt2_forward.13} parent=1 // loop_body
      %s23 = ssub.s32 %s18, 1
      %s24 = ssub.s32 %s18, 2
      %s34 = sadd.s32 1, %s27
      %p35 = scmp.ge.s32.totalorder %s34, 1
      %s36 = scalar_select %p35, 0, %s34
      %s37 = sadd.s32 1, %s26
      %s38 = scalar_select %p35, %s37, %s26
      %p39 = scmp.ge.s32.totalorder %s38, 2
      %s40 = scalar_select %p39, 0, %s38
      %s41 = sadd.s32 1, %s25
      %s42 = scalar_select %p39, %s41, %s25
      %p43 = scmp.ge.s32.totalorder %s42, 1
      %s44 = scalar_select %p43, 0, %s42
      %s45 = ssub.s32 %s26, %s40
      %s46 = ssub.s32 %s27, %s36
      %s47 = sor.u32 %s45, %s46
      %p48 = scmp.eq.s32.totalorder %s47, 0
      %s50 = sadd.s32 %s49, 1
      %s51 = scalar_select %p48, %s49, %s50
      %p54 = pneg %p48
      %p55 = scmp.eq.s32.totalorder %s18, 1
      %p56 = por %p54, %p55
      %p57 = scmp.ne.s32.totalorder %s49, %s52
      %p58 = scmp.eq.s32.totalorder %s18, 0
      %p59 = por %p57, %p58
      %p60 = scmp.ne.s32.totalorder %s49, %s52
      %p61 = scmp.eq.s32.totalorder %s23, 1
      %p62 = por %p60, %p61
      %p63 = scmp.ne.s32.totalorder %s52, %s53
      %p64 = scmp.eq.s32.totalorder %s23, 0
      %p65 = por %p63, %p64
      %p66 = scmp.ne.s32.totalorder %s52, %s53
      %p67 = scmp.eq.s32.totalorder %s24, 1
      %p68 = por %p66, %p67
      %p70 = scmp.ne.s32.totalorder %s53, %s69
      %p71 = scmp.eq.s32.totalorder %s24, 0
      %p72 = por %p70, %p71
      %s74 = sadd.s32 %s73, 1
      %p77 = scmp.eq.s32.totalorder %s18, 1
      %p78 = scmp.ne.s32.totalorder %s73, %s75
      %p79 = scmp.eq.s32.totalorder %s18, 0
      %p80 = por %p78, %p79
      %p81 = scmp.ne.s32.totalorder %s73, %s75
      %p82 = scmp.eq.s32.totalorder %s23, 1
      %p83 = por %p81, %p82
      %p84 = scmp.ne.s32.totalorder %s75, %s76
      %p85 = scmp.eq.s32.totalorder %s23, 0
      %p86 = por %p84, %p85
      %p87 = scmp.ne.s32.totalorder %s75, %s76
      %p88 = scmp.eq.s32.totalorder %s24, 1
      %p89 = por %p87, %p88
      %p91 = scmp.ne.s32.totalorder %s76, %s90
      %p92 = scmp.eq.s32.totalorder %s24, 0
      %p93 = por %p91, %p92
      %s95 = sadd.s32 %s94, 1
      %p98 = scmp.eq.s32.totalorder %s18, 1
      %p99 = scmp.ne.s32.totalorder %s94, %s96
      %p100 = scmp.eq.s32.totalorder %s18, 0
      %p101 = por %p99, %p100
      %p102 = scmp.ne.s32.totalorder %s94, %s96
      %p103 = scmp.eq.s32.totalorder %s23, 1
      %p104 = por %p102, %p103
      %p105 = scmp.ne.s32.totalorder %s96, %s97
      %p106 = scmp.eq.s32.totalorder %s23, 0
      %p107 = por %p105, %p106
      %p108 = scmp.ne.s32.totalorder %s96, %s97
      %p109 = scmp.eq.s32.totalorder %s24, 1
      %p110 = por %p108, %p109
      %p112 = scmp.ne.s32.totalorder %s97, %s111
      %p113 = scmp.eq.s32.totalorder %s24, 0
      %p114 = por %p112, %p113
      %s115 = ssub.s32 %s25, %s44
      %p116 = scmp.eq.s32.totalorder %s115, 0
      %s118 = sadd.s32 %s117, 1
      %s119 = scalar_select %p116, %s117, %s118
      %p122 = pneg %p116
      %p123 = scmp.eq.s32.totalorder %s18, 1
      %p124 = por %p122, %p123
      %p125 = scmp.ne.s32.totalorder %s117, %s120
      %p126 = scmp.eq.s32.totalorder %s18, 0
      %p127 = por %p125, %p126
      %p128 = scmp.ne.s32.totalorder %s117, %s120
      %p129 = scmp.eq.s32.totalorder %s23, 1
      %p130 = por %p128, %p129
      %p131 = scmp.ne.s32.totalorder %s120, %s121
      %p132 = scmp.eq.s32.totalorder %s23, 0
      %p133 = por %p131, %p132
      %p134 = scmp.ne.s32.totalorder %s120, %s121
      %p135 = scmp.eq.s32.totalorder %s24, 1
      %p136 = por %p134, %p135
      %p138 = scmp.ne.s32.totalorder %s121, %s137
      %p139 = scmp.eq.s32.totalorder %s24, 0
      %p140 = por %p138, %p139
      %s141 = ssub.s32 %s26, %s40
      %s142 = ssub.s32 %s27, %s36
      %s143 = sor.u32 %s141, %s142
      %s144 = ssub.s32 %s25, %s44
      %s145 = sor.u32 %s143, %s144
      %p146 = scmp.eq.s32.totalorder %s145, 0
      %s148 = sadd.s32 %s147, 1
      %s149 = scalar_select %p146, %s147, %s148
      %p152 = pneg %p146
      %p153 = scmp.eq.s32.totalorder %s18, 1
      %p154 = por %p152, %p153
      %p155 = scmp.ne.s32.totalorder %s147, %s150
      %p156 = scmp.eq.s32.totalorder %s18, 0
      %p157 = por %p155, %p156
      %p158 = scmp.ne.s32.totalorder %s147, %s150
      %p159 = scmp.eq.s32.totalorder %s23, 1
      %p160 = por %p158, %p159
      %p161 = scmp.ne.s32.totalorder %s150, %s151
      %p162 = scmp.eq.s32.totalorder %s23, 0
      %p163 = por %p161, %p162
      %p164 = scmp.ne.s32.totalorder %s150, %s151
      %p165 = scmp.eq.s32.totalorder %s24, 1
      %p166 = por %p164, %p165
      %p168 = scmp.ne.s32.totalorder %s151, %s167
      %p169 = scmp.eq.s32.totalorder %s24, 0
      %p170 = por %p168, %p169
      %p171 = scmp.le.s32.totalorder 1, %s18
      %p172 = scmp.lt.s32.totalorder %s18, 3
      %p173 = pnand %p171, %p172
      %p174 = pneg %p173
      // Predicated region
      $region9: #{gpt2_forward.13} parent=5 // pred_check
        _
      $region10: #{gpt2_forward.13} parent=5 // pred_check_branch
        %176 = sbr.rel (%p173) target = $region12
      $region11: #{gpt2_forward.13} parent=5 // pred_region
        %s177 = ssub.s32 %s18, 1
        // Predicated region
        $region13: #{gpt2_forward.13} parent=11 // pred_check
          %p178 = pneg %p86
        $region14: #{gpt2_forward.13} parent=11 // pred_check_branch
          %180 = sbr.rel (%p178) target = $region16
        $region15: #{gpt2_forward.13} parent=11 // pred_region
          %s182 = ssub.s32 16, 16
          %183 = vsyncadd [#allocation6], %s182
          %s185 = sshll.u32 [#allocation5], 4
          %s186 = int_to_ptr.vmem [resolvable:$true] %s185
          %188 = dma.hbm_to_vmem [thread:$0]  %s1, 16, %s186, [#allocation6]
        $region16: #{gpt2_forward.13} parent=11 // pred_fallthru
          _
        // Predicated region
        $region17: #{gpt2_forward.13} parent=11 // pred_check
          %p189 = pneg %p107
        $region18: #{gpt2_forward.13} parent=11 // pred_check_branch
          %191 = sbr.rel (%p189) target = $region20
        $region19: #{gpt2_forward.13} parent=11 // pred_region
          %s193 = ssub.s32 16, 16
          %194 = vsyncadd [#allocation6], %s193
          %s196 = sshll.u32 [#allocation7], 4
          %s197 = int_to_ptr.vmem [resolvable:$true] %s196
          %199 = dma.hbm_to_vmem [thread:$0]  %s2, 16, %s197, [#allocation6]
        $region20: #{gpt2_forward.13} parent=11 // pred_fallthru
          _
        // Predicated region
        $region21: #{gpt2_forward.13} parent=11 // pred_check
          %p200 = pneg %p133
        $region22: #{gpt2_forward.13} parent=11 // pred_check_branch
          %202 = sbr.rel (%p200) target = $region24
        $region23: #{gpt2_forward.13} parent=11 // pred_region
          %s203 = smul.u32 16, %s28
          %s205 = ssub.s32 2048, 2048
          %206 = vsyncadd [#allocation9], %s205
          %s207 = smul.addr %s203, 128
          %s208 = scalar_lea.hbm %s3, %s207
          %s209 = sshll.u32 [#allocation8], 4
          %s210 = int_to_ptr.vmem [resolvable:$true] %s209
          %215 = dma.hbm_to_vmem [thread:$0]  %s208, 2048, %s210, [#allocation9], 128, 128, 8
        $region24: #{gpt2_forward.13} parent=11 // pred_fallthru
          _
      $region12: #{gpt2_forward.13} parent=5 // pred_fallthru
        _
      %p216 = scmp.lt.s32.totalorder %s18, 2
      // Predicated region
      $region25: #{gpt2_forward.13} parent=5 // pred_check
        %p217 = pneg %p216
      $region26: #{gpt2_forward.13} parent=5 // pred_check_branch
        %219 = sbr.rel (%p217) target = $region28
      $region27: #{gpt2_forward.13} parent=5 // pred_region
        // Predicated region
        $region29: #{gpt2_forward.13} parent=27 // pred_check
          %p220 = pneg %p59
        $region30: #{gpt2_forward.13} parent=27 // pred_check_branch
          %222 = sbr.rel (%p220) target = $region32
        $region31: #{gpt2_forward.13} parent=27 // pred_region
          %s223 = sand.u32 %s49, 1
          %s224 = scalar_lea.sflag [#allocation3], %s223
          %s225 = sand.u32 %s49, 1
          %s226 = smul.addr %s225, 16
          %s227 = scalar_lea.vmem [#allocation2], %s226
          %s228 = smul.u32 2, %s27
          %s230 = ssub.s32 256, 256
          %231 = vsyncadd %s224, %s230
          %s232 = smul.addr %s26, 2
          %s233 = sadd.s32 %s228, %s232
          %s234 = smul.addr %s233, 128
          %s235 = scalar_lea.hbm %s0, %s234
          %s236 = sshll.u32 %s227, 4
          %s237 = int_to_ptr.vmem [resolvable:$true] %s236
          %242 = dma.hbm_to_vmem [thread:$0]  %s235, 256, %s237, %s224, 128, 128, 8
        $region32: #{gpt2_forward.13} parent=27 // pred_fallthru
          _
      $region28: #{gpt2_forward.13} parent=5 // pred_fallthru
        _
      %p243 = scmp.le.s32.totalorder 1, %s18
      %p244 = scmp.lt.s32.totalorder %s18, 3
      %p245 = pnand %p243, %p244
      %p246 = pneg %p245
      // Predicated region
      $region33: #{gpt2_forward.13} parent=5 // pred_check
        _
      $region34: #{gpt2_forward.13} parent=5 // pred_check_branch
        %248 = sbr.rel (%p245) target = $region36
      $region35: #{gpt2_forward.13} parent=5 // pred_region
        %s249 = ssub.s32 %s18, 1
        %s250 = sand.u32 %s52, 1
        %s251 = scalar_lea.sflag [#allocation3], %s250
        %s252 = sand.u32 %s52, 1
        %s253 = smul.addr %s252, 16
        %s254 = scalar_lea.vmem [#allocation2], %s253
        // Predicated region
        $region37: #{gpt2_forward.13} parent=35 // pred_check
          %p255 = pneg %p65
        $region38: #{gpt2_forward.13} parent=35 // pred_check_branch
          %257 = sbr.rel (%p255) target = $region40
        $region39: #{gpt2_forward.13} parent=35 // pred_region
          %258 = dma.done %s251, 256
        $region40: #{gpt2_forward.13} parent=35 // pred_fallthru
          _
        // Predicated region
        $region41: #{gpt2_forward.13} parent=35 // pred_check
          %p259 = pneg %p86
        $region42: #{gpt2_forward.13} parent=35 // pred_check_branch
          %261 = sbr.rel (%p259) target = $region44
        $region43: #{gpt2_forward.13} parent=35 // pred_region
          %262 = dma.done [#allocation6], 16
        $region44: #{gpt2_forward.13} parent=35 // pred_fallthru
          _
        // Predicated region
        $region45: #{gpt2_forward.13} parent=35 // pred_check
          %p263 = pneg %p107
        $region46: #{gpt2_forward.13} parent=35 // pred_check_branch
          %265 = sbr.rel (%p263) target = $region48
        $region47: #{gpt2_forward.13} parent=35 // pred_region
          %266 = dma.done [#allocation6], 16
        $region48: #{gpt2_forward.13} parent=35 // pred_fallthru
          _
        // Predicated region
        $region49: #{gpt2_forward.13} parent=35 // pred_check
          %p267 = pneg %p133
        $region50: #{gpt2_forward.13} parent=35 // pred_check_branch
          %269 = sbr.rel (%p267) target = $region52
        $region51: #{gpt2_forward.13} parent=35 // pred_region
          %270 = dma.done [#allocation9], 2048
        $region52: #{gpt2_forward.13} parent=35 // pred_fallthru
          _
        %s271 = sand.u32 %s52, 1
        %s272 = scalar_lea.sflag [#allocation3], %s271
        %s273 = sand.u32 %s52, 1
        %s274 = smul.addr %s273, 16
        %s275 = scalar_lea.vmem [#allocation2], %s274
        %p276 = pneg %p65
        %p277 = pneg %p62
        %p278 = pneg %p86
        %p279 = pneg %p83
        %p280 = pneg %p107
        %p281 = pneg %p104
        %p282 = pneg %p133
        %p283 = pneg %p130
        %p284 = pneg %p163
        %p285 = pneg %p160
        %s286 = sand.u32 %s150, 1
        %s287 = scalar_lea.sflag [#allocation4], %s286
        %s288 = sand.u32 %s150, 1
        %s289 = smul.addr %s288, 16
        %s290 = scalar_lea.vmem [#allocation10], %s289
        %s291 = smul.u32 2, %s30
        %s292 = smul.u32 16, %s28
        %s293 = smul.u32 2, %s30
        %v294 = vld [vmem:[%s254] sm:$0xff]
        %v295 = vld [vmem:[%s254 + $0x8] sm:$0xff]
        %v296 = vld [vmem:[#allocation5] sm:$0x1]
        %v297 = vld [vmem:[#allocation7] sm:$0x1]
        %vm298 = vcmask 261120
        %v299 = vsel %vm298, %v294, 0.0
        %300 = vadd.xlane.f32.xlu0 %v299
        %v301 = vpop.xlane.xlu0 %300
        %v302 = vsel %vm298, %v295, 0.0
        %303 = vadd.xlane.f32.xlu0 %v302
        %v304 = vpop.xlane.xlu0 %303
        %v305 = vrcp.pop 32.0
        %v306 = vmul.f32 %v301, %v305
        %v307 = vmul.f32 %v304, %v305
        %v308 = vsub.f32 %v294, %v306
        %v309 = vsub.f32 %v295, %v307
        %v310 = vmul.f32 %v308, %v308
        %v311 = vmul.f32 %v309, %v309
        %v312 = vsel %vm298, %v310, 0.0
        %313 = vadd.xlane.f32.xlu0 %v312
        %v314 = vpop.xlane.xlu0 %313
        %v315 = vsel %vm298, %v311, 0.0
        %316 = vadd.xlane.f32.xlu0 %v315
        %v317 = vpop.xlane.xlu0 %316
        %v318 = vmul.f32 %v314, %v305
        %v319 = vmul.f32 %v317, %v305
        %v320 = vadd.f32 %v318, 1e-05
        %v321 = vadd.f32 %v319, 1e-05
        %v322 = vrsqrt.pop %v320
        %v323 = vrsqrt.pop %v321
        %v324 = vmul.f32 %v308, %v322
        %v325 = vmul.f32 %v309, %v323
        %v327 = vlaneseq
        %v328 = vshrl.u32 %v327, 7
        %v329 = vsub.s32 0, %v328
        %v330 = vrot.slane %v296, %v329
        %v332 = vmul.f32 %v324, %v330
        %v333 = vmul.f32 %v325, %v330
        %v335 = vlaneseq
        %v336 = vshrl.u32 %v335, 7
        %v337 = vsub.s32 0, %v336
        %v338 = vrot.slane %v297, %v337
        %v340 = vadd.f32 %v332, %v338
        %v341 = vadd.f32 %v333, %v338
        %v342 = vld [vmem:[#allocation8] sm:$0xff]
        %v343 = vld [vmem:[#allocation8 + $0x8] sm:$0xff]
        %v344 = vld [vmem:[#allocation8 + $0x10] sm:$0xff]
        %v345 = vld [vmem:[#allocation8 + $0x18] sm:$0xff]
        %v346 = vld [vmem:[#allocation8 + $0x20] sm:$0xff]
        %v347 = vld [vmem:[#allocation8 + $0x28] sm:$0xff]
        %v348 = vld [vmem:[#allocation8 + $0x30] sm:$0xff]
        %v349 = vld [vmem:[#allocation8 + $0x38] sm:$0xff]
        %v350 = vld [vmem:[#allocation8 + $0x40] sm:$0xff]
        %v351 = vld [vmem:[#allocation8 + $0x48] sm:$0xff]
        %v352 = vld [vmem:[#allocation8 + $0x50] sm:$0xff]
        %v353 = vld [vmem:[#allocation8 + $0x58] sm:$0xff]
        %v354 = vld [vmem:[#allocation8 + $0x60] sm:$0xff]
        %v355 = vld [vmem:[#allocation8 + $0x68] sm:$0xff]
        %v356 = vld [vmem:[#allocation8 + $0x70] sm:$0xff]
        %v357 = vld [vmem:[#allocation8 + $0x78] sm:$0xff]
        %v359 = vsel %vm298, %v340, 0
        %v362 = vsel %vm298, %v341, 0
        %v365 = vsel %vm298, %v342, 0
        %v368 = vsel %vm298, %v343, 0
        %v371 = vsel %vm298, %v344, 0
        %v374 = vsel %vm298, %v345, 0
        %v377 = vsel %vm298, %v346, 0
        %v380 = vsel %vm298, %v347, 0
        %v383 = vsel %vm298, %v348, 0
        %v386 = vsel %vm298, %v349, 0
        %v389 = vsel %vm298, %v350, 0
        %v392 = vsel %vm298, %v351, 0
        %v395 = vsel %vm298, %v352, 0
        %v398 = vsel %vm298, %v353, 0
        %v401 = vsel %vm298, %v354, 0
        %v404 = vsel %vm298, %v355, 0
        %v407 = vsel %vm298, %v356, 0
        %v410 = vsel %vm298, %v357, 0
        %412 = vmatprep.subr.mxu0 0.0
        %413 = vmatpush1.xpose.msra.mxu0 %v365
        %414 = vmatprep.subr.mxu0 0.0
        %415 = vmatpush1.xpose.msra.mxu0 %v368
        %416 = vmatprep.subr.mxu0 0.0
        %417 = vmatpush1.xpose.msra.mxu0 %v371
        %418 = vmatprep.subr.mxu0 0.0
        %419 = vmatpush1.xpose.msra.mxu0 %v374
        %420 = vmatprep.subr.mxu0 0.0
        %421 = vmatpush1.xpose.msra.mxu0 %v377
        %422 = vmatprep.subr.mxu0 0.0
        %423 = vmatpush1.xpose.msra.mxu0 %v380
        %424 = vmatprep.subr.mxu0 0.0
        %425 = vmatpush1.xpose.msra.mxu0 %v383
        %426 = vmatprep.subr.mxu0 0.0
        %427 = vmatpush1.xpose.msra.mxu0 %v386
        %428 = vmatprep.subr.mxu0 0.0
        %429 = vmatpush1.xpose.msra.mxu0 %v389
        %430 = vmatprep.subr.mxu0 0.0
        %431 = vmatpush1.xpose.msra.mxu0 %v392
        %432 = vmatprep.subr.mxu0 0.0
        %433 = vmatpush1.xpose.msra.mxu0 %v395
        %434 = vmatprep.subr.mxu0 0.0
        %435 = vmatpush1.xpose.msra.mxu0 %v398
        %436 = vmatprep.subr.mxu0 0.0
        %437 = vmatpush1.xpose.msra.mxu0 %v401
        %438 = vmatprep.subr.mxu0 0.0
        %439 = vmatpush1.xpose.msra.mxu0 %v404
        %440 = vmatprep.subr.mxu0 0.0
        %441 = vmatpush1.xpose.msra.mxu0 %v407
        %442 = vmatprep.subr.mxu0 0.0
        %443 = vmatpush1.xpose.msra.mxu0 %v410
        %444 = vmatprep.subr.mxu0 0.0
        %445 = vmatpush1.xpose.msra.mxu0 0.0
        %446 = vmatprep.subr.mxu0 0.0
        %447 = vmatpush1.xpose.msra.mxu0 0.0
        %448 = vmatprep.subr.mxu0 0.0
        %449 = vmatpush1.xpose.msra.mxu0 0.0
        %450 = vmatprep.subr.mxu0 0.0
        %451 = vmatpush1.xpose.msra.mxu0 0.0
        %452 = vmatprep.subr.mxu0 0.0
        %453 = vmatpush1.xpose.msra.mxu0 0.0
        %454 = vmatprep.subr.mxu0 0.0
        %455 = vmatpush1.xpose.msra.mxu0 0.0
        %456 = vmatprep.subr.mxu0 0.0
        %457 = vmatpush1.xpose.msra.mxu0 0.0
        %458 = vmatprep.subr.mxu0 0.0
        %459 = vmatpush1.xpose.msra.mxu0 0.0
        %460 = vmatprep.subr.mxu0 0.0
        %461 = vmatpush1.xpose.msra.mxu0 0.0
        %462 = vmatprep.subr.mxu0 0.0
        %463 = vmatpush1.xpose.msra.mxu0 0.0
        %464 = vmatprep.subr.mxu0 0.0
        %465 = vmatpush1.xpose.msra.mxu0 0.0
        %466 = vmatprep.subr.mxu0 0.0
        %467 = vmatpush1.xpose.msra.mxu0 0.0
        %468 = vmatprep.subr.mxu0 0.0
        %469 = vmatpush1.xpose.msra.mxu0 0.0
        %470 = vmatprep.subr.mxu0 0.0
        %471 = vmatpush1.xpose.msra.mxu0 0.0
        %472 = vmatprep.subr.mxu0 0.0
        %473 = vmatpush1.xpose.msra.mxu0 0.0
        %474 = vmatprep.subr.mxu0 0.0
        %475 = vmatpush1.xpose.msra.mxu0 0.0
        %476 = vmatprep.mubr.f32.mxu0 0.0
        %477 = vmatmul.mubr.f32.gmra.mrb[0].mxu0 %v359
        %v478 = vpop.f32.mrb[0].mxu0
        %v479 = vadd.f32 0.0, %v478
        %v480 = vpop.f32.mrb[0].mxu0
        %481 = vmatprep.mubr.f32.mxu0 0.0
        %482 = vmatmul.mubr.f32.gmra.mrb[0].mxu0 %v362
        %v483 = vpop.f32.mrb[0].mxu0
        %v484 = vadd.f32 0.0, %v483
        %v485 = vpop.f32.mrb[0].mxu0
        %486 = vdwg.mxu0
        %487 = vst [vmem:[%s290] sm:$0xff] %v479
        %488 = vst [vmem:[%s290 + $0x8] sm:$0xff] %v484
        %s489 = sand.u32 %s150, 1
        %s490 = scalar_lea.sflag [#allocation4], %s489
        %s491 = sand.u32 %s150, 1
        %s492 = smul.addr %s491, 16
        %s493 = scalar_lea.vmem [#allocation10], %s492
        // Predicated region
        $region53: #{gpt2_forward.13} parent=35 // pred_check
          %p494 = pneg %p160
        $region54: #{gpt2_forward.13} parent=35 // pred_check_branch
          %496 = sbr.rel (%p494) target = $region56
        $region55: #{gpt2_forward.13} parent=35 // pred_region
          %s497 = smul.u32 2, %s30
          %s499 = ssub.s32 256, 256
          %500 = vsyncadd %s490, %s499
          %s501 = sadd.s32 %s28, %s497
          %s502 = smul.addr %s29, 2
          %s503 = sadd.s32 %s501, %s502
          %s504 = smul.addr %s503, 128
          %s505 = scalar_lea.hbm %s4, %s504
          %s506 = sshll.u32 %s493, 4
          %s507 = int_to_ptr.vmem [resolvable:$true] %s506
          %512 = dma.vmem_to_hbm [thread:$0]  %s507, 256, %s505, %s490, 128, 128, 8
        $region56: #{gpt2_forward.13} parent=35 // pred_fallthru
          _
      $region36: #{gpt2_forward.13} parent=5 // pred_fallthru
        _
      %p513 = scmp.le.s32.totalorder 2, %s18
      // Predicated region
      $region57: #{gpt2_forward.13} parent=5 // pred_check
        %p514 = pneg %p513
      $region58: #{gpt2_forward.13} parent=5 // pred_check_branch
        %516 = sbr.rel (%p514) target = $region60
      $region59: #{gpt2_forward.13} parent=5 // pred_region
        %s517 = ssub.s32 %s18, 2
        // Predicated region
        $region61: #{gpt2_forward.13} parent=59 // pred_check
          %p518 = pneg %p166
        $region62: #{gpt2_forward.13} parent=59 // pred_check_branch
          %520 = sbr.rel (%p518) target = $region64
        $region63: #{gpt2_forward.13} parent=59 // pred_region
          %s521 = sand.u32 %s151, 1
          %s522 = scalar_lea.sflag [#allocation4], %s521
          %s523 = sand.u32 %s151, 1
          %s524 = smul.addr %s523, 16
          %s525 = scalar_lea.vmem [#allocation10], %s524
          %526 = dma.done %s522, 256
        $region64: #{gpt2_forward.13} parent=59 // pred_fallthru
          _
      $region60: #{gpt2_forward.13} parent=5 // pred_fallthru
        _
    $region6: #{gpt2_forward.13} parent=1 // loop_footer
      %s22 = sadd.s32 1, %s18
    $region7: #{gpt2_forward.13} parent=1 // loop_footer_branch
      %17 = sbr.rel target = $region3
    $region8: #{gpt2_forward.13} parent=1 // loop_exit
      _
    %527 = vsyncpa [#allocation3], 1
    %s528 = scalar_lea.sflag [#allocation3], 1
    %529 = vsyncpa %s528, 1
    %530 = vsyncpa [#allocation6], 1
    %531 = vsyncpa [#allocation9], 1
    %532 = vsyncpa [#allocation4], 1
    %s533 = scalar_lea.sflag [#allocation4], 1
    %534 = vsyncpa %s533, 1

// kernel: gpt2_forward.7
$region0: #{gpt2_forward.7}
  #allocation0 [shape = 'u32[]', space=smem, size = 0x4, offset = 0x4, fixed_abs, tag = 'smem constant byte address 0x4 - core index']
  #allocation1 [shape = 'u32[144,128]{1,0:T(1,128)}', space=vmem, size = 0x12000, scoped, tag = 'internal scratch']
  %s0 = inlined_call_operand.hbm [shape: f32[2,16,32], index: 0, kind: input, shape index: {}]
  %s1 = inlined_call_operand.hbm [shape: f32[1,32], index: 1, kind: input, shape index: {}]
  %s2 = inlined_call_operand.hbm [shape: f32[1,32], index: 2, kind: input, shape index: {}]
  %s3 = inlined_call_operand.hbm [shape: f32[32,96], index: 3, kind: input, shape index: {}]
  %s4 = inlined_call_operand.hbm [shape: f32[1,96], index: 4, kind: input, shape index: {}]
  %s5 = inlined_call_operand.hbm [shape: f32[2,4,16,8], index: 5, kind: output, shape index: {0}]
  %s6 = inlined_call_operand.hbm [shape: f32[2,4,16,8], index: 6, kind: output, shape index: {1}]
  %s7 = inlined_call_operand.hbm [shape: f32[2,4,16,8], index: 7, kind: output, shape index: {2}]
  %8 = xla_tuple %s5, %s6, %s7
  %s9 = sld [smem:[#allocation0]]
  $region89: #{gpt2_forward.7} parent=0
    _
  %s11 = ssub.s32 1, %s9
  %s12 = scalar_select 0, %s11, %s9
  $region1: #{gpt2_forward.7} parent=0
    #allocation2 [shape = 'u8[16384]{0}', space=vmem, size = 0x4000, scoped, tag = 'input window, operand 0']
    #allocation3 [shape = 's32[2]{0}', space=sflag, size = 0x8, scoped, tag = 'scoped memory for gpt2_forward.7']
    #allocation4 [shape = 's32[2]{0}', space=sflag, size = 0x8, scoped, tag = 'scoped memory for gpt2_forward.7']
    #allocation5 [shape = 'u8[512]{0}', space=vmem, size = 0x400, scoped, tag = 'input window, operand 1, single buffered']
    #allocation6 [shape = 's32[1]{0}', space=sflag, size = 0x4, scoped, tag = 'scoped memory for gpt2_forward.7']
    #allocation7 [shape = 'u8[512]{0}', space=vmem, size = 0x400, scoped, tag = 'input window, operand 2, single buffered']
    #allocation8 [shape = 'u8[16384]{0}', space=vmem, size = 0x4000, scoped, tag = 'input window, operand 3, single buffered']
    #allocation9 [shape = 's32[1]{0}', space=sflag, size = 0x4, scoped, tag = 'scoped memory for gpt2_forward.7']
    #allocation10 [shape = 'u8[512]{0}', space=vmem, size = 0x400, scoped, tag = 'input window, operand 4, single buffered']
    #allocation11 [shape = 'u8[65536]{0}', space=vmem, size = 0x10000, scoped, tag = 'output window, operand 0']
    #allocation12 [shape = 'u8[65536]{0}', space=vmem, size = 0x10000, scoped, tag = 'output window, operand 1']
    #allocation13 [shape = 's32[2]{0}', space=sflag, size = 0x8, scoped, tag = 'scoped memory for gpt2_forward.7']
    #allocation14 [shape = 'u8[65536]{0}', space=vmem, size = 0x10000, scoped, tag = 'output window, operand 2']
    %13 = vsyncpa [#allocation3], 0
    %s14 = scalar_lea.sflag [#allocation3], 1
    %15 = vsyncpa %s14, 0
    %16 = vsyncpa [#allocation6], 0
    %17 = vsyncpa [#allocation9], 0
    %18 = vsyncpa [#allocation4], 0
    %s19 = scalar_lea.sflag [#allocation4], 1
    %20 = vsyncpa %s19, 0
    %21 = vsyncpa [#allocation13], 0
    %s22 = scalar_lea.sflag [#allocation13], 1
    %23 = vsyncpa %s22, 0
    loop: start=0, step=1, limit=4
    $region2: #{gpt2_forward.7} parent=1 // loop_pre_header
      _
    $region3: #{gpt2_forward.7} parent=1 // loop_header
      %s25 = sphi 0, %s29
      %p26 = scmp.ge.s32.totalorder %s25, 4
      %s32 = sphi 0, %s44
      %s33 = sphi 0, %s40
      %s34 = sphi 0, %s32
      %s35 = sphi 0, %s33
      %s36 = sphi 0, %s34
      %s37 = sphi 0, %s35
      %s49 = sphi 0, %s51
      %s52 = sphi 0, %s49
      %s53 = sphi 0, %s52
      %s69 = sphi 0, %s53
      %s73 = sphi 0, %s73
      %s75 = sphi 0, %s73
      %s76 = sphi 0, %s75
      %s90 = sphi 0, %s76
      %s94 = sphi 0, %s94
      %s96 = sphi 0, %s94
      %s97 = sphi 0, %s96
      %s111 = sphi 0, %s97
      %s115 = sphi 0, %s115
      %s117 = sphi 0, %s115
      %s118 = sphi 0, %s117
      %s132 = sphi 0, %s118
      %s136 = sphi 0, %s136
      %s138 = sphi 0, %s136
      %s139 = sphi 0, %s138
      %s153 = sphi 0, %s139
      %s161 = sphi 0, %s163
      %s164 = sphi 0, %s161
      %s165 = sphi 0, %s164
      %s181 = sphi 0, %s165
      %s189 = sphi 0, %s191
      %s192 = sphi 0, %s189
      %s193 = sphi 0, %s192
      %s209 = sphi 0, %s193
      %s217 = sphi 0, %s219
      %s220 = sphi 0, %s217
      %s221 = sphi 0, %s220
      %s237 = sphi 0, %s221
    $region4: #{gpt2_forward.7} parent=1 // loop_header_branch
      %28 = sbr.rel (%p26) target = $region8
    $region5: #{gpt2_forward.7} parent=1 // loop_body
      %s30 = ssub.s32 %s25, 1
      %s31 = ssub.s32 %s25, 2
      %s38 = sadd.s32 1, %s33
      %p39 = scmp.ge.s32.totalorder %s38, 1
      %s40 = scalar_select %p39, 0, %s38
      %s41 = sadd.s32 1, %s32
      %s42 = scalar_select %p39, %s41, %s32
      %p43 = scmp.ge.s32.totalorder %s42, 2
      %s44 = scalar_select %p43, 0, %s42
      %s45 = ssub.s32 %s32, %s44
      %s46 = ssub.s32 %s33, %s40
      %s47 = sor.u32 %s45, %s46
      %p48 = scmp.eq.s32.totalorder %s47, 0
      %s50 = sadd.s32 %s49, 1
      %s51 = scalar_select %p48, %s49, %s50
      %p54 = pneg %p48
      %p55 = scmp.eq.s32.totalorder %s25, 1
      %p56 = por %p54, %p55
      %p57 = scmp.ne.s32.totalorder %s49, %s52
      %p58 = scmp.eq.s32.totalorder %s25, 0
      %p59 = por %p57, %p58
      %p60 = scmp.ne.s32.totalorder %s49, %s52
      %p61 = scmp.eq.s32.totalorder %s30, 1
      %p62 = por %p60, %p61
      %p63 = scmp.ne.s32.totalorder %s52, %s53
      %p64 = scmp.eq.s32.totalorder %s30, 0
      %p65 = por %p63, %p64
      %p66 = scmp.ne.s32.totalorder %s52, %s53
      %p67 = scmp.eq.s32.totalorder %s31, 1
      %p68 = por %p66, %p67
      %p70 = scmp.ne.s32.totalorder %s53, %s69
      %p71 = scmp.eq.s32.totalorder %s31, 0
      %p72 = por %p70, %p71
      %s74 = sadd.s32 %s73, 1
      %p77 = scmp.eq.s32.totalorder %s25, 1
      %p78 = scmp.ne.s32.totalorder %s73, %s75
      %p79 = scmp.eq.s32.totalorder %s25, 0
      %p80 = por %p78, %p79
      %p81 = scmp.ne.s32.totalorder %s73, %s75
      %p82 = scmp.eq.s32.totalorder %s30, 1
      %p83 = por %p81, %p82
      %p84 = scmp.ne.s32.totalorder %s75, %s76
      %p85 = scmp.eq.s32.totalorder %s30, 0
      %p86 = por %p84, %p85
      %p87 = scmp.ne.s32.totalorder %s75, %s76
      %p88 = scmp.eq.s32.totalorder %s31, 1
      %p89 = por %p87, %p88
      %p91 = scmp.ne.s32.totalorder %s76, %s90
      %p92 = scmp.eq.s32.totalorder %s31, 0
      %p93 = por %p91, %p92
      %s95 = sadd.s32 %s94, 1
      %p98 = scmp.eq.s32.totalorder %s25, 1
      %p99 = scmp.ne.s32.totalorder %s94, %s96
      %p100 = scmp.eq.s32.totalorder %s25, 0
      %p101 = por %p99, %p100
      %p102 = scmp.ne.s32.totalorder %s94, %s96
      %p103 = scmp.eq.s32.totalorder %s30, 1
      %p104 = por %p102, %p103
      %p105 = scmp.ne.s32.totalorder %s96, %s97
      %p106 = scmp.eq.s32.totalorder %s30, 0
      %p107 = por %p105, %p106
      %p108 = scmp.ne.s32.totalorder %s96, %s97
      %p109 = scmp.eq.s32.totalorder %s31, 1
      %p110 = por %p108, %p109
      %p112 = scmp.ne.s32.totalorder %s97, %s111
      %p113 = scmp.eq.s32.totalorder %s31, 0
      %p114 = por %p112, %p113
      %s116 = sadd.s32 %s115, 1
      %p119 = scmp.eq.s32.totalorder %s25, 1
      %p120 = scmp.ne.s32.totalorder %s115, %s117
      %p121 = scmp.eq.s32.totalorder %s25, 0
      %p122 = por %p120, %p121
      %p123 = scmp.ne.s32.totalorder %s115, %s117
      %p124 = scmp.eq.s32.totalorder %s30, 1
      %p125 = por %p123, %p124
      %p126 = scmp.ne.s32.totalorder %s117, %s118
      %p127 = scmp.eq.s32.totalorder %s30, 0
      %p128 = por %p126, %p127
      %p129 = scmp.ne.s32.totalorder %s117, %s118
      %p130 = scmp.eq.s32.totalorder %s31, 1
      %p131 = por %p129, %p130
      %p133 = scmp.ne.s32.totalorder %s118, %s132
      %p134 = scmp.eq.s32.totalorder %s31, 0
      %p135 = por %p133, %p134
      %s137 = sadd.s32 %s136, 1
      %p140 = scmp.eq.s32.totalorder %s25, 1
      %p141 = scmp.ne.s32.totalorder %s136, %s138
      %p142 = scmp.eq.s32.totalorder %s25, 0
      %p143 = por %p141, %p142
      %p144 = scmp.ne.s32.totalorder %s136, %s138
      %p145 = scmp.eq.s32.totalorder %s30, 1
      %p146 = por %p144, %p145
      %p147 = scmp.ne.s32.totalorder %s138, %s139
      %p148 = scmp.eq.s32.totalorder %s30, 0
      %p149 = por %p147, %p148
      %p150 = scmp.ne.s32.totalorder %s138, %s139
      %p151 = scmp.eq.s32.totalorder %s31, 1
      %p152 = por %p150, %p151
      %p154 = scmp.ne.s32.totalorder %s139, %s153
      %p155 = scmp.eq.s32.totalorder %s31, 0
      %p156 = por %p154, %p155
      %s157 = ssub.s32 %s32, %s44
      %s158 = ssub.s32 %s33, %s40
      %s159 = sor.u32 %s157, %s158
      %p160 = scmp.eq.s32.totalorder %s159, 0
      %s162 = sadd.s32 %s161, 1
      %s163 = scalar_select %p160, %s161, %s162
      %p166 = pneg %p160
      %p167 = scmp.eq.s32.totalorder %s25, 1
      %p168 = por %p166, %p167
      %p169 = scmp.ne.s32.totalorder %s161, %s164
      %p170 = scmp.eq.s32.totalorder %s25, 0
      %p171 = por %p169, %p170
      %p172 = scmp.ne.s32.totalorder %s161, %s164
      %p173 = scmp.eq.s32.totalorder %s30, 1
      %p174 = por %p172, %p173
      %p175 = scmp.ne.s32.totalorder %s164, %s165
      %p176 = scmp.eq.s32.totalorder %s30, 0
      %p177 = por %p175, %p176
      %p178 = scmp.ne.s32.totalorder %s164, %s165
      %p179 = scmp.eq.s32.totalorder %s31, 1
      %p180 = por %p178, %p179
      %p182 = scmp.ne.s32.totalorder %s165, %s181
      %p183 = scmp.eq.s32.totalorder %s31, 0
      %p184 = por %p182, %p183
      %s185 = ssub.s32 %s32, %s44
      %s186 = ssub.s32 %s33, %s40
      %s187 = sor.u32 %s185, %s186
      %p188 = scmp.eq.s32.totalorder %s187, 0
      %s190 = sadd.s32 %s189, 1
      %s191 = scalar_select %p188, %s189, %s190
      %p194 = pneg %p188
      %p195 = scmp.eq.s32.totalorder %s25, 1
      %p196 = por %p194, %p195
      %p197 = scmp.ne.s32.totalorder %s189, %s192
      %p198 = scmp.eq.s32.totalorder %s25, 0
      %p199 = por %p197, %p198
      %p200 = scmp.ne.s32.totalorder %s189, %s192
      %p201 = scmp.eq.s32.totalorder %s30, 1
      %p202 = por %p200, %p201
      %p203 = scmp.ne.s32.totalorder %s192, %s193
      %p204 = scmp.eq.s32.totalorder %s30, 0
      %p205 = por %p203, %p204
      %p206 = scmp.ne.s32.totalorder %s192, %s193
      %p207 = scmp.eq.s32.totalorder %s31, 1
      %p208 = por %p206, %p207
      %p210 = scmp.ne.s32.totalorder %s193, %s209
      %p211 = scmp.eq.s32.totalorder %s31, 0
      %p212 = por %p210, %p211
      %s213 = ssub.s32 %s32, %s44
      %s214 = ssub.s32 %s33, %s40
      %s215 = sor.u32 %s213, %s214
      %p216 = scmp.eq.s32.totalorder %s215, 0
      %s218 = sadd.s32 %s217, 1
      %s219 = scalar_select %p216, %s217, %s218
      %p222 = pneg %p216
      %p223 = scmp.eq.s32.totalorder %s25, 1
      %p224 = por %p222, %p223
      %p225 = scmp.ne.s32.totalorder %s217, %s220
      %p226 = scmp.eq.s32.totalorder %s25, 0
      %p227 = por %p225, %p226
      %p228 = scmp.ne.s32.totalorder %s217, %s220
      %p229 = scmp.eq.s32.totalorder %s30, 1
      %p230 = por %p228, %p229
      %p231 = scmp.ne.s32.totalorder %s220, %s221
      %p232 = scmp.eq.s32.totalorder %s30, 0
      %p233 = por %p231, %p232
      %p234 = scmp.ne.s32.totalorder %s220, %s221
      %p235 = scmp.eq.s32.totalorder %s31, 1
      %p236 = por %p234, %p235
      %p238 = scmp.ne.s32.totalorder %s221, %s237
      %p239 = scmp.eq.s32.totalorder %s31, 0
      %p240 = por %p238, %p239
      %p241 = scmp.le.s32.totalorder 1, %s25
      %p242 = scmp.lt.s32.totalorder %s25, 3
      %p243 = pnand %p241, %p242
      %p244 = pneg %p243
      // Predicated region
      $region9: #{gpt2_forward.7} parent=5 // pred_check
        _
      $region10: #{gpt2_forward.7} parent=5 // pred_check_branch
        %246 = sbr.rel (%p243) target = $region12
      $region11: #{gpt2_forward.7} parent=5 // pred_region
        %s247 = ssub.s32 %s25, 1
        // Predicated region
        $region13: #{gpt2_forward.7} parent=11 // pred_check
          %p248 = pneg %p86
        $region14: #{gpt2_forward.7} parent=11 // pred_check_branch
          %250 = sbr.rel (%p248) target = $region16
        $region15: #{gpt2_forward.7} parent=11 // pred_region
          %s252 = ssub.s32 16, 16
          %253 = vsyncadd [#allocation6], %s252
          %s255 = sshll.u32 [#allocation5], 4
          %s256 = int_to_ptr.vmem [resolvable:$true] %s255
          %258 = dma.hbm_to_vmem [thread:$0]  %s1, 16, %s256, [#allocation6]
        $region16: #{gpt2_forward.7} parent=11 // pred_fallthru
          _
        // Predicated region
        $region17: #{gpt2_forward.7} parent=11 // pred_check
          %p259 = pneg %p107
        $region18: #{gpt2_forward.7} parent=11 // pred_check_branch
          %261 = sbr.rel (%p259) target = $region20
        $region19: #{gpt2_forward.7} parent=11 // pred_region
          %s263 = ssub.s32 16, 16
          %264 = vsyncadd [#allocation6], %s263
          %s266 = sshll.u32 [#allocation7], 4
          %s267 = int_to_ptr.vmem [resolvable:$true] %s266
          %269 = dma.hbm_to_vmem [thread:$0]  %s2, 16, %s267, [#allocation6]
        $region20: #{gpt2_forward.7} parent=11 // pred_fallthru
          _
        // Predicated region
        $region21: #{gpt2_forward.7} parent=11 // pred_check
          %p270 = pneg %p128
        $region22: #{gpt2_forward.7} parent=11 // pred_check_branch
          %272 = sbr.rel (%p270) target = $region24
        $region23: #{gpt2_forward.7} parent=11 // pred_region
          %s274 = ssub.s32 512, 512
          %275 = vsyncadd [#allocation9], %s274
          %s276 = sshll.u32 [#allocation8], 4
          %s277 = int_to_ptr.vmem [resolvable:$true] %s276
          %282 = dma.hbm_to_vmem [thread:$0]  %s3, 512, %s277, [#allocation9], 128, 128, 8
        $region24: #{gpt2_forward.7} parent=11 // pred_fallthru
          _
        // Predicated region
        $region25: #{gpt2_forward.7} parent=11 // pred_check
          %p283 = pneg %p149
        $region26: #{gpt2_forward.7} parent=11 // pred_check_branch
          %285 = sbr.rel (%p283) target = $region28
        $region27: #{gpt2_forward.7} parent=11 // pred_region
          %s287 = ssub.s32 16, 16
          %288 = vsyncadd [#allocation9], %s287
          %s290 = sshll.u32 [#allocation10], 4
          %s291 = int_to_ptr.vmem [resolvable:$true] %s290
          %293 = dma.hbm_to_vmem [thread:$0]  %s4, 16, %s291, [#allocation9]
        $region28: #{gpt2_forward.7} parent=11 // pred_fallthru
          _
      $region12: #{gpt2_forward.7} parent=5 // pred_fallthru
        _
      %p294 = scmp.lt.s32.totalorder %s25, 2
      // Predicated region
      $region29: #{gpt2_forward.7} parent=5 // pred_check
        %p295 = pneg %p294
      $region30: #{gpt2_forward.7} parent=5 // pred_check_branch
        %297 = sbr.rel (%p295) target = $region32
      $region31: #{gpt2_forward.7} parent=5 // pred_region
        // Predicated region
        $region33: #{gpt2_forward.7} parent=31 // pred_check
          %p298 = pneg %p59
        $region34: #{gpt2_forward.7} parent=31 // pred_check_branch
          %300 = sbr.rel (%p298) target = $region36
        $region35: #{gpt2_forward.7} parent=31 // pred_region
          %s301 = sand.u32 %s49, 1
          %s302 = scalar_lea.sflag [#allocation3], %s301
          %s303 = sand.u32 %s49, 1
          %s304 = smul.addr %s303, 16
          %s305 = scalar_lea.vmem [#allocation2], %s304
          %s306 = smul.u32 2, %s33
          %s308 = ssub.s32 256, 256
          %309 = vsyncadd %s302, %s308
          %s310 = smul.addr %s32, 2
          %s311 = sadd.s32 %s306, %s310
          %s312 = smul.addr %s311, 128
          %s313 = scalar_lea.hbm %s0, %s312
          %s314 = sshll.u32 %s305, 4
          %s315 = int_to_ptr.vmem [resolvable:$true] %s314
          %320 = dma.hbm_to_vmem [thread:$0]  %s313, 256, %s315, %s302, 128, 128, 8
        $region36: #{gpt2_forward.7} parent=31 // pred_fallthru
          _
      $region32: #{gpt2_forward.7} parent=5 // pred_fallthru
        _
      %p321 = scmp.le.s32.totalorder 1, %s25
      %p322 = scmp.lt.s32.totalorder %s25, 3
      %p323 = pnand %p321, %p322
      %p324 = pneg %p323
      // Predicated region
      $region37: #{gpt2_forward.7} parent=5 // pred_check
        _
      $region38: #{gpt2_forward.7} parent=5 // pred_check_branch
        %326 = sbr.rel (%p323) target = $region40
      $region39: #{gpt2_forward.7} parent=5 // pred_region
        %s327 = ssub.s32 %s25, 1
        %s328 = sand.u32 %s52, 1
        %s329 = scalar_lea.sflag [#allocation3], %s328
        %s330 = sand.u32 %s52, 1
        %s331 = smul.addr %s330, 16
        %s332 = scalar_lea.vmem [#allocation2], %s331
        // Predicated region
        $region41: #{gpt2_forward.7} parent=39 // pred_check
          %p333 = pneg %p65
        $region42: #{gpt2_forward.7} parent=39 // pred_check_branch
          %335 = sbr.rel (%p333) target = $region44
        $region43: #{gpt2_forward.7} parent=39 // pred_region
          %336 = dma.done %s329, 256
        $region44: #{gpt2_forward.7} parent=39 // pred_fallthru
          _
        // Predicated region
        $region45: #{gpt2_forward.7} parent=39 // pred_check
          %p337 = pneg %p86
        $region46: #{gpt2_forward.7} parent=39 // pred_check_branch
          %339 = sbr.rel (%p337) target = $region48
        $region47: #{gpt2_forward.7} parent=39 // pred_region
          %340 = dma.done [#allocation6], 16
        $region48: #{gpt2_forward.7} parent=39 // pred_fallthru
          _
        // Predicated region
        $region49: #{gpt2_forward.7} parent=39 // pred_check
          %p341 = pneg %p107
        $region50: #{gpt2_forward.7} parent=39 // pred_check_branch
          %343 = sbr.rel (%p341) target = $region52
        $region51: #{gpt2_forward.7} parent=39 // pred_region
          %344 = dma.done [#allocation6], 16
        $region52: #{gpt2_forward.7} parent=39 // pred_fallthru
          _
        // Predicated region
        $region53: #{gpt2_forward.7} parent=39 // pred_check
          %p345 = pneg %p128
        $region54: #{gpt2_forward.7} parent=39 // pred_check_branch
          %347 = sbr.rel (%p345) target = $region56
        $region55: #{gpt2_forward.7} parent=39 // pred_region
          %348 = dma.done [#allocation9], 512
        $region56: #{gpt2_forward.7} parent=39 // pred_fallthru
          _
        // Predicated region
        $region57: #{gpt2_forward.7} parent=39 // pred_check
          %p349 = pneg %p149
        $region58: #{gpt2_forward.7} parent=39 // pred_check_branch
          %351 = sbr.rel (%p349) target = $region60
        $region59: #{gpt2_forward.7} parent=39 // pred_region
          %352 = dma.done [#allocation9], 16
        $region60: #{gpt2_forward.7} parent=39 // pred_fallthru
          _
        %s353 = sand.u32 %s52, 1
        %s354 = scalar_lea.sflag [#allocation3], %s353
        %s355 = sand.u32 %s52, 1
        %s356 = smul.addr %s355, 16
        %s357 = scalar_lea.vmem [#allocation2], %s356
        %p358 = pneg %p65
        %p359 = pneg %p62
        %p360 = pneg %p86
        %p361 = pneg %p83
        %p362 = pneg %p107
        %p363 = pneg %p104
        %p364 = pneg %p128
        %p365 = pneg %p125
        %p366 = pneg %p149
        %p367 = pneg %p146
        %p368 = pneg %p177
        %p369 = pneg %p174
        %s370 = sand.u32 %s164, 1
        %s371 = scalar_lea.sflag [#allocation4], %s370
        %s372 = sand.u32 %s164, 1
        %s373 = smul.addr %s372, 64
        %s374 = scalar_lea.vmem [#allocation11], %s373
        %p375 = pneg %p205
        %p376 = pneg %p202
        %s377 = sand.u32 %s30, 1
        %s378 = scalar_lea.sflag [#allocation13], %s377
        %s379 = sand.u32 %s192, 1
        %s380 = smul.addr %s379, 64
        %s381 = scalar_lea.vmem [#allocation12], %s380
        %p382 = pneg %p233
        %p383 = pneg %p230
        %s384 = sand.u32 %s30, 1
        %s385 = scalar_lea.sflag [#allocation13], %s384
        %s386 = sand.u32 %s220, 1
        %s387 = smul.addr %s386, 64
        %s388 = scalar_lea.vmem [#allocation14], %s387
        %s389 = smul.u32 2, %s35
        %s390 = smul.u32 2, %s35
        %s391 = smul.u32 2, %s35
        %s392 = smul.u32 2, %s35
        %v393 = vld [vmem:[%s332] sm:$0xff]
        %v394 = vld [vmem:[%s332 + $0x8] sm:$0xff]
        %v395 = vld [vmem:[#allocation5] sm:$0x1]
        %v396 = vld [vmem:[#allocation7] sm:$0x1]
        %vm397 = vcmask 261120
        %v398 = vsel %vm397, %v393, 0.0
        %399 = vadd.xlane.f32.xlu0 %v398
        %v400 = vpop.xlane.xlu0 %399
        %v401 = vsel %vm397, %v394, 0.0
        %402 = vadd.xlane.f32.xlu0 %v401
        %v403 = vpop.xlane.xlu0 %402
        %v404 = vrcp.pop 32.0
        %v405 = vmul.f32 %v400, %v404
        %v406 = vmul.f32 %v403, %v404
        %v407 = vsub.f32 %v393, %v405
        %v408 = vsub.f32 %v394, %v406
        %v409 = vmul.f32 %v407, %v407
        %v410 = vmul.f32 %v408, %v408
        %v411 = vsel %vm397, %v409, 0.0
        %412 = vadd.xlane.f32.xlu0 %v411
        %v413 = vpop.xlane.xlu0 %412
        %v414 = vsel %vm397, %v410, 0.0
        %415 = vadd.xlane.f32.xlu0 %v414
        %v416 = vpop.xlane.xlu0 %415
        %v417 = vmul.f32 %v413, %v404
        %v418 = vmul.f32 %v416, %v404
        %v419 = vadd.f32 %v417, 1e-05
        %v420 = vadd.f32 %v418, 1e-05
        %v421 = vrsqrt.pop %v419
        %v422 = vrsqrt.pop %v420
        %v423 = vmul.f32 %v407, %v421
        %v424 = vmul.f32 %v408, %v422
        %v426 = vlaneseq
        %v427 = vshrl.u32 %v426, 7
        %v428 = vsub.s32 0, %v427
        %v429 = vrot.slane %v395, %v428
        %v431 = vmul.f32 %v423, %v429
        %v432 = vmul.f32 %v424, %v429
        %v434 = vlaneseq
        %v435 = vshrl.u32 %v434, 7
        %v436 = vsub.s32 0, %v435
        %v437 = vrot.slane %v396, %v436
        %v439 = vadd.f32 %v431, %v437
        %v440 = vadd.f32 %v432, %v437
        %v441 = vld [vmem:[#allocation8] sm:$0xff]
        %v442 = vld [vmem:[#allocation8 + $0x8] sm:$0xff]
        %v443 = vld [vmem:[#allocation8 + $0x10] sm:$0xff]
        %v444 = vld [vmem:[#allocation8 + $0x18] sm:$0xff]
        %v445 = vld [vmem:[#allocation10] sm:$0x1]
        %v447 = vlaneseq
        %v448 = vshrl.u32 %v447, 7
        %v449 = vsub.s32 0, %v448
        %v450 = vrot.slane %v445, %v449
        %v453 = vsel %vm397, %v439, 0
        %v456 = vsel %vm397, %v440, 0
        %458 = vmatprep.subr.mxu0 0.0
        %459 = vmatpush1.msra.mxu0 %v441
        %460 = vmatprep.subr.mxu0 0.0
        %461 = vmatpush1.msra.mxu0 %v442
        %462 = vmatprep.subr.mxu0 0.0
        %463 = vmatpush1.msra.mxu0 %v443
        %464 = vmatprep.subr.mxu0 0.0
        %465 = vmatpush1.msra.mxu0 %v444
        %466 = vmatprep.subr.mxu0 0.0
        %467 = vmatpush1.msra.mxu0 0.0
        %468 = vmatprep.subr.mxu0 0.0
        %469 = vmatpush1.msra.mxu0 0.0
        %470 = vmatprep.subr.mxu0 0.0
        %471 = vmatpush1.msra.mxu0 0.0
        %472 = vmatprep.subr.mxu0 0.0
        %473 = vmatpush1.msra.mxu0 0.0
        %474 = vmatprep.subr.mxu0 0.0
        %475 = vmatpush1.msra.mxu0 0.0
        %476 = vmatprep.subr.mxu0 0.0
        %477 = vmatpush1.msra.mxu0 0.0
        %478 = vmatprep.subr.mxu0 0.0
        %479 = vmatpush1.msra.mxu0 0.0
        %480 = vmatprep.subr.mxu0 0.0
        %481 = vmatpush1.msra.mxu0 0.0
        %482 = vmatprep.subr.mxu0 0.0
        %483 = vmatpush1.msra.mxu0 0.0
        %484 = vmatprep.subr.mxu0 0.0
        %485 = vmatpush1.msra.mxu0 0.0
        %486 = vmatprep.subr.mxu0 0.0
        %487 = vmatpush1.msra.mxu0 0.0
        %488 = vmatprep.subr.mxu0 0.0
        %489 = vmatpush1.msra.mxu0 0.0
        %490 = vmatprep.subr.mxu0 0.0
        %491 = vmatpush1.msra.mxu0 0.0
        %492 = vmatprep.subr.mxu0 0.0
        %493 = vmatpush1.msra.mxu0 0.0
        %494 = vmatprep.subr.mxu0 0.0
        %495 = vmatpush1.msra.mxu0 0.0
        %496 = vmatprep.subr.mxu0 0.0
        %497 = vmatpush1.msra.mxu0 0.0
        %498 = vmatprep.subr.mxu0 0.0
        %499 = vmatpush1.msra.mxu0 0.0
        %500 = vmatprep.subr.mxu0 0.0
        %501 = vmatpush1.msra.mxu0 0.0
        %502 = vmatprep.subr.mxu0 0.0
        %503 = vmatpush1.msra.mxu0 0.0
        %504 = vmatprep.subr.mxu0 0.0
        %505 = vmatpush1.msra.mxu0 0.0
        %506 = vmatprep.subr.mxu0 0.0
        %507 = vmatpush1.msra.mxu0 0.0
        %508 = vmatprep.subr.mxu0 0.0
        %509 = vmatpush1.msra.mxu0 0.0
        %510 = vmatprep.subr.mxu0 0.0
        %511 = vmatpush1.msra.mxu0 0.0
        %512 = vmatprep.subr.mxu0 0.0
        %513 = vmatpush1.msra.mxu0 0.0
        %514 = vmatprep.subr.mxu0 0.0
        %515 = vmatpush1.msra.mxu0 0.0
        %516 = vmatprep.subr.mxu0 0.0
        %517 = vmatpush1.msra.mxu0 0.0
        %518 = vmatprep.subr.mxu0 0.0
        %519 = vmatpush1.msra.mxu0 0.0
        %520 = vmatprep.subr.mxu0 0.0
        %521 = vmatpush1.msra.mxu0 0.0
        %522 = vmatprep.mubr.f32.mxu0 0.0
        %523 = vmatmul.mubr.f32.gmra.mrb[0].mxu0 %v453
        %v524 = vpop.f32.mrb[0].mxu0
        %v525 = vadd.f32 %v450, %v524
        %v526 = vpop.f32.mrb[0].mxu0
        %527 = vmatprep.mubr.f32.mxu0 0.0
        %528 = vmatmul.mubr.f32.gmra.mrb[0].mxu0 %v456
        %v529 = vpop.f32.mrb[0].mxu0
        %v530 = vadd.f32 %v450, %v529
        %v531 = vpop.f32.mrb[0].mxu0
        %532 = vdwg.mxu0
        %v533 = vmul.f32 %v525, 0.35355338
        %v534 = vmul.f32 %v530, 0.35355338
        %vm535 = vcmask 64512
        %536 = vst.msk [vmem:[%s374] sm:$0xff] %vm535, %v533
        %537 = vst.msk [vmem:[%s374 + $0x8] sm:$0xff] %vm535, %v534
        %540 = vrot.lane.b32.xlu0 %v525, 96
        %v541 = vpop.permute.xlu0 %540
        %542 = vrot.lane.b32.xlu0 %v530, 96
        %v543 = vpop.permute.xlu0 %542
        %546 = vst.msk [vmem:[%s381] sm:$0xff] %vm535, %v541
        %547 = vst.msk [vmem:[%s381 + $0x8] sm:$0xff] %vm535, %v543
        %548 = vrot.lane.b32.xlu0 %v525, 64
        %v549 = vpop.permute.xlu0 %548
        %550 = vrot.lane.b32.xlu0 %v530, 64
        %v551 = vpop.permute.xlu0 %550
        %554 = vst.msk [vmem:[%s388] sm:$0xff] %vm535, %v549
        %555 = vst.msk [vmem:[%s388 + $0x8] sm:$0xff] %vm535, %v551
        %558 = vrot.lane.b32.xlu0 %v533, 120
        %v559 = vpop.permute.xlu0 %558
        %560 = vrot.lane.b32.xlu0 %v534, 120
        %v561 = vpop.permute.xlu0 %560
        %s564 = scalar_lea.vmem %s374, 16 [#allocation11]
        %565 = vst.msk [vmem:[%s564] sm:$0xff] %vm535, %v559
        %566 = vst.msk [vmem:[%s564 + $0x8] sm:$0xff] %vm535, %v561
        %567 = vrot.lane.b32.xlu0 %v525, 88
        %v568 = vpop.permute.xlu0 %567
        %569 = vrot.lane.b32.xlu0 %v530, 88
        %v570 = vpop.permute.xlu0 %569
        %s573 = scalar_lea.vmem %s381, 16 [#allocation12]
        %574 = vst.msk [vmem:[%s573] sm:$0xff] %vm535, %v568
        %575 = vst.msk [vmem:[%s573 + $0x8] sm:$0xff] %vm535, %v570
        %576 = vrot.lane.b32.xlu0 %v525, 56
        %v577 = vpop.permute.xlu0 %576
        %578 = vrot.lane.b32.xlu0 %v530, 56
        %v579 = vpop.permute.xlu0 %578
        %s582 = scalar_lea.vmem %s388, 16 [#allocation14]
        %583 = vst.msk [vmem:[%s582] sm:$0xff] %vm535, %v577
        %584 = vst.msk [vmem:[%s582 + $0x8] sm:$0xff] %vm535, %v579
        %585 = vrot.lane.b32.xlu0 %v533, 112
        %v586 = vpop.permute.xlu0 %585
        %587 = vrot.lane.b32.xlu0 %v534, 112
        %v588 = vpop.permute.xlu0 %587
        %s591 = scalar_lea.vmem %s374, 32 [#allocation11]
        %592 = vst.msk [vmem:[%s591] sm:$0xff] %vm535, %v586
        %593 = vst.msk [vmem:[%s591 + $0x8] sm:$0xff] %vm535, %v588
        %594 = vrot.lane.b32.xlu0 %v525, 80
        %v595 = vpop.permute.xlu0 %594
        %596 = vrot.lane.b32.xlu0 %v530, 80
        %v597 = vpop.permute.xlu0 %596
        %s600 = scalar_lea.vmem %s381, 32 [#allocation12]
        %601 = vst.msk [vmem:[%s600] sm:$0xff] %vm535, %v595
        %602 = vst.msk [vmem:[%s600 + $0x8] sm:$0xff] %vm535, %v597
        %603 = vrot.lane.b32.xlu0 %v525, 48
        %v604 = vpop.permute.xlu0 %603
        %605 = vrot.lane.b32.xlu0 %v530, 48
        %v606 = vpop.permute.xlu0 %605
        %s609 = scalar_lea.vmem %s388, 32 [#allocation14]
        %610 = vst.msk [vmem:[%s609] sm:$0xff] %vm535, %v604
        %611 = vst.msk [vmem:[%s609 + $0x8] sm:$0xff] %vm535, %v606
        %612 = vrot.lane.b32.xlu0 %v533, 104
        %v613 = vpop.permute.xlu0 %612
        %614 = vrot.lane.b32.xlu0 %v534, 104
        %v615 = vpop.permute.xlu0 %614
        %s618 = scalar_lea.vmem %s374, 48 [#allocation11]
        %619 = vst.msk [vmem:[%s618] sm:$0xff] %vm535, %v613
        %620 = vst.msk [vmem:[%s618 + $0x8] sm:$0xff] %vm535, %v615
        %621 = vrot.lane.b32.xlu0 %v525, 72
        %v622 = vpop.permute.xlu0 %621
        %623 = vrot.lane.b32.xlu0 %v530, 72
        %v624 = vpop.permute.xlu0 %623
        %s627 = scalar_lea.vmem %s381, 48 [#allocation12]
        %628 = vst.msk [vmem:[%s627] sm:$0xff] %vm535, %v622
        %629 = vst.msk [vmem:[%s627 + $0x8] sm:$0xff] %vm535, %v624
        %630 = vrot.lane.b32.xlu0 %v525, 40
        %v631 = vpop.permute.xlu0 %630
        %632 = vrot.lane.b32.xlu0 %v530, 40
        %v633 = vpop.permute.xlu0 %632
        %s636 = scalar_lea.vmem %s388, 48 [#allocation14]
        %637 = vst.msk [vmem:[%s636] sm:$0xff] %vm535, %v631
        %638 = vst.msk [vmem:[%s636 + $0x8] sm:$0xff] %vm535, %v633
        %s639 = sand.u32 %s164, 1
        %s640 = scalar_lea.sflag [#allocation4], %s639
        %s641 = sand.u32 %s164, 1
        %s642 = smul.addr %s641, 64
        %s643 = scalar_lea.vmem [#allocation11], %s642
        %s644 = sand.u32 %s30, 1
        %s645 = scalar_lea.sflag [#allocation13], %s644
        %s646 = sand.u32 %s192, 1
        %s647 = smul.addr %s646, 64
        %s648 = scalar_lea.vmem [#allocation12], %s647
        %s649 = sand.u32 %s30, 1
        %s650 = scalar_lea.sflag [#allocation13], %s649
        %s651 = sand.u32 %s220, 1
        %s652 = smul.addr %s651, 64
        %s653 = scalar_lea.vmem [#allocation14], %s652
        // Predicated region
        $region61: #{gpt2_forward.7} parent=39 // pred_check
          %p654 = pneg %p174
        $region62: #{gpt2_forward.7} parent=39 // pred_check_branch
          %656 = sbr.rel (%p654) target = $region64
        $region63: #{gpt2_forward.7} parent=39 // pred_region
          %s657 = smul.u32 2, %s35
          %s659 = ssub.s32 1024, 1024
          %660 = vsyncadd %s640, %s659
          %s661 = smul.addr %s34, 8
          %s662 = sadd.s32 %s657, %s661
          %s663 = smul.addr %s662, 128
          %s664 = scalar_lea.hbm %s5, %s663
          %s665 = sshll.u32 %s643, 4
          %s666 = int_to_ptr.vmem [resolvable:$true] %s665
          %671 = dma.vmem_to_hbm [thread:$0]  %s666, 1024, %s664, %s640, 128, 128, 8
        $region64: #{gpt2_forward.7} parent=39 // pred_fallthru
          _
        // Predicated region
        $region65: #{gpt2_forward.7} parent=39 // pred_check
          %p672 = pneg %p202
        $region66: #{gpt2_forward.7} parent=39 // pred_check_branch
          %674 = sbr.rel (%p672) target = $region68
        $region67: #{gpt2_forward.7} parent=39 // pred_region
          %s675 = smul.u32 2, %s35
          %s677 = ssub.s32 1024, 1024
          %678 = vsyncadd %s645, %s677
          %s679 = smul.addr %s34, 8
          %s680 = sadd.s32 %s675, %s679
          %s681 = smul.addr %s680, 128
          %s682 = scalar_lea.hbm %s6, %s681
          %s683 = sshll.u32 %s648, 4
          %s684 = int_to_ptr.vmem [resolvable:$true] %s683
          %689 = dma.vmem_to_hbm [thread:$0]  %s684, 1024, %s682, %s645, 128, 128, 8
        $region68: #{gpt2_forward.7} parent=39 // pred_fallthru
          _
        // Predicated region
        $region69: #{gpt2_forward.7} parent=39 // pred_check
          %p690 = pneg %p230
        $region70: #{gpt2_forward.7} parent=39 // pred_check_branch
          %692 = sbr.rel (%p690) target = $region72
        $region71: #{gpt2_forward.7} parent=39 // pred_region
          %s693 = smul.u32 2, %s35
          %s695 = ssub.s32 1024, 1024
          %696 = vsyncadd %s650, %s695
          %s697 = smul.addr %s34, 8
          %s698 = sadd.s32 %s693, %s697
          %s699 = smul.addr %s698, 128
          %s700 = scalar_lea.hbm %s7, %s699
          %s701 = sshll.u32 %s653, 4
          %s702 = int_to_ptr.vmem [resolvable:$true] %s701
          %707 = dma.vmem_to_hbm [thread:$0]  %s702, 1024, %s700, %s650, 128, 128, 8
        $region72: #{gpt2_forward.7} parent=39 // pred_fallthru
          _
      $region40: #{gpt2_forward.7} parent=5 // pred_fallthru
        _
      %p708 = scmp.le.s32.totalorder 2, %s25
      // Predicated region
      $region73: #{gpt2_forward.7} parent=5 // pred_check
        %p709 = pneg %p708
      $region74: #{gpt2_forward.7} parent=5 // pred_check_branch
        %711 = sbr.rel (%p709) target = $region76
      $region75: #{gpt2_forward.7} parent=5 // pred_region
        %s712 = ssub.s32 %s25, 2
        // Predicated region
        $region77: #{gpt2_forward.7} parent=75 // pred_check
          %p713 = pneg %p180
        $region78: #{gpt2_forward.7} parent=75 // pred_check_branch
          %715 = sbr.rel (%p713) target = $region80
        $region79: #{gpt2_forward.7} parent=75 // pred_region
          %s716 = sand.u32 %s165, 1
          %s717 = scalar_lea.sflag [#allocation4], %s716
          %s718 = sand.u32 %s165, 1
          %s719 = smul.addr %s718, 64
          %s720 = scalar_lea.vmem [#allocation11], %s719
          %721 = dma.done %s717, 1024
        $region80: #{gpt2_forward.7} parent=75 // pred_fallthru
          _
        // Predicated region
        $region81: #{gpt2_forward.7} parent=75 // pred_check
          %p722 = pneg %p208
        $region82: #{gpt2_forward.7} parent=75 // pred_check_branch
          %724 = sbr.rel (%p722) target = $region84
        $region83: #{gpt2_forward.7} parent=75 // pred_region
          %s725 = sand.u32 %s31, 1
          %s726 = scalar_lea.sflag [#allocation13], %s725
          %s727 = sand.u32 %s193, 1
          %s728 = smul.addr %s727, 64
          %s729 = scalar_lea.vmem [#allocation12], %s728
          %730 = dma.done %s726, 1024
        $region84: #{gpt2_forward.7} parent=75 // pred_fallthru
          _
        // Predicated region
        $region85: #{gpt2_forward.7} parent=75 // pred_check
          %p731 = pneg %p236
        $region86: #{gpt2_forward.7} parent=75 // pred_check_branch
          %733 = sbr.rel (%p731) target = $region88
        $region87: #{gpt2_forward.7} parent=75 // pred_region
          %s734 = sand.u32 %s31, 1
          %s735 = scalar_lea.sflag [#allocation13], %s734
          %s736 = sand.u32 %s221, 1
          %s737 = smul.addr %s736, 64
          %s738 = scalar_lea.vmem [#allocation14], %s737
          %739 = dma.done %s735, 1024
        $region88: #{gpt2_forward.7} parent=75 // pred_fallthru
          _
      $region76: #{gpt2_forward.7} parent=5 // pred_fallthru
        _
    $region6: #{gpt2_forward.7} parent=1 // loop_footer
      %s29 = sadd.s32 1, %s25
    $region7: #{gpt2_forward.7} parent=1 // loop_footer_branch
      %24 = sbr.rel target = $region3
    $region8: #{gpt2_forward.7} parent=1 // loop_exit
      _
    %740 = vsyncpa [#allocation3], 1
    %s741 = scalar_lea.sflag [#allocation3], 1
    %742 = vsyncpa %s741, 1
    %743 = vsyncpa [#allocation6], 1
    %744 = vsyncpa [#allocation9], 1
    %745 = vsyncpa [#allocation4], 1
    %s746 = scalar_lea.sflag [#allocation4], 1
    %747 = vsyncpa %s746, 1
    %748 = vsyncpa [#allocation13], 1
    %s749 = scalar_lea.sflag [#allocation13], 1
    %750 = vsyncpa %s749, 1

// kernel: gpt2_forward.9
$region0: #{gpt2_forward.9}
  #allocation0 [shape = 'u32[]', space=smem, size = 0x4, offset = 0x4, fixed_abs, tag = 'smem constant byte address 0x4 - core index']
  #allocation1 [shape = 'u32[144,128]{1,0:T(1,128)}', space=vmem, size = 0x12000, scoped, tag = 'internal scratch']
  #allocation2 [shape = 'f32[16,32]{1,0:T(8,128)}', space=vmem, size = 0x2000, scoped, tag = 'scratch operand']
  #allocation3 [shape = 'f32[16,32]{1,0:T(8,128)}', space=vmem, size = 0x2000, scoped, tag = 'scratch operand']
  %s0 = inlined_call_operand.hbm [shape: f32[2,16,32], index: 0, kind: input, shape index: {}]
  %s1 = inlined_call_operand.hbm [shape: f32[1,32], index: 1, kind: input, shape index: {}]
  %s2 = inlined_call_operand.hbm [shape: f32[1,32], index: 2, kind: input, shape index: {}]
  %s3 = inlined_call_operand.hbm [shape: f32[32,128], index: 3, kind: input, shape index: {}]
  %s4 = inlined_call_operand.hbm [shape: f32[1,128], index: 4, kind: input, shape index: {}]
  %s5 = inlined_call_operand.hbm [shape: f32[128,32], index: 5, kind: input, shape index: {}]
  %s6 = inlined_call_operand.hbm [shape: f32[1,32], index: 6, kind: input, shape index: {}]
  %s7 = inlined_call_operand.hbm [shape: f32[2,16,32], index: 7, kind: output, shape index: {}]
  %s8 = sld [smem:[#allocation0]]
  $region97: #{gpt2_forward.9} parent=0
    _
  %s10 = ssub.s32 1, %s8
  %s11 = scalar_select 0, %s10, %s8
  $region1: #{gpt2_forward.9} parent=0
    #allocation4 [shape = 'u8[16384]{0}', space=vmem, size = 0x4000, scoped, tag = 'input window, operand 0']
    #allocation5 [shape = 's32[2]{0}', space=sflag, size = 0x8, scoped, tag = 'scoped memory for gpt2_forward.9']
    #allocation6 [shape = 's32[2]{0}', space=sflag, size = 0x8, scoped, tag = 'scoped memory for gpt2_forward.9']
    #allocation7 [shape = 'u8[512]{0}', space=vmem, size = 0x400, scoped, tag = 'input window, operand 1, single buffered']
    #allocation8 [shape = 's32[1]{0}', space=sflag, size = 0x4, scoped, tag = 'scoped memory for gpt2_forward.9']
    #allocation9 [shape = 'u8[512]{0}', space=vmem, size = 0x400, scoped, tag = 'input window, operand 2, single buffered']
    #allocation10 [shape = 'u8[16384]{0}', space=vmem, size = 0x4000, scoped, tag = 'input window, operand 3, single buffered']
    #allocation11 [shape = 's32[1]{0}', space=sflag, size = 0x4, scoped, tag = 'scoped memory for gpt2_forward.9']
    #allocation12 [shape = 'u8[512]{0}', space=vmem, size = 0x400, scoped, tag = 'input window, operand 4, single buffered']
    #allocation13 [shape = 'u8[65536]{0}', space=vmem, size = 0x10000, scoped, tag = 'input window, operand 5, single buffered']
    #allocation14 [shape = 's32[1]{0}', space=sflag, size = 0x4, scoped, tag = 'scoped memory for gpt2_forward.9']
    #allocation15 [shape = 'u8[512]{0}', space=vmem, size = 0x400, scoped, tag = 'input window, operand 6, single buffered']
    #allocation16 [shape = 'u8[16384]{0}', space=vmem, size = 0x4000, scoped, tag = 'output window, operand 0']
    %12 = vsyncpa [#allocation5], 0
    %s13 = scalar_lea.sflag [#allocation5], 1
    %14 = vsyncpa %s13, 0
    %15 = vsyncpa [#allocation8], 0
    %16 = vsyncpa [#allocation11], 0
    %17 = vsyncpa [#allocation14], 0
    %18 = vsyncpa [#allocation6], 0
    %s19 = scalar_lea.sflag [#allocation6], 1
    %20 = vsyncpa %s19, 0
    loop: start=0, step=1, limit=4
    $region2: #{gpt2_forward.9} parent=1 // loop_pre_header
      _
    $region3: #{gpt2_forward.9} parent=1 // loop_header
      %s22 = sphi 0, %s26
      %p23 = scmp.ge.s32.totalorder %s22, 4
      %s29 = sphi 0, %s48
      %s30 = sphi 0, %s44
      %s31 = sphi 0, %s40
      %s32 = sphi 0, %s29
      %s33 = sphi 0, %s30
      %s34 = sphi 0, %s31
      %s35 = sphi 0, %s32
      %s36 = sphi 0, %s33
      %s37 = sphi 0, %s34
      %s53 = sphi 0, %s55
      %s56 = sphi 0, %s53
      %s57 = sphi 0, %s56
      %s73 = sphi 0, %s57
      %s77 = sphi 0, %s77
      %s79 = sphi 0, %s77
      %s80 = sphi 0, %s79
      %s94 = sphi 0, %s80
      %s98 = sphi 0, %s98
      %s100 = sphi 0, %s98
      %s101 = sphi 0, %s100
      %s115 = sphi 0, %s101
      %s121 = sphi 0, %s123
      %s124 = sphi 0, %s121
      %s125 = sphi 0, %s124
      %s141 = sphi 0, %s125
      %s147 = sphi 0, %s149
      %s150 = sphi 0, %s147
      %s151 = sphi 0, %s150
      %s167 = sphi 0, %s151
      %s173 = sphi 0, %s175
      %s176 = sphi 0, %s173
      %s177 = sphi 0, %s176
      %s193 = sphi 0, %s177
      %s197 = sphi 0, %s197
      %s199 = sphi 0, %s197
      %s200 = sphi 0, %s199
      %s214 = sphi 0, %s200
      %s222 = sphi 0, %s224
      %s225 = sphi 0, %s222
      %s226 = sphi 0, %s225
      %s242 = sphi 0, %s226
    $region4: #{gpt2_forward.9} parent=1 // loop_header_branch
      %25 = sbr.rel (%p23) target = $region8
    $region5: #{gpt2_forward.9} parent=1 // loop_body
      %s27 = ssub.s32 %s22, 1
      %s28 = ssub.s32 %s22, 2
      %s38 = sadd.s32 1, %s31
      %p39 = scmp.ge.s32.totalorder %s38, 1
      %s40 = scalar_select %p39, 0, %s38
      %s41 = sadd.s32 1, %s30
      %s42 = scalar_select %p39, %s41, %s30
      %p43 = scmp.ge.s32.totalorder %s42, 1
      %s44 = scalar_select %p43, 0, %s42
      %s45 = sadd.s32 1, %s29
      %s46 = scalar_select %p43, %s45, %s29
      %p47 = scmp.ge.s32.totalorder %s46, 2
      %s48 = scalar_select %p47, 0, %s46
      %s49 = ssub.s32 %s29, %s48
      %s50 = ssub.s32 %s30, %s44
      %s51 = sor.u32 %s49, %s50
      %p52 = scmp.eq.s32.totalorder %s51, 0
      %s54 = sadd.s32 %s53, 1
      %s55 = scalar_select %p52, %s53, %s54
      %p58 = pneg %p52
      %p59 = scmp.eq.s32.totalorder %s22, 1
      %p60 = por %p58, %p59
      %p61 = scmp.ne.s32.totalorder %s53, %s56
      %p62 = scmp.eq.s32.totalorder %s22, 0
      %p63 = por %p61, %p62
      %p64 = scmp.ne.s32.totalorder %s53, %s56
      %p65 = scmp.eq.s32.totalorder %s27, 1
      %p66 = por %p64, %p65
      %p67 = scmp.ne.s32.totalorder %s56, %s57
      %p68 = scmp.eq.s32.totalorder %s27, 0
      %p69 = por %p67, %p68
      %p70 = scmp.ne.s32.totalorder %s56, %s57
      %p71 = scmp.eq.s32.totalorder %s28, 1
      %p72 = por %p70, %p71
      %p74 = scmp.ne.s32.totalorder %s57, %s73
      %p75 = scmp.eq.s32.totalorder %s28, 0
      %p76 = por %p74, %p75
      %s78 = sadd.s32 %s77, 1
      %p81 = scmp.eq.s32.totalorder %s22, 1
      %p82 = scmp.ne.s32.totalorder %s77, %s79
      %p83 = scmp.eq.s32.totalorder %s22, 0
      %p84 = por %p82, %p83
      %p85 = scmp.ne.s32.totalorder %s77, %s79
      %p86 = scmp.eq.s32.totalorder %s27, 1
      %p87 = por %p85, %p86
      %p88 = scmp.ne.s32.totalorder %s79, %s80
      %p89 = scmp.eq.s32.totalorder %s27, 0
      %p90 = por %p88, %p89
      %p91 = scmp.ne.s32.totalorder %s79, %s80
      %p92 = scmp.eq.s32.totalorder %s28, 1
      %p93 = por %p91, %p92
      %p95 = scmp.ne.s32.totalorder %s80, %s94
      %p96 = scmp.eq.s32.totalorder %s28, 0
      %p97 = por %p95, %p96
      %s99 = sadd.s32 %s98, 1
      %p102 = scmp.eq.s32.totalorder %s22, 1
      %p103 = scmp.ne.s32.totalorder %s98, %s100
      %p104 = scmp.eq.s32.totalorder %s22, 0
      %p105 = por %p103, %p104
      %p106 = scmp.ne.s32.totalorder %s98, %s100
      %p107 = scmp.eq.s32.totalorder %s27, 1
      %p108 = por %p106, %p107
      %p109 = scmp.ne.s32.totalorder %s100, %s101
      %p110 = scmp.eq.s32.totalorder %s27, 0
      %p111 = por %p109, %p110
      %p112 = scmp.ne.s32.totalorder %s100, %s101
      %p113 = scmp.eq.s32.totalorder %s28, 1
      %p114 = por %p112, %p113
      %p116 = scmp.ne.s32.totalorder %s101, %s115
      %p117 = scmp.eq.s32.totalorder %s28, 0
      %p118 = por %p116, %p117
      %s119 = ssub.s32 %s31, %s40
      %p120 = scmp.eq.s32.totalorder %s119, 0
      %s122 = sadd.s32 %s121, 1
      %s123 = scalar_select %p120, %s121, %s122
      %p126 = pneg %p120
      %p127 = scmp.eq.s32.totalorder %s22, 1
      %p128 = por %p126, %p127
      %p129 = scmp.ne.s32.totalorder %s121, %s124
      %p130 = scmp.eq.s32.totalorder %s22, 0
      %p131 = por %p129, %p130
      %p132 = scmp.ne.s32.totalorder %s121, %s124
      %p133 = scmp.eq.s32.totalorder %s27, 1
      %p134 = por %p132, %p133
      %p135 = scmp.ne.s32.totalorder %s124, %s125
      %p136 = scmp.eq.s32.totalorder %s27, 0
      %p137 = por %p135, %p136
      %p138 = scmp.ne.s32.totalorder %s124, %s125
      %p139 = scmp.eq.s32.totalorder %s28, 1
      %p140 = por %p138, %p139
      %p142 = scmp.ne.s32.totalorder %s125, %s141
      %p143 = scmp.eq.s32.totalorder %s28, 0
      %p144 = por %p142, %p143
      %s145 = ssub.s32 %s31, %s40
      %p146 = scmp.eq.s32.totalorder %s145, 0
      %s148 = sadd.s32 %s147, 1
      %s149 = scalar_select %p146, %s147, %s148
      %p152 = pneg %p146
      %p153 = scmp.eq.s32.totalorder %s22, 1
      %p154 = por %p152, %p153
      %p155 = scmp.ne.s32.totalorder %s147, %s150
      %p156 = scmp.eq.s32.totalorder %s22, 0
      %p157 = por %p155, %p156
      %p158 = scmp.ne.s32.totalorder %s147, %s150
      %p159 = scmp.eq.s32.totalorder %s27, 1
      %p160 = por %p158, %p159
      %p161 = scmp.ne.s32.totalorder %s150, %s151
      %p162 = scmp.eq.s32.totalorder %s27, 0
      %p163 = por %p161, %p162
      %p164 = scmp.ne.s32.totalorder %s150, %s151
      %p165 = scmp.eq.s32.totalorder %s28, 1
      %p166 = por %p164, %p165
      %p168 = scmp.ne.s32.totalorder %s151, %s167
      %p169 = scmp.eq.s32.totalorder %s28, 0
      %p170 = por %p168, %p169
      %s171 = ssub.s32 %s31, %s40
      %p172 = scmp.eq.s32.totalorder %s171, 0
      %s174 = sadd.s32 %s173, 1
      %s175 = scalar_select %p172, %s173, %s174
      %p178 = pneg %p172
      %p179 = scmp.eq.s32.totalorder %s22, 1
      %p180 = por %p178, %p179
      %p181 = scmp.ne.s32.totalorder %s173, %s176
      %p182 = scmp.eq.s32.totalorder %s22, 0
      %p183 = por %p181, %p182
      %p184 = scmp.ne.s32.totalorder %s173, %s176
      %p185 = scmp.eq.s32.totalorder %s27, 1
      %p186 = por %p184, %p185
      %p187 = scmp.ne.s32.totalorder %s176, %s177
      %p188 = scmp.eq.s32.totalorder %s27, 0
      %p189 = por %p187, %p188
      %p190 = scmp.ne.s32.totalorder %s176, %s177
      %p191 = scmp.eq.s32.totalorder %s28, 1
      %p192 = por %p190, %p191
      %p194 = scmp.ne.s32.totalorder %s177, %s193
      %p195 = scmp.eq.s32.totalorder %s28, 0
      %p196 = por %p194, %p195
      %s198 = sadd.s32 %s197, 1
      %p201 = scmp.eq.s32.totalorder %s22, 1
      %p202 = scmp.ne.s32.totalorder %s197, %s199
      %p203 = scmp.eq.s32.totalorder %s22, 0
      %p204 = por %p202, %p203
      %p205 = scmp.ne.s32.totalorder %s197, %s199
      %p206 = scmp.eq.s32.totalorder %s27, 1
      %p207 = por %p205, %p206
      %p208 = scmp.ne.s32.totalorder %s199, %s200
      %p209 = scmp.eq.s32.totalorder %s27, 0
      %p210 = por %p208, %p209
      %p211 = scmp.ne.s32.totalorder %s199, %s200
      %p212 = scmp.eq.s32.totalorder %s28, 1
      %p213 = por %p211, %p212
      %p215 = scmp.ne.s32.totalorder %s200, %s214
      %p216 = scmp.eq.s32.totalorder %s28, 0
      %p217 = por %p215, %p216
      %s218 = ssub.s32 %s29, %s48
      %s219 = ssub.s32 %s30, %s44
      %s220 = sor.u32 %s218, %s219
      %p221 = scmp.eq.s32.totalorder %s220, 0
      %s223 = sadd.s32 %s222, 1
      %s224 = scalar_select %p221, %s222, %s223
      %p227 = pneg %p221
      %p228 = scmp.eq.s32.totalorder %s22, 1
      %p229 = por %p227, %p228
      %p230 = scmp.ne.s32.totalorder %s222, %s225
      %p231 = scmp.eq.s32.totalorder %s22, 0
      %p232 = por %p230, %p231
      %p233 = scmp.ne.s32.totalorder %s222, %s225
      %p234 = scmp.eq.s32.totalorder %s27, 1
      %p235 = por %p233, %p234
      %p236 = scmp.ne.s32.totalorder %s225, %s226
      %p237 = scmp.eq.s32.totalorder %s27, 0
      %p238 = por %p236, %p237
      %p239 = scmp.ne.s32.totalorder %s225, %s226
      %p240 = scmp.eq.s32.totalorder %s28, 1
      %p241 = por %p239, %p240
      %p243 = scmp.ne.s32.totalorder %s226, %s242
      %p244 = scmp.eq.s32.totalorder %s28, 0
      %p245 = por %p243, %p244
      %p246 = scmp.le.s32.totalorder 1, %s22
      %p247 = scmp.lt.s32.totalorder %s22, 3
      %p248 = pnand %p246, %p247
      %p249 = pneg %p248
      // Predicated region
      $region9: #{gpt2_forward.9} parent=5 // pred_check
        _
      $region10: #{gpt2_forward.9} parent=5 // pred_check_branch
        %251 = sbr.rel (%p248) target = $region12
      $region11: #{gpt2_forward.9} parent=5 // pred_region
        %s252 = ssub.s32 %s22, 1
        // Predicated region
        $region13: #{gpt2_forward.9} parent=11 // pred_check
          %p253 = pneg %p90
        $region14: #{gpt2_forward.9} parent=11 // pred_check_branch
          %255 = sbr.rel (%p253) target = $region16
        $region15: #{gpt2_forward.9} parent=11 // pred_region
          %s257 = ssub.s32 16, 16
          %258 = vsyncadd [#allocation8], %s257
          %s260 = sshll.u32 [#allocation7], 4
          %s261 = int_to_ptr.vmem [resolvable:$true] %s260
          %263 = dma.hbm_to_vmem [thread:$0]  %s1, 16, %s261, [#allocation8]
        $region16: #{gpt2_forward.9} parent=11 // pred_fallthru
          _
        // Predicated region
        $region17: #{gpt2_forward.9} parent=11 // pred_check
          %p264 = pneg %p111
        $region18: #{gpt2_forward.9} parent=11 // pred_check_branch
          %266 = sbr.rel (%p264) target = $region20
        $region19: #{gpt2_forward.9} parent=11 // pred_region
          %s268 = ssub.s32 16, 16
          %269 = vsyncadd [#allocation8], %s268
          %s271 = sshll.u32 [#allocation9], 4
          %s272 = int_to_ptr.vmem [resolvable:$true] %s271
          %274 = dma.hbm_to_vmem [thread:$0]  %s2, 16, %s272, [#allocation8]
        $region20: #{gpt2_forward.9} parent=11 // pred_fallthru
          _
        // Predicated region
        $region21: #{gpt2_forward.9} parent=11 // pred_check
          %p275 = pneg %p137
        $region22: #{gpt2_forward.9} parent=11 // pred_check_branch
          %277 = sbr.rel (%p275) target = $region24
        $region23: #{gpt2_forward.9} parent=11 // pred_region
          %s279 = ssub.s32 512, 512
          %280 = vsyncadd [#allocation11], %s279
          %s281 = smul.addr %s34, 128
          %s282 = scalar_lea.hbm %s3, %s281
          %s283 = sshll.u32 [#allocation10], 4
          %s284 = int_to_ptr.vmem [resolvable:$true] %s283
          %289 = dma.hbm_to_vmem [thread:$0]  %s282, 512, %s284, [#allocation11], 128, 128, 8
        $region24: #{gpt2_forward.9} parent=11 // pred_fallthru
          _
        // Predicated region
        $region25: #{gpt2_forward.9} parent=11 // pred_check
          %p290 = pneg %p163
        $region26: #{gpt2_forward.9} parent=11 // pred_check_branch
          %292 = sbr.rel (%p290) target = $region28
        $region27: #{gpt2_forward.9} parent=11 // pred_region
          %s294 = ssub.s32 16, 16
          %295 = vsyncadd [#allocation11], %s294
          %s296 = smul.addr %s34, 16
          %s297 = scalar_lea.hbm %s4, %s296
          %s299 = sshll.u32 [#allocation12], 4
          %s300 = int_to_ptr.vmem [resolvable:$true] %s299
          %302 = dma.hbm_to_vmem [thread:$0]  %s297, 16, %s300, [#allocation11]
        $region28: #{gpt2_forward.9} parent=11 // pred_fallthru
          _
        // Predicated region
        $region29: #{gpt2_forward.9} parent=11 // pred_check
          %p303 = pneg %p189
        $region30: #{gpt2_forward.9} parent=11 // pred_check_branch
          %305 = sbr.rel (%p303) target = $region32
        $region31: #{gpt2_forward.9} parent=11 // pred_region
          %s306 = smul.u32 16, %s34
          %s308 = ssub.s32 2048, 2048
          %309 = vsyncadd [#allocation14], %s308
          %s310 = smul.addr %s306, 128
          %s311 = scalar_lea.hbm %s5, %s310
          %s312 = sshll.u32 [#allocation13], 4
          %s313 = int_to_ptr.vmem [resolvable:$true] %s312
          %318 = dma.hbm_to_vmem [thread:$0]  %s311, 2048, %s313, [#allocation14], 128, 128, 8
        $region32: #{gpt2_forward.9} parent=11 // pred_fallthru
          _
        // Predicated region
        $region33: #{gpt2_forward.9} parent=11 // pred_check
          %p319 = pneg %p210
        $region34: #{gpt2_forward.9} parent=11 // pred_check_branch
          %321 = sbr.rel (%p319) target = $region36
        $region35: #{gpt2_forward.9} parent=11 // pred_region
          %s323 = ssub.s32 16, 16
          %324 = vsyncadd [#allocation14], %s323
          %s326 = sshll.u32 [#allocation15], 4
          %s327 = int_to_ptr.vmem [resolvable:$true] %s326
          %329 = dma.hbm_to_vmem [thread:$0]  %s6, 16, %s327, [#allocation14]
        $region36: #{gpt2_forward.9} parent=11 // pred_fallthru
          _
      $region12: #{gpt2_forward.9} parent=5 // pred_fallthru
        _
      %p330 = scmp.lt.s32.totalorder %s22, 2
      // Predicated region
      $region37: #{gpt2_forward.9} parent=5 // pred_check
        %p331 = pneg %p330
      $region38: #{gpt2_forward.9} parent=5 // pred_check_branch
        %333 = sbr.rel (%p331) target = $region40
      $region39: #{gpt2_forward.9} parent=5 // pred_region
        // Predicated region
        $region41: #{gpt2_forward.9} parent=39 // pred_check
          %p334 = pneg %p63
        $region42: #{gpt2_forward.9} parent=39 // pred_check_branch
          %336 = sbr.rel (%p334) target = $region44
        $region43: #{gpt2_forward.9} parent=39 // pred_region
          %s337 = sand.u32 %s53, 1
          %s338 = scalar_lea.sflag [#allocation5], %s337
          %s339 = sand.u32 %s53, 1
          %s340 = smul.addr %s339, 16
          %s341 = scalar_lea.vmem [#allocation4], %s340
          %s342 = smul.u32 2, %s30
          %s344 = ssub.s32 256, 256
          %345 = vsyncadd %s338, %s344
          %s346 = smul.addr %s29, 2
          %s347 = sadd.s32 %s342, %s346
          %s348 = smul.addr %s347, 128
          %s349 = scalar_lea.hbm %s0, %s348
          %s350 = sshll.u32 %s341, 4
          %s351 = int_to_ptr.vmem [resolvable:$true] %s350
          %356 = dma.hbm_to_vmem [thread:$0]  %s349, 256, %s351, %s338, 128, 128, 8
        $region44: #{gpt2_forward.9} parent=39 // pred_fallthru
          _
      $region40: #{gpt2_forward.9} parent=5 // pred_fallthru
        _
      %p357 = scmp.le.s32.totalorder 1, %s22
      %p358 = scmp.lt.s32.totalorder %s22, 3
      %p359 = pnand %p357, %p358
      %p360 = pneg %p359
      // Predicated region
      $region45: #{gpt2_forward.9} parent=5 // pred_check
        _
      $region46: #{gpt2_forward.9} parent=5 // pred_check_branch
        %362 = sbr.rel (%p359) target = $region48
      $region47: #{gpt2_forward.9} parent=5 // pred_region
        %s363 = ssub.s32 %s22, 1
        %s364 = sand.u32 %s56, 1
        %s365 = scalar_lea.sflag [#allocation5], %s364
        %s366 = sand.u32 %s56, 1
        %s367 = smul.addr %s366, 16
        %s368 = scalar_lea.vmem [#allocation4], %s367
        // Predicated region
        $region49: #{gpt2_forward.9} parent=47 // pred_check
          %p369 = pneg %p69
        $region50: #{gpt2_forward.9} parent=47 // pred_check_branch
          %371 = sbr.rel (%p369) target = $region52
        $region51: #{gpt2_forward.9} parent=47 // pred_region
          %372 = dma.done %s365, 256
        $region52: #{gpt2_forward.9} parent=47 // pred_fallthru
          _
        // Predicated region
        $region53: #{gpt2_forward.9} parent=47 // pred_check
          %p373 = pneg %p90
        $region54: #{gpt2_forward.9} parent=47 // pred_check_branch
          %375 = sbr.rel (%p373) target = $region56
        $region55: #{gpt2_forward.9} parent=47 // pred_region
          %376 = dma.done [#allocation8], 16
        $region56: #{gpt2_forward.9} parent=47 // pred_fallthru
          _
        // Predicated region
        $region57: #{gpt2_forward.9} parent=47 // pred_check
          %p377 = pneg %p111
        $region58: #{gpt2_forward.9} parent=47 // pred_check_branch
          %379 = sbr.rel (%p377) target = $region60
        $region59: #{gpt2_forward.9} parent=47 // pred_region
          %380 = dma.done [#allocation8], 16
        $region60: #{gpt2_forward.9} parent=47 // pred_fallthru
          _
        // Predicated region
        $region61: #{gpt2_forward.9} parent=47 // pred_check
          %p381 = pneg %p137
        $region62: #{gpt2_forward.9} parent=47 // pred_check_branch
          %383 = sbr.rel (%p381) target = $region64
        $region63: #{gpt2_forward.9} parent=47 // pred_region
          %384 = dma.done [#allocation11], 512
        $region64: #{gpt2_forward.9} parent=47 // pred_fallthru
          _
        // Predicated region
        $region65: #{gpt2_forward.9} parent=47 // pred_check
          %p385 = pneg %p163
        $region66: #{gpt2_forward.9} parent=47 // pred_check_branch
          %387 = sbr.rel (%p385) target = $region68
        $region67: #{gpt2_forward.9} parent=47 // pred_region
          %388 = dma.done [#allocation11], 16
        $region68: #{gpt2_forward.9} parent=47 // pred_fallthru
          _
        // Predicated region
        $region69: #{gpt2_forward.9} parent=47 // pred_check
          %p389 = pneg %p189
        $region70: #{gpt2_forward.9} parent=47 // pred_check_branch
          %391 = sbr.rel (%p389) target = $region72
        $region71: #{gpt2_forward.9} parent=47 // pred_region
          %392 = dma.done [#allocation14], 2048
        $region72: #{gpt2_forward.9} parent=47 // pred_fallthru
          _
        // Predicated region
        $region73: #{gpt2_forward.9} parent=47 // pred_check
          %p393 = pneg %p210
        $region74: #{gpt2_forward.9} parent=47 // pred_check_branch
          %395 = sbr.rel (%p393) target = $region76
        $region75: #{gpt2_forward.9} parent=47 // pred_region
          %396 = dma.done [#allocation14], 16
        $region76: #{gpt2_forward.9} parent=47 // pred_fallthru
          _
        %s397 = sand.u32 %s56, 1
        %s398 = scalar_lea.sflag [#allocation5], %s397
        %s399 = sand.u32 %s56, 1
        %s400 = smul.addr %s399, 16
        %s401 = scalar_lea.vmem [#allocation4], %s400
        %p402 = pneg %p69
        %p403 = pneg %p66
        %p404 = pneg %p90
        %p405 = pneg %p87
        %p406 = pneg %p111
        %p407 = pneg %p108
        %p408 = pneg %p137
        %p409 = pneg %p134
        %p410 = pneg %p163
        %p411 = pneg %p160
        %p412 = pneg %p189
        %p413 = pneg %p186
        %p414 = pneg %p210
        %p415 = pneg %p207
        %p416 = pneg %p238
        %p417 = pneg %p235
        %s418 = sand.u32 %s225, 1
        %s419 = scalar_lea.sflag [#allocation6], %s418
        %s420 = sand.u32 %s225, 1
        %s421 = smul.addr %s420, 16
        %s422 = scalar_lea.vmem [#allocation16], %s421
        %s423 = smul.u32 2, %s33
        %s424 = smul.u32 16, %s34
        %s425 = smul.u32 2, %s33
        %p426 = scmp.eq.s32.totalorder %s34, 0
        // Predicated region
        $region77: #{gpt2_forward.9} parent=47 // pred_check
          %p427 = pneg %p426
        $region78: #{gpt2_forward.9} parent=47 // pred_check_branch
          %429 = sbr.rel (%p427) target = $region80
        $region79: #{gpt2_forward.9} parent=47 // pred_region
          %v430 = vld [vmem:[%s368] sm:$0xff]
          %v431 = vld [vmem:[%s368 + $0x8] sm:$0xff]
          %v432 = vld [vmem:[#allocation7] sm:$0x1]
          %v433 = vld [vmem:[#allocation9] sm:$0x1]
          %vm434 = vcmask 261120
          %v435 = vsel %vm434, %v430, 0.0
          %436 = vadd.xlane.f32.xlu0 %v435
          %v437 = vpop.xlane.xlu0 %436
          %v438 = vsel %vm434, %v431, 0.0
          %439 = vadd.xlane.f32.xlu0 %v438
          %v440 = vpop.xlane.xlu0 %439
          %v441 = vrcp.pop 32.0
          %v442 = vmul.f32 %v437, %v441
          %v443 = vmul.f32 %v440, %v441
          %v444 = vsub.f32 %v430, %v442
          %v445 = vsub.f32 %v431, %v443
          %v446 = vmul.f32 %v444, %v444
          %v447 = vmul.f32 %v445, %v445
          %v448 = vsel %vm434, %v446, 0.0
          %449 = vadd.xlane.f32.xlu0 %v448
          %v450 = vpop.xlane.xlu0 %449
          %v451 = vsel %vm434, %v447, 0.0
          %452 = vadd.xlane.f32.xlu0 %v451
          %v453 = vpop.xlane.xlu0 %452
          %v454 = vmul.f32 %v450, %v441
          %v455 = vmul.f32 %v453, %v441
          %v456 = vadd.f32 %v454, 1e-05
          %v457 = vadd.f32 %v455, 1e-05
          %v458 = vrsqrt.pop %v456
          %v459 = vrsqrt.pop %v457
          %v460 = vmul.f32 %v444, %v458
          %v461 = vmul.f32 %v445, %v459
          %v463 = vlaneseq
          %v464 = vshrl.u32 %v463, 7
          %v465 = vsub.s32 0, %v464
          %v466 = vrot.slane %v432, %v465
          %v468 = vmul.f32 %v460, %v466
          %v469 = vmul.f32 %v461, %v466
          %v471 = vlaneseq
          %v472 = vshrl.u32 %v471, 7
          %v473 = vsub.s32 0, %v472
          %v474 = vrot.slane %v433, %v473
          %v476 = vadd.f32 %v468, %v474
          %v477 = vadd.f32 %v469, %v474
          %478 = vst.msk [vmem:[#allocation2] sm:$0xff] %vm434, %v476
          %479 = vst.msk [vmem:[#allocation2 + $0x8] sm:$0xff] %vm434, %v477
          %480 = vst.msk [vmem:[#allocation3] sm:$0xff] %vm434, 0.0
          %481 = vst.msk [vmem:[#allocation3 + $0x8] sm:$0xff] %vm434, 0.0
        $region80: #{gpt2_forward.9} parent=47 // pred_fallthru
          _
        %v482 = vld [vmem:[#allocation2] sm:$0xff]
        %v483 = vld [vmem:[#allocation2 + $0x8] sm:$0xff]
        %v484 = vld [vmem:[#allocation10] sm:$0xff]
        %v485 = vld [vmem:[#allocation10 + $0x8] sm:$0xff]
        %v486 = vld [vmem:[#allocation10 + $0x10] sm:$0xff]
        %v487 = vld [vmem:[#allocation10 + $0x18] sm:$0xff]
        %v488 = vld [vmem:[#allocation12] sm:$0x1]
        %v490 = vlaneseq
        %v491 = vshrl.u32 %v490, 7
        %v492 = vsub.s32 0, %v491
        %v493 = vrot.slane %v488, %v492
        %vm495 = vcmask 261120
        %v497 = vsel %vm495, %v482, 0
        %v500 = vsel %vm495, %v483, 0
        %502 = vmatprep.subr.mxu0 0.0
        %503 = vmatpush1.msra.mxu0 %v484
        %504 = vmatprep.subr.mxu0 0.0
        %505 = vmatpush1.msra.mxu0 %v485
        %506 = vmatprep.subr.mxu0 0.0
        %507 = vmatpush1.msra.mxu0 %v486
        %508 = vmatprep.subr.mxu0 0.0
        %509 = vmatpush1.msra.mxu0 %v487
        %510 = vmatprep.subr.mxu0 0.0
        %511 = vmatpush1.msra.mxu0 0.0
        %512 = vmatprep.subr.mxu0 0.0
        %513 = vmatpush1.msra.mxu0 0.0
        %514 = vmatprep.subr.mxu0 0.0
        %515 = vmatpush1.msra.mxu0 0.0
        %516 = vmatprep.subr.mxu0 0.0
        %517 = vmatpush1.msra.mxu0 0.0
        %518 = vmatprep.subr.mxu0 0.0
        %519 = vmatpush1.msra.mxu0 0.0
        %520 = vmatprep.subr.mxu0 0.0
        %521 = vmatpush1.msra.mxu0 0.0
        %522 = vmatprep.subr.mxu0 0.0
        %523 = vmatpush1.msra.mxu0 0.0
        %524 = vmatprep.subr.mxu0 0.0
        %525 = vmatpush1.msra.mxu0 0.0
        %526 = vmatprep.subr.mxu0 0.0
        %527 = vmatpush1.msra.mxu0 0.0
        %528 = vmatprep.subr.mxu0 0.0
        %529 = vmatpush1.msra.mxu0 0.0
        %530 = vmatprep.subr.mxu0 0.0
        %531 = vmatpush1.msra.mxu0 0.0
        %532 = vmatprep.subr.mxu0 0.0
        %533 = vmatpush1.msra.mxu0 0.0
        %534 = vmatprep.subr.mxu0 0.0
        %535 = vmatpush1.msra.mxu0 0.0
        %536 = vmatprep.subr.mxu0 0.0
        %537 = vmatpush1.msra.mxu0 0.0
        %538 = vmatprep.subr.mxu0 0.0
        %539 = vmatpush1.msra.mxu0 0.0
        %540 = vmatprep.subr.mxu0 0.0
        %541 = vmatpush1.msra.mxu0 0.0
        %542 = vmatprep.subr.mxu0 0.0
        %543 = vmatpush1.msra.mxu0 0.0
        %544 = vmatprep.subr.mxu0 0.0
        %545 = vmatpush1.msra.mxu0 0.0
        %546 = vmatprep.subr.mxu0 0.0
        %547 = vmatpush1.msra.mxu0 0.0
        %548 = vmatprep.subr.mxu0 0.0
        %549 = vmatpush1.msra.mxu0 0.0
        %550 = vmatprep.subr.mxu0 0.0
        %551 = vmatpush1.msra.mxu0 0.0
        %552 = vmatprep.subr.mxu0 0.0
        %553 = vmatpush1.msra.mxu0 0.0
        %554 = vmatprep.subr.mxu0 0.0
        %555 = vmatpush1.msra.mxu0 0.0
        %556 = vmatprep.subr.mxu0 0.0
        %557 = vmatpush1.msra.mxu0 0.0
        %558 = vmatprep.subr.mxu0 0.0
        %559 = vmatpush1.msra.mxu0 0.0
        %560 = vmatprep.subr.mxu0 0.0
        %561 = vmatpush1.msra.mxu0 0.0
        %562 = vmatprep.subr.mxu0 0.0
        %563 = vmatpush1.msra.mxu0 0.0
        %564 = vmatprep.subr.mxu0 0.0
        %565 = vmatpush1.msra.mxu0 0.0
        %566 = vmatprep.mubr.f32.mxu0 0.0
        %567 = vmatmul.mubr.f32.gmra.mrb[0].mxu0 %v497
        %v568 = vpop.f32.mrb[0].mxu0
        %v569 = vadd.f32 %v493, %v568
        %v570 = vpop.f32.mrb[0].mxu0
        %571 = vmatprep.mubr.f32.mxu0 0.0
        %572 = vmatmul.mubr.f32.gmra.mrb[0].mxu0 %v500
        %v573 = vpop.f32.mrb[0].mxu0
        %v574 = vadd.f32 %v493, %v573
        %v575 = vpop.f32.mrb[0].mxu0
        %576 = vdwg.mxu0
        %v577 = vmul.f32 %v569, 0.5
        %v578 = vmul.f32 %v574, 0.5
        %v579 = vmul.f32 %v569, %v569
        %v580 = vmul.f32 %v574, %v574
        %v581 = vmul.f32 %v569, %v579
        %v582 = vmul.f32 %v574, %v580
        %v583 = vmul.f32 %v581, 0.044715
        %v584 = vmul.f32 %v582, 0.044715
        %v585 = vadd.f32 %v569, %v583
        %v586 = vadd.f32 %v574, %v584
        %v587 = vmul.f32 %v585, 0.7978845
        %v588 = vmul.f32 %v586, 0.7978845
        %v589 = vtanh.pop %v587
        %v590 = vtanh.pop %v588
        %v591 = vadd.f32 %v589, 1.0
        %v592 = vadd.f32 %v590, 1.0
        %v593 = vmul.f32 %v577, %v591
        %v594 = vmul.f32 %v578, %v592
        %v595 = vld [vmem:[#allocation3] sm:$0xff]
        %v596 = vld [vmem:[#allocation3 + $0x8] sm:$0xff]
        %v597 = vld [vmem:[#allocation13] sm:$0xff]
        %v598 = vld [vmem:[#allocation13 + $0x8] sm:$0xff]
        %v599 = vld [vmem:[#allocation13 + $0x10] sm:$0xff]
        %v600 = vld [vmem:[#allocation13 + $0x18] sm:$0xff]
        %v601 = vld [vmem:[#allocation13 + $0x20] sm:$0xff]
        %v602 = vld [vmem:[#allocation13 + $0x28] sm:$0xff]
        %v603 = vld [vmem:[#allocation13 + $0x30] sm:$0xff]
        %v604 = vld [vmem:[#allocation13 + $0x38] sm:$0xff]
        %v605 = vld [vmem:[#allocation13 + $0x40] sm:$0xff]
        %v606 = vld [vmem:[#allocation13 + $0x48] sm:$0xff]
        %v607 = vld [vmem:[#allocation13 + $0x50] sm:$0xff]
        %v608 = vld [vmem:[#allocation13 + $0x58] sm:$0xff]
        %v609 = vld [vmem:[#allocation13 + $0x60] sm:$0xff]
        %v610 = vld [vmem:[#allocation13 + $0x68] sm:$0xff]
        %v611 = vld [vmem:[#allocation13 + $0x70] sm:$0xff]
        %v612 = vld [vmem:[#allocation13 + $0x78] sm:$0xff]
        %613 = vmatprep.subr.mxu0 0.0
        %614 = vmatpush1.msra.mxu0 %v597
        %615 = vmatprep.subr.mxu0 0.0
        %616 = vmatpush1.msra.mxu0 %v598
        %617 = vmatprep.subr.mxu0 0.0
        %618 = vmatpush1.msra.mxu0 %v599
        %619 = vmatprep.subr.mxu0 0.0
        %620 = vmatpush1.msra.mxu0 %v600
        %621 = vmatprep.subr.mxu0 0.0
        %622 = vmatpush1.msra.mxu0 %v601
        %623 = vmatprep.subr.mxu0 0.0
        %624 = vmatpush1.msra.mxu0 %v602
        %625 = vmatprep.subr.mxu0 0.0
        %626 = vmatpush1.msra.mxu0 %v603
        %627 = vmatprep.subr.mxu0 0.0
        %628 = vmatpush1.msra.mxu0 %v604
        %629 = vmatprep.subr.mxu0 0.0
        %630 = vmatpush1.msra.mxu0 %v605
        %631 = vmatprep.subr.mxu0 0.0
        %632 = vmatpush1.msra.mxu0 %v606
        %633 = vmatprep.subr.mxu0 0.0
        %634 = vmatpush1.msra.mxu0 %v607
        %635 = vmatprep.subr.mxu0 0.0
        %636 = vmatpush1.msra.mxu0 %v608
        %637 = vmatprep.subr.mxu0 0.0
        %638 = vmatpush1.msra.mxu0 %v609
        %639 = vmatprep.subr.mxu0 0.0
        %640 = vmatpush1.msra.mxu0 %v610
        %641 = vmatprep.subr.mxu0 0.0
        %642 = vmatpush1.msra.mxu0 %v611
        %643 = vmatprep.subr.mxu0 0.0
        %644 = vmatpush1.msra.mxu0 %v612
        %645 = vmatprep.subr.mxu0 0.0
        %646 = vmatpush1.msra.mxu0 0.0
        %647 = vmatprep.subr.mxu0 0.0
        %648 = vmatpush1.msra.mxu0 0.0
        %649 = vmatprep.subr.mxu0 0.0
        %650 = vmatpush1.msra.mxu0 0.0
        %651 = vmatprep.subr.mxu0 0.0
        %652 = vmatpush1.msra.mxu0 0.0
        %653 = vmatprep.subr.mxu0 0.0
        %654 = vmatpush1.msra.mxu0 0.0
        %655 = vmatprep.subr.mxu0 0.0
        %656 = vmatpush1.msra.mxu0 0.0
        %657 = vmatprep.subr.mxu0 0.0
        %658 = vmatpush1.msra.mxu0 0.0
        %659 = vmatprep.subr.mxu0 0.0
        %660 = vmatpush1.msra.mxu0 0.0
        %661 = vmatprep.subr.mxu0 0.0
        %662 = vmatpush1.msra.mxu0 0.0
        %663 = vmatprep.subr.mxu0 0.0
        %664 = vmatpush1.msra.mxu0 0.0
        %665 = vmatprep.subr.mxu0 0.0
        %666 = vmatpush1.msra.mxu0 0.0
        %667 = vmatprep.subr.mxu0 0.0
        %668 = vmatpush1.msra.mxu0 0.0
        %669 = vmatprep.subr.mxu0 0.0
        %670 = vmatpush1.msra.mxu0 0.0
        %671 = vmatprep.subr.mxu0 0.0
        %672 = vmatpush1.msra.mxu0 0.0
        %673 = vmatprep.subr.mxu0 0.0
        %674 = vmatpush1.msra.mxu0 0.0
        %675 = vmatprep.subr.mxu0 0.0
        %676 = vmatpush1.msra.mxu0 0.0
        %677 = vmatprep.mubr.f32.mxu0 0.0
        %678 = vmatmul.mubr.f32.gmra.mrb[0].mxu0 %v593
        %v679 = vpop.f32.mrb[0].mxu0
        %v680 = vadd.f32 0.0, %v679
        %v681 = vpop.f32.mrb[0].mxu0
        %682 = vmatprep.mubr.f32.mxu0 0.0
        %683 = vmatmul.mubr.f32.gmra.mrb[0].mxu0 %v594
        %v684 = vpop.f32.mrb[0].mxu0
        %v685 = vadd.f32 0.0, %v684
        %v686 = vpop.f32.mrb[0].mxu0
        %687 = vdwg.mxu0
        %v688 = vadd.f32 %v595, %v680
        %v689 = vadd.f32 %v596, %v685
        %690 = vst.msk [vmem:[#allocation3] sm:$0xff] %vm495, %v688
        %691 = vst.msk [vmem:[#allocation3 + $0x8] sm:$0xff] %vm495, %v689
        // Predicated region
        $region81: #{gpt2_forward.9} parent=47 // pred_check
          %p692 = pneg %p426
        $region82: #{gpt2_forward.9} parent=47 // pred_check_branch
          %694 = sbr.rel (%p692) target = $region84
        $region83: #{gpt2_forward.9} parent=47 // pred_region
          %v695 = vld [vmem:[#allocation3] sm:$0xff]
          %v696 = vld [vmem:[#allocation3 + $0x8] sm:$0xff]
          %v697 = vld [vmem:[#allocation15] sm:$0x1]
          %v699 = vlaneseq
          %v700 = vshrl.u32 %v699, 7
          %v701 = vsub.s32 0, %v700
          %v702 = vrot.slane %v697, %v701
          %v704 = vadd.f32 %v695, %v702
          %v705 = vadd.f32 %v696, %v702
          %v706 = vld [vmem:[%s368] sm:$0xff]
          %v707 = vld [vmem:[%s368 + $0x8] sm:$0xff]
          %v708 = vadd.f32 %v706, %v704
          %v709 = vadd.f32 %v707, %v705
          %710 = vst.msk [vmem:[%s422] sm:$0xff] %vm495, %v708
          %711 = vst.msk [vmem:[%s422 + $0x8] sm:$0xff] %vm495, %v709
        $region84: #{gpt2_forward.9} parent=47 // pred_fallthru
          _
        %s712 = sand.u32 %s225, 1
        %s713 = scalar_lea.sflag [#allocation6], %s712
        %s714 = sand.u32 %s225, 1
        %s715 = smul.addr %s714, 16
        %s716 = scalar_lea.vmem [#allocation16], %s715
        // Predicated region
        $region85: #{gpt2_forward.9} parent=47 // pred_check
          %p717 = pneg %p235
        $region86: #{gpt2_forward.9} parent=47 // pred_check_branch
          %719 = sbr.rel (%p717) target = $region88
        $region87: #{gpt2_forward.9} parent=47 // pred_region
          %s720 = smul.u32 2, %s33
          %s722 = ssub.s32 256, 256
          %723 = vsyncadd %s713, %s722
          %s724 = smul.addr %s32, 2
          %s725 = sadd.s32 %s720, %s724
          %s726 = smul.addr %s725, 128
          %s727 = scalar_lea.hbm %s7, %s726
          %s728 = sshll.u32 %s716, 4
          %s729 = int_to_ptr.vmem [resolvable:$true] %s728
          %734 = dma.vmem_to_hbm [thread:$0]  %s729, 256, %s727, %s713, 128, 128, 8
        $region88: #{gpt2_forward.9} parent=47 // pred_fallthru
          _
      $region48: #{gpt2_forward.9} parent=5 // pred_fallthru
        _
      %p735 = scmp.le.s32.totalorder 2, %s22
      // Predicated region
      $region89: #{gpt2_forward.9} parent=5 // pred_check
        %p736 = pneg %p735
      $region90: #{gpt2_forward.9} parent=5 // pred_check_branch
        %738 = sbr.rel (%p736) target = $region92
      $region91: #{gpt2_forward.9} parent=5 // pred_region
        %s739 = ssub.s32 %s22, 2
        // Predicated region
        $region93: #{gpt2_forward.9} parent=91 // pred_check
          %p740 = pneg %p241
        $region94: #{gpt2_forward.9} parent=91 // pred_check_branch
          %742 = sbr.rel (%p740) target = $region96
        $region95: #{gpt2_forward.9} parent=91 // pred_region
          %s743 = sand.u32 %s226, 1
          %s744 = scalar_lea.sflag [#allocation6], %s743
          %s745 = sand.u32 %s226, 1
          %s746 = smul.addr %s745, 16
          %s747 = scalar_lea.vmem [#allocation16], %s746
          %748 = dma.done %s744, 256
        $region96: #{gpt2_forward.9} parent=91 // pred_fallthru
          _
      $region92: #{gpt2_forward.9} parent=5 // pred_fallthru
        _
    $region6: #{gpt2_forward.9} parent=1 // loop_footer
      %s26 = sadd.s32 1, %s22
    $region7: #{gpt2_forward.9} parent=1 // loop_footer_branch
      %21 = sbr.rel target = $region3
    $region8: #{gpt2_forward.9} parent=1 // loop_exit
      _
    %749 = vsyncpa [#allocation5], 1
    %s750 = scalar_lea.sflag [#allocation5], 1
    %751 = vsyncpa %s750, 1
    %752 = vsyncpa [#allocation8], 1
    %753 = vsyncpa [#allocation11], 1
    %754 = vsyncpa [#allocation14], 1
    %755 = vsyncpa [#allocation6], 1
    %s756 = scalar_lea.sflag [#allocation6], 1
    %757 = vsyncpa %s756, 1

// kernel: gpt2_forward.8
$region0: #{gpt2_forward.8}
  #allocation0 [shape = 'u32[]', space=smem, size = 0x4, offset = 0x4, fixed_abs, tag = 'smem constant byte address 0x4 - core index']
  #allocation1 [shape = 'u32[144,128]{1,0:T(1,128)}', space=vmem, size = 0x12000, scoped, tag = 'internal scratch']
  #allocation2 [shape = 'f32[4,16,1]{2,1,0:T(8,128)}', space=vmem, size = 0x8000, scoped, tag = 'scratch operand']
  #allocation3 [shape = 'f32[4,16,1]{2,1,0:T(8,128)}', space=vmem, size = 0x8000, scoped, tag = 'scratch operand']
  #allocation4 [shape = 'f32[4,16,8]{2,1,0:T(8,128)}', space=vmem, size = 0x8000, scoped, tag = 'scratch operand']
  %s0 = inlined_call_operand.hbm [shape: f32[2,16,32], index: 0, kind: input, shape index: {}]
  %s1 = inlined_call_operand.hbm [shape: f32[2,4,16,8], index: 1, kind: input, shape index: {}]
  %s2 = inlined_call_operand.hbm [shape: f32[2,4,16,8], index: 2, kind: input, shape index: {}]
  %s3 = inlined_call_operand.hbm [shape: f32[2,4,16,8], index: 3, kind: input, shape index: {}]
  %s4 = inlined_call_operand.hbm [shape: f32[4,8,32], index: 4, kind: input, shape index: {}]
  %s5 = inlined_call_operand.hbm [shape: f32[1,32], index: 5, kind: input, shape index: {}]
  %s6 = inlined_call_operand.hbm [shape: f32[2,16,32], index: 6, kind: output, shape index: {}]
  %s7 = sld [smem:[#allocation0]]
  $region93: #{gpt2_forward.8} parent=0
    _
  %s9 = ssub.s32 1, %s7
  %s10 = scalar_select 0, %s9, %s7
  $region1: #{gpt2_forward.8} parent=0
    #allocation5 [shape = 'u8[16384]{0}', space=vmem, size = 0x4000, scoped, tag = 'input window, operand 0']
    #allocation6 [shape = 's32[2]{0}', space=sflag, size = 0x8, scoped, tag = 'scoped memory for gpt2_forward.8']
    #allocation7 [shape = 's32[2]{0}', space=sflag, size = 0x8, scoped, tag = 'scoped memory for gpt2_forward.8']
    #allocation8 [shape = 'u8[65536]{0}', space=vmem, size = 0x10000, scoped, tag = 'input window, operand 1']
    #allocation9 [shape = 's32[2]{0}', space=sflag, size = 0x8, scoped, tag = 'scoped memory for gpt2_forward.8']
    #allocation10 [shape = 'u8[65536]{0}', space=vmem, size = 0x10000, scoped, tag = 'input window, operand 2']
    #allocation11 [shape = 'u8[65536]{0}', space=vmem, size = 0x10000, scoped, tag = 'input window, operand 3']
    #allocation12 [shape = 's32[2]{0}', space=sflag, size = 0x8, scoped, tag = 'scoped memory for gpt2_forward.8']
    #allocation13 [shape = 'u8[16384]{0}', space=vmem, size = 0x4000, scoped, tag = 'input window, operand 4, single buffered']
    #allocation14 [shape = 'u8[512]{0}', space=vmem, size = 0x400, scoped, tag = 'input window, operand 5, single buffered']
    #allocation15 [shape = 's32[1]{0}', space=sflag, size = 0x4, scoped, tag = 'scoped memory for gpt2_forward.8']
    #allocation16 [shape = 'u8[16384]{0}', space=vmem, size = 0x4000, scoped, tag = 'output window, operand 0']
    %11 = vsyncpa [#allocation6], 0
    %s12 = scalar_lea.sflag [#allocation6], 1
    %13 = vsyncpa %s12, 0
    %14 = vsyncpa [#allocation9], 0
    %s15 = scalar_lea.sflag [#allocation9], 1
    %16 = vsyncpa %s15, 0
    %17 = vsyncpa [#allocation12], 0
    %s18 = scalar_lea.sflag [#allocation12], 1
    %19 = vsyncpa %s18, 0
    %20 = vsyncpa [#allocation15], 0
    %21 = vsyncpa [#allocation7], 0
    %s22 = scalar_lea.sflag [#allocation7], 1
    %23 = vsyncpa %s22, 0
    loop: start=0, step=1, limit=4
    $region2: #{gpt2_forward.8} parent=1 // loop_pre_header
      _
    $region3: #{gpt2_forward.8} parent=1 // loop_header
      %s25 = sphi 0, %s29
      %p26 = scmp.ge.s32.totalorder %s25, 4
      %s32 = sphi 0, %s51
      %s33 = sphi 0, %s47
      %s34 = sphi 0, %s43
      %s35 = sphi 0, %s32
      %s36 = sphi 0, %s33
      %s37 = sphi 0, %s34
      %s38 = sphi 0, %s35
      %s39 = sphi 0, %s36
      %s40 = sphi 0, %s37
      %s56 = sphi 0, %s58
      %s59 = sphi 0, %s56
      %s60 = sphi 0, %s59
      %s76 = sphi 0, %s60
      %s84 = sphi 0, %s86
      %s87 = sphi 0, %s84
      %s88 = sphi 0, %s87
      %s104 = sphi 0, %s88
      %s116 = sphi 0, %s118
      %s119 = sphi 0, %s116
      %s120 = sphi 0, %s119
      %s136 = sphi 0, %s120
      %s148 = sphi 0, %s150
      %s151 = sphi 0, %s148
      %s152 = sphi 0, %s151
      %s168 = sphi 0, %s152
      %s172 = sphi 0, %s172
      %s174 = sphi 0, %s172
      %s175 = sphi 0, %s174
      %s189 = sphi 0, %s175
      %s193 = sphi 0, %s193
      %s195 = sphi 0, %s193
      %s196 = sphi 0, %s195
      %s210 = sphi 0, %s196
      %s218 = sphi 0, %s220
      %s221 = sphi 0, %s218
      %s222 = sphi 0, %s221
      %s238 = sphi 0, %s222
    $region4: #{gpt2_forward.8} parent=1 // loop_header_branch
      %28 = sbr.rel (%p26) target = $region8
    $region5: #{gpt2_forward.8} parent=1 // loop_body
      %s30 = ssub.s32 %s25, 1
      %s31 = ssub.s32 %s25, 2
      %s41 = sadd.s32 1, %s34
      %p42 = scmp.ge.s32.totalorder %s41, 1
      %s43 = scalar_select %p42, 0, %s41
      %s44 = sadd.s32 1, %s33
      %s45 = scalar_select %p42, %s44, %s33
      %p46 = scmp.ge.s32.totalorder %s45, 1
      %s47 = scalar_select %p46, 0, %s45
      %s48 = sadd.s32 1, %s32
      %s49 = scalar_select %p46, %s48, %s32
      %p50 = scmp.ge.s32.totalorder %s49, 2
      %s51 = scalar_select %p50, 0, %s49
      %s52 = ssub.s32 %s32, %s51
      %s53 = ssub.s32 %s33, %s47
      %s54 = sor.u32 %s52, %s53
      %p55 = scmp.eq.s32.totalorder %s54, 0
      %s57 = sadd.s32 %s56, 1
      %s58 = scalar_select %p55, %s56, %s57
      %p61 = pneg %p55
      %p62 = scmp.eq.s32.totalorder %s25, 1
      %p63 = por %p61, %p62
      %p64 = scmp.ne.s32.totalorder %s56, %s59
      %p65 = scmp.eq.s32.totalorder %s25, 0
      %p66 = por %p64, %p65
      %p67 = scmp.ne.s32.totalorder %s56, %s59
      %p68 = scmp.eq.s32.totalorder %s30, 1
      %p69 = por %p67, %p68
      %p70 = scmp.ne.s32.totalorder %s59, %s60
      %p71 = scmp.eq.s32.totalorder %s30, 0
      %p72 = por %p70, %p71
      %p73 = scmp.ne.s32.totalorder %s59, %s60
      %p74 = scmp.eq.s32.totalorder %s31, 1
      %p75 = por %p73, %p74
      %p77 = scmp.ne.s32.totalorder %s60, %s76
      %p78 = scmp.eq.s32.totalorder %s31, 0
      %p79 = por %p77, %p78
      %s80 = ssub.s32 %s32, %s51
      %s81 = ssub.s32 %s33, %s47
      %s82 = sor.u32 %s80, %s81
      %p83 = scmp.eq.s32.totalorder %s82, 0
      %s85 = sadd.s32 %s84, 1
      %s86 = scalar_select %p83, %s84, %s85
      %p89 = pneg %p83
      %p90 = scmp.eq.s32.totalorder %s25, 1
      %p91 = por %p89, %p90
      %p92 = scmp.ne.s32.totalorder %s84, %s87
      %p93 = scmp.eq.s32.totalorder %s25, 0
      %p94 = por %p92, %p93
      %p95 = scmp.ne.s32.totalorder %s84, %s87
      %p96 = scmp.eq.s32.totalorder %s30, 1
      %p97 = por %p95, %p96
      %p98 = scmp.ne.s32.totalorder %s87, %s88
      %p99 = scmp.eq.s32.totalorder %s30, 0
      %p100 = por %p98, %p99
      %p101 = scmp.ne.s32.totalorder %s87, %s88
      %p102 = scmp.eq.s32.totalorder %s31, 1
      %p103 = por %p101, %p102
      %p105 = scmp.ne.s32.totalorder %s88, %s104
      %p106 = scmp.eq.s32.totalorder %s31, 0
      %p107 = por %p105, %p106
      %p108 = scmp.lt.s32.totalorder %s34, %s33
      %s109 = scalar_select %p108, %s34, %s33
      %p110 = scmp.lt.s32.totalorder %s43, %s47
      %s111 = scalar_select %p110, %s43, %s47
      %s112 = ssub.s32 %s32, %s51
      %s113 = ssub.s32 %s109, %s111
      %s114 = sor.u32 %s112, %s113
      %p115 = scmp.eq.s32.totalorder %s114, 0
      %s117 = sadd.s32 %s116, 1
      %s118 = scalar_select %p115, %s116, %s117
      %p121 = pneg %p115
      %p122 = scmp.eq.s32.totalorder %s25, 1
      %p123 = por %p121, %p122
      %p124 = scmp.ne.s32.totalorder %s116, %s119
      %p125 = scmp.eq.s32.totalorder %s25, 0
      %p126 = por %p124, %p125
      %p127 = scmp.ne.s32.totalorder %s116, %s119
      %p128 = scmp.eq.s32.totalorder %s30, 1
      %p129 = por %p127, %p128
      %p130 = scmp.ne.s32.totalorder %s119, %s120
      %p131 = scmp.eq.s32.totalorder %s30, 0
      %p132 = por %p130, %p131
      %p133 = scmp.ne.s32.totalorder %s119, %s120
      %p134 = scmp.eq.s32.totalorder %s31, 1
      %p135 = por %p133, %p134
      %p137 = scmp.ne.s32.totalorder %s120, %s136
      %p138 = scmp.eq.s32.totalorder %s31, 0
      %p139 = por %p137, %p138
      %p140 = scmp.lt.s32.totalorder %s34, %s33
      %s141 = scalar_select %p140, %s34, %s33
      %p142 = scmp.lt.s32.totalorder %s43, %s47
      %s143 = scalar_select %p142, %s43, %s47
      %s144 = ssub.s32 %s32, %s51
      %s145 = ssub.s32 %s141, %s143
      %s146 = sor.u32 %s144, %s145
      %p147 = scmp.eq.s32.totalorder %s146, 0
      %s149 = sadd.s32 %s148, 1
      %s150 = scalar_select %p147, %s148, %s149
      %p153 = pneg %p147
      %p154 = scmp.eq.s32.totalorder %s25, 1
      %p155 = por %p153, %p154
      %p156 = scmp.ne.s32.totalorder %s148, %s151
      %p157 = scmp.eq.s32.totalorder %s25, 0
      %p158 = por %p156, %p157
      %p159 = scmp.ne.s32.totalorder %s148, %s151
      %p160 = scmp.eq.s32.totalorder %s30, 1
      %p161 = por %p159, %p160
      %p162 = scmp.ne.s32.totalorder %s151, %s152
      %p163 = scmp.eq.s32.totalorder %s30, 0
      %p164 = por %p162, %p163
      %p165 = scmp.ne.s32.totalorder %s151, %s152
      %p166 = scmp.eq.s32.totalorder %s31, 1
      %p167 = por %p165, %p166
      %p169 = scmp.ne.s32.totalorder %s152, %s168
      %p170 = scmp.eq.s32.totalorder %s31, 0
      %p171 = por %p169, %p170
      %s173 = sadd.s32 %s172, 1
      %p176 = scmp.eq.s32.totalorder %s25, 1
      %p177 = scmp.ne.s32.totalorder %s172, %s174
      %p178 = scmp.eq.s32.totalorder %s25, 0
      %p179 = por %p177, %p178
      %p180 = scmp.ne.s32.totalorder %s172, %s174
      %p181 = scmp.eq.s32.totalorder %s30, 1
      %p182 = por %p180, %p181
      %p183 = scmp.ne.s32.totalorder %s174, %s175
      %p184 = scmp.eq.s32.totalorder %s30, 0
      %p185 = por %p183, %p184
      %p186 = scmp.ne.s32.totalorder %s174, %s175
      %p187 = scmp.eq.s32.totalorder %s31, 1
      %p188 = por %p186, %p187
      %p190 = scmp.ne.s32.totalorder %s175, %s189
      %p191 = scmp.eq.s32.totalorder %s31, 0
      %p192 = por %p190, %p191
      %s194 = sadd.s32 %s193, 1
      %p197 = scmp.eq.s32.totalorder %s25, 1
      %p198 = scmp.ne.s32.totalorder %s193, %s195
      %p199 = scmp.eq.s32.totalorder %s25, 0
      %p200 = por %p198, %p199
      %p201 = scmp.ne.s32.totalorder %s193, %s195
      %p202 = scmp.eq.s32.totalorder %s30, 1
      %p203 = por %p201, %p202
      %p204 = scmp.ne.s32.totalorder %s195, %s196
      %p205 = scmp.eq.s32.totalorder %s30, 0
      %p206 = por %p204, %p205
      %p207 = scmp.ne.s32.totalorder %s195, %s196
      %p208 = scmp.eq.s32.totalorder %s31, 1
      %p209 = por %p207, %p208
      %p211 = scmp.ne.s32.totalorder %s196, %s210
      %p212 = scmp.eq.s32.totalorder %s31, 0
      %p213 = por %p211, %p212
      %s214 = ssub.s32 %s32, %s51
      %s215 = ssub.s32 %s33, %s47
      %s216 = sor.u32 %s214, %s215
      %p217 = scmp.eq.s32.totalorder %s216, 0
      %s219 = sadd.s32 %s218, 1
      %s220 = scalar_select %p217, %s218, %s219
      %p223 = pneg %p217
      %p224 = scmp.eq.s32.totalorder %s25, 1
      %p225 = por %p223, %p224
      %p226 = scmp.ne.s32.totalorder %s218, %s221
      %p227 = scmp.eq.s32.totalorder %s25, 0
      %p228 = por %p226, %p227
      %p229 = scmp.ne.s32.totalorder %s218, %s221
      %p230 = scmp.eq.s32.totalorder %s30, 1
      %p231 = por %p229, %p230
      %p232 = scmp.ne.s32.totalorder %s221, %s222
      %p233 = scmp.eq.s32.totalorder %s30, 0
      %p234 = por %p232, %p233
      %p235 = scmp.ne.s32.totalorder %s221, %s222
      %p236 = scmp.eq.s32.totalorder %s31, 1
      %p237 = por %p235, %p236
      %p239 = scmp.ne.s32.totalorder %s222, %s238
      %p240 = scmp.eq.s32.totalorder %s31, 0
      %p241 = por %p239, %p240
      %p242 = scmp.le.s32.totalorder 1, %s25
      %p243 = scmp.lt.s32.totalorder %s25, 3
      %p244 = pnand %p242, %p243
      %p245 = pneg %p244
      // Predicated region
      $region9: #{gpt2_forward.8} parent=5 // pred_check
        _
      $region10: #{gpt2_forward.8} parent=5 // pred_check_branch
        %247 = sbr.rel (%p244) target = $region12
      $region11: #{gpt2_forward.8} parent=5 // pred_region
        %s248 = ssub.s32 %s25, 1
        // Predicated region
        $region13: #{gpt2_forward.8} parent=11 // pred_check
          %p249 = pneg %p185
        $region14: #{gpt2_forward.8} parent=11 // pred_check_branch
          %251 = sbr.rel (%p249) target = $region16
        $region15: #{gpt2_forward.8} parent=11 // pred_region
          %s253 = ssub.s32 512, 512
          %254 = vsyncadd [#allocation12], %s253
          %s255 = sshll.u32 [#allocation13], 4
          %s256 = int_to_ptr.vmem [resolvable:$true] %s255
          %261 = dma.hbm_to_vmem [thread:$0]  %s4, 512, %s256, [#allocation12], 128, 128, 8
        $region16: #{gpt2_forward.8} parent=11 // pred_fallthru
          _
        // Predicated region
        $region17: #{gpt2_forward.8} parent=11 // pred_check
          %p262 = pneg %p206
        $region18: #{gpt2_forward.8} parent=11 // pred_check_branch
          %264 = sbr.rel (%p262) target = $region20
        $region19: #{gpt2_forward.8} parent=11 // pred_region
          %s266 = ssub.s32 16, 16
          %267 = vsyncadd [#allocation15], %s266
          %s269 = sshll.u32 [#allocation14], 4
          %s270 = int_to_ptr.vmem [resolvable:$true] %s269
          %272 = dma.hbm_to_vmem [thread:$0]  %s5, 16, %s270, [#allocation15]
        $region20: #{gpt2_forward.8} parent=11 // pred_fallthru
          _
      $region12: #{gpt2_forward.8} parent=5 // pred_fallthru
        _
      %p273 = scmp.lt.s32.totalorder %s25, 2
      // Predicated region
      $region21: #{gpt2_forward.8} parent=5 // pred_check
        %p274 = pneg %p273
      $region22: #{gpt2_forward.8} parent=5 // pred_check_branch
        %276 = sbr.rel (%p274) target = $region24
      $region23: #{gpt2_forward.8} parent=5 // pred_region
        // Predicated region
        $region25: #{gpt2_forward.8} parent=23 // pred_check
          %p277 = pneg %p66
        $region26: #{gpt2_forward.8} parent=23 // pred_check_branch
          %279 = sbr.rel (%p277) target = $region28
        $region27: #{gpt2_forward.8} parent=23 // pred_region
          %s280 = sand.u32 %s56, 1
          %s281 = scalar_lea.sflag [#allocation6], %s280
          %s282 = sand.u32 %s56, 1
          %s283 = smul.addr %s282, 16
          %s284 = scalar_lea.vmem [#allocation5], %s283
          %s285 = smul.u32 2, %s33
          %s287 = ssub.s32 256, 256
          %288 = vsyncadd %s281, %s287
          %s289 = smul.addr %s32, 2
          %s290 = sadd.s32 %s285, %s289
          %s291 = smul.addr %s290, 128
          %s292 = scalar_lea.hbm %s0, %s291
          %s293 = sshll.u32 %s284, 4
          %s294 = int_to_ptr.vmem [resolvable:$true] %s293
          %299 = dma.hbm_to_vmem [thread:$0]  %s292, 256, %s294, %s281, 128, 128, 8
        $region28: #{gpt2_forward.8} parent=23 // pred_fallthru
          _
        // Predicated region
        $region29: #{gpt2_forward.8} parent=23 // pred_check
          %p300 = pneg %p94
        $region30: #{gpt2_forward.8} parent=23 // pred_check_branch
          %302 = sbr.rel (%p300) target = $region32
        $region31: #{gpt2_forward.8} parent=23 // pred_region
          %s303 = sand.u32 %s25, 1
          %s304 = scalar_lea.sflag [#allocation9], %s303
          %s305 = sand.u32 %s84, 1
          %s306 = smul.addr %s305, 64
          %s307 = scalar_lea.vmem [#allocation8], %s306
          %s308 = smul.u32 2, %s33
          %s310 = ssub.s32 1024, 1024
          %311 = vsyncadd %s304, %s310
          %s312 = smul.addr %s32, 8
          %s313 = sadd.s32 %s308, %s312
          %s314 = smul.addr %s313, 128
          %s315 = scalar_lea.hbm %s1, %s314
          %s316 = sshll.u32 %s307, 4
          %s317 = int_to_ptr.vmem [resolvable:$true] %s316
          %322 = dma.hbm_to_vmem [thread:$0]  %s315, 1024, %s317, %s304, 128, 128, 8
        $region32: #{gpt2_forward.8} parent=23 // pred_fallthru
          _
        // Predicated region
        $region33: #{gpt2_forward.8} parent=23 // pred_check
          %p323 = pneg %p126
        $region34: #{gpt2_forward.8} parent=23 // pred_check_branch
          %325 = sbr.rel (%p323) target = $region36
        $region35: #{gpt2_forward.8} parent=23 // pred_region
          %s326 = sand.u32 %s25, 1
          %s327 = scalar_lea.sflag [#allocation9], %s326
          %s328 = sand.u32 %s116, 1
          %s329 = smul.addr %s328, 64
          %s330 = scalar_lea.vmem [#allocation10], %s329
          %p331 = scmp.lt.s32.totalorder %s34, %s33
          %s332 = scalar_select %p331, %s34, %s33
          %s333 = smul.u32 2, %s332
          %s335 = ssub.s32 1024, 1024
          %336 = vsyncadd %s327, %s335
          %s337 = smul.addr %s32, 8
          %s338 = sadd.s32 %s333, %s337
          %s339 = smul.addr %s338, 128
          %s340 = scalar_lea.hbm %s2, %s339
          %s341 = sshll.u32 %s330, 4
          %s342 = int_to_ptr.vmem [resolvable:$true] %s341
          %347 = dma.hbm_to_vmem [thread:$0]  %s340, 1024, %s342, %s327, 128, 128, 8
        $region36: #{gpt2_forward.8} parent=23 // pred_fallthru
          _
        // Predicated region
        $region37: #{gpt2_forward.8} parent=23 // pred_check
          %p348 = pneg %p158
        $region38: #{gpt2_forward.8} parent=23 // pred_check_branch
          %350 = sbr.rel (%p348) target = $region40
        $region39: #{gpt2_forward.8} parent=23 // pred_region
          %s351 = sand.u32 %s25, 1
          %s352 = scalar_lea.sflag [#allocation12], %s351
          %s353 = sand.u32 %s148, 1
          %s354 = smul.addr %s353, 64
          %s355 = scalar_lea.vmem [#allocation11], %s354
          %p356 = scmp.lt.s32.totalorder %s34, %s33
          %s357 = scalar_select %p356, %s34, %s33
          %s358 = smul.u32 2, %s357
          %s360 = ssub.s32 1024, 1024
          %361 = vsyncadd %s352, %s360
          %s362 = smul.addr %s32, 8
          %s363 = sadd.s32 %s358, %s362
          %s364 = smul.addr %s363, 128
          %s365 = scalar_lea.hbm %s3, %s364
          %s366 = sshll.u32 %s355, 4
          %s367 = int_to_ptr.vmem [resolvable:$true] %s366
          %372 = dma.hbm_to_vmem [thread:$0]  %s365, 1024, %s367, %s352, 128, 128, 8
        $region40: #{gpt2_forward.8} parent=23 // pred_fallthru
          _
      $region24: #{gpt2_forward.8} parent=5 // pred_fallthru
        _
      %p373 = scmp.le.s32.totalorder 1, %s25
      %p374 = scmp.lt.s32.totalorder %s25, 3
      %p375 = pnand %p373, %p374
      %p376 = pneg %p375
      // Predicated region
      $region41: #{gpt2_forward.8} parent=5 // pred_check
        _
      $region42: #{gpt2_forward.8} parent=5 // pred_check_branch
        %378 = sbr.rel (%p375) target = $region44
      $region43: #{gpt2_forward.8} parent=5 // pred_region
        %s379 = ssub.s32 %s25, 1
        %s380 = sand.u32 %s59, 1
        %s381 = scalar_lea.sflag [#allocation6], %s380
        %s382 = sand.u32 %s59, 1
        %s383 = smul.addr %s382, 16
        %s384 = scalar_lea.vmem [#allocation5], %s383
        // Predicated region
        $region45: #{gpt2_forward.8} parent=43 // pred_check
          %p385 = pneg %p72
        $region46: #{gpt2_forward.8} parent=43 // pred_check_branch
          %387 = sbr.rel (%p385) target = $region48
        $region47: #{gpt2_forward.8} parent=43 // pred_region
          %388 = dma.done %s381, 256
        $region48: #{gpt2_forward.8} parent=43 // pred_fallthru
          _
        %s389 = sand.u32 %s30, 1
        %s390 = scalar_lea.sflag [#allocation9], %s389
        %s391 = sand.u32 %s87, 1
        %s392 = smul.addr %s391, 64
        %s393 = scalar_lea.vmem [#allocation8], %s392
        // Predicated region
        $region49: #{gpt2_forward.8} parent=43 // pred_check
          %p394 = pneg %p100
        $region50: #{gpt2_forward.8} parent=43 // pred_check_branch
          %396 = sbr.rel (%p394) target = $region52
        $region51: #{gpt2_forward.8} parent=43 // pred_region
          %397 = dma.done %s390, 1024
        $region52: #{gpt2_forward.8} parent=43 // pred_fallthru
          _
        %s398 = sand.u32 %s30, 1
        %s399 = scalar_lea.sflag [#allocation9], %s398
        %s400 = sand.u32 %s119, 1
        %s401 = smul.addr %s400, 64
        %s402 = scalar_lea.vmem [#allocation10], %s401
        // Predicated region
        $region53: #{gpt2_forward.8} parent=43 // pred_check
          %p403 = pneg %p132
        $region54: #{gpt2_forward.8} parent=43 // pred_check_branch
          %405 = sbr.rel (%p403) target = $region56
        $region55: #{gpt2_forward.8} parent=43 // pred_region
          %406 = dma.done %s399, 1024
        $region56: #{gpt2_forward.8} parent=43 // pred_fallthru
          _
        %s407 = sand.u32 %s30, 1
        %s408 = scalar_lea.sflag [#allocation12], %s407
        %s409 = sand.u32 %s151, 1
        %s410 = smul.addr %s409, 64
        %s411 = scalar_lea.vmem [#allocation11], %s410
        // Predicated region
        $region57: #{gpt2_forward.8} parent=43 // pred_check
          %p412 = pneg %p164
        $region58: #{gpt2_forward.8} parent=43 // pred_check_branch
          %414 = sbr.rel (%p412) target = $region60
        $region59: #{gpt2_forward.8} parent=43 // pred_region
          %415 = dma.done %s408, 1024
        $region60: #{gpt2_forward.8} parent=43 // pred_fallthru
          _
        // Predicated region
        $region61: #{gpt2_forward.8} parent=43 // pred_check
          %p416 = pneg %p185
        $region62: #{gpt2_forward.8} parent=43 // pred_check_branch
          %418 = sbr.rel (%p416) target = $region64
        $region63: #{gpt2_forward.8} parent=43 // pred_region
          %419 = dma.done [#allocation12], 512
        $region64: #{gpt2_forward.8} parent=43 // pred_fallthru
          _
        // Predicated region
        $region65: #{gpt2_forward.8} parent=43 // pred_check
          %p420 = pneg %p206
        $region66: #{gpt2_forward.8} parent=43 // pred_check_branch
          %422 = sbr.rel (%p420) target = $region68
        $region67: #{gpt2_forward.8} parent=43 // pred_region
          %423 = dma.done [#allocation15], 16
        $region68: #{gpt2_forward.8} parent=43 // pred_fallthru
          _
        %s424 = sand.u32 %s59, 1
        %s425 = scalar_lea.sflag [#allocation6], %s424
        %s426 = sand.u32 %s59, 1
        %s427 = smul.addr %s426, 16
        %s428 = scalar_lea.vmem [#allocation5], %s427
        %p429 = pneg %p72
        %p430 = pneg %p69
        %s431 = sand.u32 %s30, 1
        %s432 = scalar_lea.sflag [#allocation9], %s431
        %s433 = sand.u32 %s87, 1
        %s434 = smul.addr %s433, 64
        %s435 = scalar_lea.vmem [#allocation8], %s434
        %p436 = pneg %p100
        %p437 = pneg %p97
        %s438 = sand.u32 %s30, 1
        %s439 = scalar_lea.sflag [#allocation9], %s438
        %s440 = sand.u32 %s119, 1
        %s441 = smul.addr %s440, 64
        %s442 = scalar_lea.vmem [#allocation10], %s441
        %p443 = pneg %p132
        %p444 = pneg %p129
        %s445 = sand.u32 %s30, 1
        %s446 = scalar_lea.sflag [#allocation12], %s445
        %s447 = sand.u32 %s151, 1
        %s448 = smul.addr %s447, 64
        %s449 = scalar_lea.vmem [#allocation11], %s448
        %p450 = pneg %p164
        %p451 = pneg %p161
        %p452 = pneg %p185
        %p453 = pneg %p182
        %p454 = pneg %p206
        %p455 = pneg %p203
        %p456 = pneg %p234
        %p457 = pneg %p231
        %s458 = sand.u32 %s221, 1
        %s459 = scalar_lea.sflag [#allocation7], %s458
        %s460 = sand.u32 %s221, 1
        %s461 = smul.addr %s460, 16
        %s462 = scalar_lea.vmem [#allocation16], %s461
        %s463 = smul.u32 2, %s36
        %s464 = smul.u32 2, %s36
        %p465 = scmp.lt.s32.totalorder %s37, %s36
        %s466 = scalar_select %p465, %s37, %s36
        %s467 = smul.u32 2, %s466
        %p468 = scmp.lt.s32.totalorder %s37, %s36
        %s469 = scalar_select %p468, %s37, %s36
        %s470 = smul.u32 2, %s469
        %s471 = smul.u32 2, %s36
        %p472 = scmp.eq.s32.totalorder %s37, 0
        // Predicated region
        $region69: #{gpt2_forward.8} parent=43 // pred_check
          %p473 = pneg %p472
        $region70: #{gpt2_forward.8} parent=43 // pred_check_branch
          %475 = sbr.rel (%p473) target = $region72
        $region71: #{gpt2_forward.8} parent=43 // pred_region
          %vm476 = vcmask 7168
          %477 = vst.msk [vmem:[#allocation2] sm:$0xff] %vm476, -1e+30
          %478 = vst.msk [vmem:[#allocation2 + $0x8] sm:$0xff] %vm476, -1e+30
          %479 = vst.msk [vmem:[#allocation2 + $0x10] sm:$0xff] %vm476, -1e+30
          %480 = vst.msk [vmem:[#allocation2 + $0x18] sm:$0xff] %vm476, -1e+30
          %481 = vst.msk [vmem:[#allocation2 + $0x20] sm:$0xff] %vm476, -1e+30
          %482 = vst.msk [vmem:[#allocation2 + $0x28] sm:$0xff] %vm476, -1e+30
          %483 = vst.msk [vmem:[#allocation2 + $0x30] sm:$0xff] %vm476, -1e+30
          %484 = vst.msk [vmem:[#allocation2 + $0x38] sm:$0xff] %vm476, -1e+30
          %485 = vst.msk [vmem:[#allocation3] sm:$0xff] %vm476, 0.0
          %486 = vst.msk [vmem:[#allocation3 + $0x8] sm:$0xff] %vm476, 0.0
          %487 = vst.msk [vmem:[#allocation3 + $0x10] sm:$0xff] %vm476, 0.0
          %488 = vst.msk [vmem:[#allocation3 + $0x18] sm:$0xff] %vm476, 0.0
          %489 = vst.msk [vmem:[#allocation3 + $0x20] sm:$0xff] %vm476, 0.0
          %490 = vst.msk [vmem:[#allocation3 + $0x28] sm:$0xff] %vm476, 0.0
          %491 = vst.msk [vmem:[#allocation3 + $0x30] sm:$0xff] %vm476, 0.0
          %492 = vst.msk [vmem:[#allocation3 + $0x38] sm:$0xff] %vm476, 0.0
          %vm493 = vcmask 64512
          %494 = vst.msk [vmem:[#allocation4] sm:$0xff] %vm493, 0.0
          %495 = vst.msk [vmem:[#allocation4 + $0x8] sm:$0xff] %vm493, 0.0
          %496 = vst.msk [vmem:[#allocation4 + $0x10] sm:$0xff] %vm493, 0.0
          %497 = vst.msk [vmem:[#allocation4 + $0x18] sm:$0xff] %vm493, 0.0
          %498 = vst.msk [vmem:[#allocation4 + $0x20] sm:$0xff] %vm493, 0.0
          %499 = vst.msk [vmem:[#allocation4 + $0x28] sm:$0xff] %vm493, 0.0
          %500 = vst.msk [vmem:[#allocation4 + $0x30] sm:$0xff] %vm493, 0.0
          %501 = vst.msk [vmem:[#allocation4 + $0x38] sm:$0xff] %vm493, 0.0
        $region72: #{gpt2_forward.8} parent=43 // pred_fallthru
          _
        %p502 = scmp.le.s32.totalorder %s37, %s36
        // Predicated region
        $region73: #{gpt2_forward.8} parent=43 // pred_check
          %p503 = pneg %p502
        $region74: #{gpt2_forward.8} parent=43 // pred_check_branch
          %505 = sbr.rel (%p503) target = $region76
        $region75: #{gpt2_forward.8} parent=43 // pred_region
          %v506 = vld [vmem:[%s393] sm:$0xff]
          %v507 = vld [vmem:[%s393 + $0x8] sm:$0xff]
          %v508 = vld [vmem:[%s393 + $0x10] sm:$0xff]
          %v509 = vld [vmem:[%s393 + $0x18] sm:$0xff]
          %v510 = vld [vmem:[%s393 + $0x20] sm:$0xff]
          %v511 = vld [vmem:[%s393 + $0x28] sm:$0xff]
          %v512 = vld [vmem:[%s393 + $0x30] sm:$0xff]
          %v513 = vld [vmem:[%s393 + $0x38] sm:$0xff]
          %v514 = vld [vmem:[%s402] sm:$0xff]
          %v515 = vld [vmem:[%s402 + $0x8] sm:$0xff]
          %v516 = vld [vmem:[%s402 + $0x10] sm:$0xff]
          %v517 = vld [vmem:[%s402 + $0x18] sm:$0xff]
          %v518 = vld [vmem:[%s402 + $0x20] sm:$0xff]
          %v519 = vld [vmem:[%s402 + $0x28] sm:$0xff]
          %v520 = vld [vmem:[%s402 + $0x30] sm:$0xff]
          %v521 = vld [vmem:[%s402 + $0x38] sm:$0xff]
          %v522 = vld [vmem:[%s411] sm:$0xff]
          %v523 = vld [vmem:[%s411 + $0x8] sm:$0xff]
          %v524 = vld [vmem:[%s411 + $0x10] sm:$0xff]
          %v525 = vld [vmem:[%s411 + $0x18] sm:$0xff]
          %v526 = vld [vmem:[%s411 + $0x20] sm:$0xff]
          %v527 = vld [vmem:[%s411 + $0x28] sm:$0xff]
          %v528 = vld [vmem:[%s411 + $0x30] sm:$0xff]
          %v529 = vld [vmem:[%s411 + $0x38] sm:$0xff]
          %vm530 = vcmask 64512
          %v532 = vsel %vm530, %v506, 0
          %v535 = vsel %vm530, %v507, 0
          %v538 = vsel %vm530, %v514, 0
          %v541 = vsel %vm530, %v515, 0
          %543 = vmatprep.subr.mxu0 0.0
          %544 = vmatpush1.xpose.msra.mxu0 %v538
          %545 = vmatprep.subr.mxu0 0.0
          %546 = vmatpush1.xpose.msra.mxu0 %v541
          %547 = vmatprep.subr.mxu0 0.0
          %548 = vmatpush1.xpose.msra.mxu0 0.0
          %549 = vmatprep.subr.mxu0 0.0
          %550 = vmatpush1.xpose.msra.mxu0 0.0
          %551 = vmatprep.subr.mxu0 0.0
          %552 = vmatpush1.xpose.msra.mxu0 0.0
          %553 = vmatprep.subr.mxu0 0.0
          %554 = vmatpush1.xpose.msra.mxu0 0.0
          %555 = vmatprep.subr.mxu0 0.0
          %556 = vmatpush1.xpose.msra.mxu0 0.0
          %557 = vmatprep.subr.mxu0 0.0
          %558 = vmatpush1.xpose.msra.mxu0 0.0
          %559 = vmatprep.subr.mxu0 0.0
          %560 = vmatpush1.xpose.msra.mxu0 0.0
          %561 = vmatprep.subr.mxu0 0.0
          %562 = vmatpush1.xpose.msra.mxu0 0.0
          %563 = vmatprep.subr.mxu0 0.0
          %564 = vmatpush1.xpose.msra.mxu0 0.0
          %565 = vmatprep.subr.mxu0 0.0
          %566 = vmatpush1.xpose.msra.mxu0 0.0
          %567 = vmatprep.subr.mxu0 0.0
          %568 = vmatpush1.xpose.msra.mxu0 0.0
          %569 = vmatprep.subr.mxu0 0.0
          %570 = vmatpush1.xpose.msra.mxu0 0.0
          %571 = vmatprep.subr.mxu0 0.0
          %572 = vmatpush1.xpose.msra.mxu0 0.0
          %573 = vmatprep.subr.mxu0 0.0
          %574 = vmatpush1.xpose.msra.mxu0 0.0
          %575 = vmatprep.subr.mxu0 0.0
          %576 = vmatpush1.xpose.msra.mxu0 0.0
          %577 = vmatprep.subr.mxu0 0.0
          %578 = vmatpush1.xpose.msra.mxu0 0.0
          %579 = vmatprep.subr.mxu0 0.0
          %580 = vmatpush1.xpose.msra.mxu0 0.0
          %581 = vmatprep.subr.mxu0 0.0
          %582 = vmatpush1.xpose.msra.mxu0 0.0
          %583 = vmatprep.subr.mxu0 0.0
          %584 = vmatpush1.xpose.msra.mxu0 0.0
          %585 = vmatprep.subr.mxu0 0.0
          %586 = vmatpush1.xpose.msra.mxu0 0.0
          %587 = vmatprep.subr.mxu0 0.0
          %588 = vmatpush1.xpose.msra.mxu0 0.0
          %589 = vmatprep.subr.mxu0 0.0
          %590 = vmatpush1.xpose.msra.mxu0 0.0
          %591 = vmatprep.subr.mxu0 0.0
          %592 = vmatpush1.xpose.msra.mxu0 0.0
          %593 = vmatprep.subr.mxu0 0.0
          %594 = vmatpush1.xpose.msra.mxu0 0.0
          %595 = vmatprep.subr.mxu0 0.0
          %596 = vmatpush1.xpose.msra.mxu0 0.0
          %597 = vmatprep.subr.mxu0 0.0
          %598 = vmatpush1.xpose.msra.mxu0 0.0
          %599 = vmatprep.subr.mxu0 0.0
          %600 = vmatpush1.xpose.msra.mxu0 0.0
          %601 = vmatprep.subr.mxu0 0.0
          %602 = vmatpush1.xpose.msra.mxu0 0.0
          %603 = vmatprep.subr.mxu0 0.0
          %604 = vmatpush1.xpose.msra.mxu0 0.0
          %605 = vmatprep.subr.mxu0 0.0
          %606 = vmatpush1.xpose.msra.mxu0 0.0
          %607 = vmatprep.mubr.f32.mxu0 0.0
          %608 = vmatmul.mubr.f32.gmra.mrb[0].mxu0 %v532
          %v609 = vpop.f32.mrb[0].mxu0
          %v610 = vadd.f32 0.0, %v609
          %v611 = vpop.f32.mrb[0].mxu0
          %612 = vmatprep.mubr.f32.mxu0 0.0
          %613 = vmatmul.mubr.f32.gmra.mrb[0].mxu0 %v535
          %v614 = vpop.f32.mrb[0].mxu0
          %v615 = vadd.f32 0.0, %v614
          %v616 = vpop.f32.mrb[0].mxu0
          %617 = vdwg.mxu0
          %v619 = vsel %vm530, %v508, 0
          %v622 = vsel %vm530, %v509, 0
          %v625 = vsel %vm530, %v516, 0
          %v628 = vsel %vm530, %v517, 0
          %630 = vmatprep.subr.mxu0 0.0
          %631 = vmatpush1.xpose.msra.mxu0 %v625
          %632 = vmatprep.subr.mxu0 0.0
          %633 = vmatpush1.xpose.msra.mxu0 %v628
          %634 = vmatprep.subr.mxu0 0.0
          %635 = vmatpush1.xpose.msra.mxu0 0.0
          %636 = vmatprep.subr.mxu0 0.0
          %637 = vmatpush1.xpose.msra.mxu0 0.0
          %638 = vmatprep.subr.mxu0 0.0
          %639 = vmatpush1.xpose.msra.mxu0 0.0
          %640 = vmatprep.subr.mxu0 0.0
          %641 = vmatpush1.xpose.msra.mxu0 0.0
          %642 = vmatprep.subr.mxu0 0.0
          %643 = vmatpush1.xpose.msra.mxu0 0.0
          %644 = vmatprep.subr.mxu0 0.0
          %645 = vmatpush1.xpose.msra.mxu0 0.0
          %646 = vmatprep.subr.mxu0 0.0
          %647 = vmatpush1.xpose.msra.mxu0 0.0
          %648 = vmatprep.subr.mxu0 0.0
          %649 = vmatpush1.xpose.msra.mxu0 0.0
          %650 = vmatprep.subr.mxu0 0.0
          %651 = vmatpush1.xpose.msra.mxu0 0.0
          %652 = vmatprep.subr.mxu0 0.0
          %653 = vmatpush1.xpose.msra.mxu0 0.0
          %654 = vmatprep.subr.mxu0 0.0
          %655 = vmatpush1.xpose.msra.mxu0 0.0
          %656 = vmatprep.subr.mxu0 0.0
          %657 = vmatpush1.xpose.msra.mxu0 0.0
          %658 = vmatprep.subr.mxu0 0.0
          %659 = vmatpush1.xpose.msra.mxu0 0.0
          %660 = vmatprep.subr.mxu0 0.0
          %661 = vmatpush1.xpose.msra.mxu0 0.0
          %662 = vmatprep.subr.mxu0 0.0
          %663 = vmatpush1.xpose.msra.mxu0 0.0
          %664 = vmatprep.subr.mxu0 0.0
          %665 = vmatpush1.xpose.msra.mxu0 0.0
          %666 = vmatprep.subr.mxu0 0.0
          %667 = vmatpush1.xpose.msra.mxu0 0.0
          %668 = vmatprep.subr.mxu0 0.0
          %669 = vmatpush1.xpose.msra.mxu0 0.0
          %670 = vmatprep.subr.mxu0 0.0
          %671 = vmatpush1.xpose.msra.mxu0 0.0
          %672 = vmatprep.subr.mxu0 0.0
          %673 = vmatpush1.xpose.msra.mxu0 0.0
          %674 = vmatprep.subr.mxu0 0.0
          %675 = vmatpush1.xpose.msra.mxu0 0.0
          %676 = vmatprep.subr.mxu0 0.0
          %677 = vmatpush1.xpose.msra.mxu0 0.0
          %678 = vmatprep.subr.mxu0 0.0
          %679 = vmatpush1.xpose.msra.mxu0 0.0
          %680 = vmatprep.subr.mxu0 0.0
          %681 = vmatpush1.xpose.msra.mxu0 0.0
          %682 = vmatprep.subr.mxu0 0.0
          %683 = vmatpush1.xpose.msra.mxu0 0.0
          %684 = vmatprep.subr.mxu0 0.0
          %685 = vmatpush1.xpose.msra.mxu0 0.0
          %686 = vmatprep.subr.mxu0 0.0
          %687 = vmatpush1.xpose.msra.mxu0 0.0
          %688 = vmatprep.subr.mxu0 0.0
          %689 = vmatpush1.xpose.msra.mxu0 0.0
          %690 = vmatprep.subr.mxu0 0.0
          %691 = vmatpush1.xpose.msra.mxu0 0.0
          %692 = vmatprep.subr.mxu0 0.0
          %693 = vmatpush1.xpose.msra.mxu0 0.0
          %694 = vmatprep.mubr.f32.mxu0 0.0
          %695 = vmatmul.mubr.f32.gmra.mrb[0].mxu0 %v619
          %v696 = vpop.f32.mrb[0].mxu0
          %v697 = vadd.f32 0.0, %v696
          %v698 = vpop.f32.mrb[0].mxu0
          %699 = vmatprep.mubr.f32.mxu0 0.0
          %700 = vmatmul.mubr.f32.gmra.mrb[0].mxu0 %v622
          %v701 = vpop.f32.mrb[0].mxu0
          %v702 = vadd.f32 0.0, %v701
          %v703 = vpop.f32.mrb[0].mxu0
          %704 = vdwg.mxu0
          %v706 = vsel %vm530, %v510, 0
          %v709 = vsel %vm530, %v511, 0
          %v712 = vsel %vm530, %v518, 0
          %v715 = vsel %vm530, %v519, 0
          %717 = vmatprep.subr.mxu0 0.0
          %718 = vmatpush1.xpose.msra.mxu0 %v712
          %719 = vmatprep.subr.mxu0 0.0
          %720 = vmatpush1.xpose.msra.mxu0 %v715
          %721 = vmatprep.subr.mxu0 0.0
          %722 = vmatpush1.xpose.msra.mxu0 0.0
          %723 = vmatprep.subr.mxu0 0.0
          %724 = vmatpush1.xpose.msra.mxu0 0.0
          %725 = vmatprep.subr.mxu0 0.0
          %726 = vmatpush1.xpose.msra.mxu0 0.0
          %727 = vmatprep.subr.mxu0 0.0
          %728 = vmatpush1.xpose.msra.mxu0 0.0
          %729 = vmatprep.subr.mxu0 0.0
          %730 = vmatpush1.xpose.msra.mxu0 0.0
          %731 = vmatprep.subr.mxu0 0.0
          %732 = vmatpush1.xpose.msra.mxu0 0.0
          %733 = vmatprep.subr.mxu0 0.0
          %734 = vmatpush1.xpose.msra.mxu0 0.0
          %735 = vmatprep.subr.mxu0 0.0
          %736 = vmatpush1.xpose.msra.mxu0 0.0
          %737 = vmatprep.subr.mxu0 0.0
          %738 = vmatpush1.xpose.msra.mxu0 0.0
          %739 = vmatprep.subr.mxu0 0.0
          %740 = vmatpush1.xpose.msra.mxu0 0.0
          %741 = vmatprep.subr.mxu0 0.0
          %742 = vmatpush1.xpose.msra.mxu0 0.0
          %743 = vmatprep.subr.mxu0 0.0
          %744 = vmatpush1.xpose.msra.mxu0 0.0
          %745 = vmatprep.subr.mxu0 0.0
          %746 = vmatpush1.xpose.msra.mxu0 0.0
          %747 = vmatprep.subr.mxu0 0.0
          %748 = vmatpush1.xpose.msra.mxu0 0.0
          %749 = vmatprep.subr.mxu0 0.0
          %750 = vmatpush1.xpose.msra.mxu0 0.0
          %751 = vmatprep.subr.mxu0 0.0
          %752 = vmatpush1.xpose.msra.mxu0 0.0
          %753 = vmatprep.subr.mxu0 0.0
          %754 = vmatpush1.xpose.msra.mxu0 0.0
          %755 = vmatprep.subr.mxu0 0.0
          %756 = vmatpush1.xpose.msra.mxu0 0.0
          %757 = vmatprep.subr.mxu0 0.0
          %758 = vmatpush1.xpose.msra.mxu0 0.0
          %759 = vmatprep.subr.mxu0 0.0
          %760 = vmatpush1.xpose.msra.mxu0 0.0
          %761 = vmatprep.subr.mxu0 0.0
          %762 = vmatpush1.xpose.msra.mxu0 0.0
          %763 = vmatprep.subr.mxu0 0.0
          %764 = vmatpush1.xpose.msra.mxu0 0.0
          %765 = vmatprep.subr.mxu0 0.0
          %766 = vmatpush1.xpose.msra.mxu0 0.0
          %767 = vmatprep.subr.mxu0 0.0
          %768 = vmatpush1.xpose.msra.mxu0 0.0
          %769 = vmatprep.subr.mxu0 0.0
          %770 = vmatpush1.xpose.msra.mxu0 0.0
          %771 = vmatprep.subr.mxu0 0.0
          %772 = vmatpush1.xpose.msra.mxu0 0.0
          %773 = vmatprep.subr.mxu0 0.0
          %774 = vmatpush1.xpose.msra.mxu0 0.0
          %775 = vmatprep.subr.mxu0 0.0
          %776 = vmatpush1.xpose.msra.mxu0 0.0
          %777 = vmatprep.subr.mxu0 0.0
          %778 = vmatpush1.xpose.msra.mxu0 0.0
          %779 = vmatprep.subr.mxu0 0.0
          %780 = vmatpush1.xpose.msra.mxu0 0.0
          %781 = vmatprep.mubr.f32.mxu0 0.0
          %782 = vmatmul.mubr.f32.gmra.mrb[0].mxu0 %v706
          %v783 = vpop.f32.mrb[0].mxu0
          %v784 = vadd.f32 0.0, %v783
          %v785 = vpop.f32.mrb[0].mxu0
          %786 = vmatprep.mubr.f32.mxu0 0.0
          %787 = vmatmul.mubr.f32.gmra.mrb[0].mxu0 %v709
          %v788 = vpop.f32.mrb[0].mxu0
          %v789 = vadd.f32 0.0, %v788
          %v790 = vpop.f32.mrb[0].mxu0
          %791 = vdwg.mxu0
          %v793 = vsel %vm530, %v512, 0
          %v796 = vsel %vm530, %v513, 0
          %v799 = vsel %vm530, %v520, 0
          %v802 = vsel %vm530, %v521, 0
          %804 = vmatprep.subr.mxu0 0.0
          %805 = vmatpush1.xpose.msra.mxu0 %v799
          %806 = vmatprep.subr.mxu0 0.0
          %807 = vmatpush1.xpose.msra.mxu0 %v802
          %808 = vmatprep.subr.mxu0 0.0
          %809 = vmatpush1.xpose.msra.mxu0 0.0
          %810 = vmatprep.subr.mxu0 0.0
          %811 = vmatpush1.xpose.msra.mxu0 0.0
          %812 = vmatprep.subr.mxu0 0.0
          %813 = vmatpush1.xpose.msra.mxu0 0.0
          %814 = vmatprep.subr.mxu0 0.0
          %815 = vmatpush1.xpose.msra.mxu0 0.0
          %816 = vmatprep.subr.mxu0 0.0
          %817 = vmatpush1.xpose.msra.mxu0 0.0
          %818 = vmatprep.subr.mxu0 0.0
          %819 = vmatpush1.xpose.msra.mxu0 0.0
          %820 = vmatprep.subr.mxu0 0.0
          %821 = vmatpush1.xpose.msra.mxu0 0.0
          %822 = vmatprep.subr.mxu0 0.0
          %823 = vmatpush1.xpose.msra.mxu0 0.0
          %824 = vmatprep.subr.mxu0 0.0
          %825 = vmatpush1.xpose.msra.mxu0 0.0
          %826 = vmatprep.subr.mxu0 0.0
          %827 = vmatpush1.xpose.msra.mxu0 0.0
          %828 = vmatprep.subr.mxu0 0.0
          %829 = vmatpush1.xpose.msra.mxu0 0.0
          %830 = vmatprep.subr.mxu0 0.0
          %831 = vmatpush1.xpose.msra.mxu0 0.0
          %832 = vmatprep.subr.mxu0 0.0
          %833 = vmatpush1.xpose.msra.mxu0 0.0
          %834 = vmatprep.subr.mxu0 0.0
          %835 = vmatpush1.xpose.msra.mxu0 0.0
          %836 = vmatprep.subr.mxu0 0.0
          %837 = vmatpush1.xpose.msra.mxu0 0.0
          %838 = vmatprep.subr.mxu0 0.0
          %839 = vmatpush1.xpose.msra.mxu0 0.0
          %840 = vmatprep.subr.mxu0 0.0
          %841 = vmatpush1.xpose.msra.mxu0 0.0
          %842 = vmatprep.subr.mxu0 0.0
          %843 = vmatpush1.xpose.msra.mxu0 0.0
          %844 = vmatprep.subr.mxu0 0.0
          %845 = vmatpush1.xpose.msra.mxu0 0.0
          %846 = vmatprep.subr.mxu0 0.0
          %847 = vmatpush1.xpose.msra.mxu0 0.0
          %848 = vmatprep.subr.mxu0 0.0
          %849 = vmatpush1.xpose.msra.mxu0 0.0
          %850 = vmatprep.subr.mxu0 0.0
          %851 = vmatpush1.xpose.msra.mxu0 0.0
          %852 = vmatprep.subr.mxu0 0.0
          %853 = vmatpush1.xpose.msra.mxu0 0.0
          %854 = vmatprep.subr.mxu0 0.0
          %855 = vmatpush1.xpose.msra.mxu0 0.0
          %856 = vmatprep.subr.mxu0 0.0
          %857 = vmatpush1.xpose.msra.mxu0 0.0
          %858 = vmatprep.subr.mxu0 0.0
          %859 = vmatpush1.xpose.msra.mxu0 0.0
          %860 = vmatprep.subr.mxu0 0.0
          %861 = vmatpush1.xpose.msra.mxu0 0.0
          %862 = vmatprep.subr.mxu0 0.0
          %863 = vmatpush1.xpose.msra.mxu0 0.0
          %864 = vmatprep.subr.mxu0 0.0
          %865 = vmatpush1.xpose.msra.mxu0 0.0
          %866 = vmatprep.subr.mxu0 0.0
          %867 = vmatpush1.xpose.msra.mxu0 0.0
          %868 = vmatprep.mubr.f32.mxu0 0.0
          %869 = vmatmul.mubr.f32.gmra.mrb[0].mxu0 %v793
          %v870 = vpop.f32.mrb[0].mxu0
          %v871 = vadd.f32 0.0, %v870
          %v872 = vpop.f32.mrb[0].mxu0
          %873 = vmatprep.mubr.f32.mxu0 0.0
          %874 = vmatmul.mubr.f32.gmra.mrb[0].mxu0 %v796
          %v875 = vpop.f32.mrb[0].mxu0
          %v876 = vadd.f32 0.0, %v875
          %v877 = vpop.f32.mrb[0].mxu0
          %878 = vdwg.mxu0
          %s879 = smul.u32 %s36, 16
          %v880 = vlaneseq
          %v881 = vshrl.u32 %v880, 7
          %v882 = vadd.s32 %v881, 8
          %v883 = vstv %s879
          %v884 = vadd.s32 %v883, %v881
          %v885 = vadd.s32 %v883, %v882
          %s886 = smul.u32 %s37, 16
          %v887 = vlaneseq
          %v888 = vand.u32 %v887, 127
          %v889 = vstv %s886
          %v890 = vadd.s32 %v889, %v888
          %vm891 = vcmp.le.s32.totalorder %v890, %v884
          %vm892 = vcmp.le.s32.totalorder %v890, %v885
          %v893 = vsel %vm891, 1, 0
          %v894 = vsel %vm892, 1, 0
          %vm895 = vcmp.eq.s32.totalorder %v893, 1
          %vm896 = vcmp.eq.s32.totalorder %v894, 1
          %v897 = vsel %vm895, %v610, -1e+30
          %v898 = vsel %vm896, %v615, -1e+30
          %v899 = vsel %vm895, %v697, -1e+30
          %v900 = vsel %vm896, %v702, -1e+30
          %v901 = vsel %vm895, %v784, -1e+30
          %v902 = vsel %vm896, %v789, -1e+30
          %v903 = vsel %vm895, %v871, -1e+30
          %v904 = vsel %vm896, %v876, -1e+30
          %v905 = vld [vmem:[#allocation2] sm:$0xff]
          %v906 = vld [vmem:[#allocation2 + $0x8] sm:$0xff]
          %v907 = vld [vmem:[#allocation2 + $0x10] sm:$0xff]
          %v908 = vld [vmem:[#allocation2 + $0x18] sm:$0xff]
          %v909 = vld [vmem:[#allocation2 + $0x20] sm:$0xff]
          %v910 = vld [vmem:[#allocation2 + $0x28] sm:$0xff]
          %v911 = vld [vmem:[#allocation2 + $0x30] sm:$0xff]
          %v912 = vld [vmem:[#allocation2 + $0x38] sm:$0xff]
          %vm913 = vcmask 130048
          %v914 = vsel %vm913, %v897, -inf
          %915 = vmax.xlane.f32.xlu0 %v914
          %v916 = vpop.xlane.xlu0 %915
          %v917 = vsel %vm913, %v898, -inf
          %918 = vmax.xlane.f32.xlu0 %v917
          %v919 = vpop.xlane.xlu0 %918
          %v920 = vsel %vm913, %v899, -inf
          %921 = vmax.xlane.f32.xlu0 %v920
          %v922 = vpop.xlane.xlu0 %921
          %v923 = vsel %vm913, %v900, -inf
          %924 = vmax.xlane.f32.xlu0 %v923
          %v925 = vpop.xlane.xlu0 %924
          %v926 = vsel %vm913, %v901, -inf
          %927 = vmax.xlane.f32.xlu0 %v926
          %v928 = vpop.xlane.xlu0 %927
          %v929 = vsel %vm913, %v902, -inf
          %930 = vmax.xlane.f32.xlu0 %v929
          %v931 = vpop.xlane.xlu0 %930
          %v932 = vsel %vm913, %v903, -inf
          %933 = vmax.xlane.f32.xlu0 %v932
          %v934 = vpop.xlane.xlu0 %933
          %v935 = vsel %vm913, %v904, -inf
          %936 = vmax.xlane.f32.xlu0 %v935
          %v937 = vpop.xlane.xlu0 %936
          %v938 = vmax.f32 %v905, %v916
          %v939 = vmax.f32 %v906, %v919
          %v940 = vmax.f32 %v907, %v922
          %v941 = vmax.f32 %v908, %v925
          %v942 = vmax.f32 %v909, %v928
          %v943 = vmax.f32 %v910, %v931
          %v944 = vmax.f32 %v911, %v934
          %v945 = vmax.f32 %v912, %v937
          %v946 = vsub.f32 %v905, %v938
          %v947 = vsub.f32 %v906, %v939
          %v948 = vsub.f32 %v907, %v940
          %v949 = vsub.f32 %v908, %v941
          %v950 = vsub.f32 %v909, %v942
          %v951 = vsub.f32 %v910, %v943
          %v952 = vsub.f32 %v911, %v944
          %v953 = vsub.f32 %v912, %v945
          %v954 = vmul.f32 %v946, 1.442695
          %v955 = vpow.pop %v954
          %v956 = vmul.f32 %v947, 1.442695
          %v957 = vpow.pop %v956
          %v958 = vmul.f32 %v948, 1.442695
          %v959 = vpow.pop %v958
          %v960 = vmul.f32 %v949, 1.442695
          %v961 = vpow.pop %v960
          %v962 = vmul.f32 %v950, 1.442695
          %v963 = vpow.pop %v962
          %v964 = vmul.f32 %v951, 1.442695
          %v965 = vpow.pop %v964
          %v966 = vmul.f32 %v952, 1.442695
          %v967 = vpow.pop %v966
          %v968 = vmul.f32 %v953, 1.442695
          %v969 = vpow.pop %v968
          %971 = vset.pattern.permute.xlu0 0
          %972 = vperm.xlu0 %971, %v938
          %v973 = vpop.permute.xlu0 %972
          %976 = vset.pattern.permute.xlu0 0
          %977 = vperm.xlu0 %976, %v939
          %v978 = vpop.permute.xlu0 %977
          %981 = vset.pattern.permute.xlu0 0
          %982 = vperm.xlu0 %981, %v940
          %v983 = vpop.permute.xlu0 %982
          %986 = vset.pattern.permute.xlu0 0
          %987 = vperm.xlu0 %986, %v941
          %v988 = vpop.permute.xlu0 %987
          %991 = vset.pattern.permute.xlu0 0
          %992 = vperm.xlu0 %991, %v942
          %v993 = vpop.permute.xlu0 %992
          %996 = vset.pattern.permute.xlu0 0
          %997 = vperm.xlu0 %996, %v943
          %v998 = vpop.permute.xlu0 %997
          %1001 = vset.pattern.permute.xlu0 0
          %1002 = vperm.xlu0 %1001, %v944
          %v1003 = vpop.permute.xlu0 %1002
          %1006 = vset.pattern.permute.xlu0 0
          %1007 = vperm.xlu0 %1006, %v945
          %v1008 = vpop.permute.xlu0 %1007
          %v1010 = vsub.f32 %v897, %v973
          %v1011 = vsub.f32 %v898, %v978
          %v1012 = vsub.f32 %v899, %v983
          %v1013 = vsub.f32 %v900, %v988
          %v1014 = vsub.f32 %v901, %v993
          %v1015 = vsub.f32 %v902, %v998
          %v1016 = vsub.f32 %v903, %v1003
          %v1017 = vsub.f32 %v904, %v1008
          %v1018 = vmul.f32 %v1010, 1.442695
          %v1019 = vpow.pop %v1018
          %v1020 = vmul.f32 %v1011, 1.442695
          %v1021 = vpow.pop %v1020
          %v1022 = vmul.f32 %v1012, 1.442695
          %v1023 = vpow.pop %v1022
          %v1024 = vmul.f32 %v1013, 1.442695
          %v1025 = vpow.pop %v1024
          %v1026 = vmul.f32 %v1014, 1.442695
          %v1027 = vpow.pop %v1026
          %v1028 = vmul.f32 %v1015, 1.442695
          %v1029 = vpow.pop %v1028
          %v1030 = vmul.f32 %v1016, 1.442695
          %v1031 = vpow.pop %v1030
          %v1032 = vmul.f32 %v1017, 1.442695
          %v1033 = vpow.pop %v1032
          %v1034 = vld [vmem:[#allocation3] sm:$0xff]
          %v1035 = vld [vmem:[#allocation3 + $0x8] sm:$0xff]
          %v1036 = vld [vmem:[#allocation3 + $0x10] sm:$0xff]
          %v1037 = vld [vmem:[#allocation3 + $0x18] sm:$0xff]
          %v1038 = vld [vmem:[#allocation3 + $0x20] sm:$0xff]
          %v1039 = vld [vmem:[#allocation3 + $0x28] sm:$0xff]
          %v1040 = vld [vmem:[#allocation3 + $0x30] sm:$0xff]
          %v1041 = vld [vmem:[#allocation3 + $0x38] sm:$0xff]
          %v1042 = vmul.f32 %v955, %v1034
          %v1043 = vmul.f32 %v957, %v1035
          %v1044 = vmul.f32 %v959, %v1036
          %v1045 = vmul.f32 %v961, %v1037
          %v1046 = vmul.f32 %v963, %v1038
          %v1047 = vmul.f32 %v965, %v1039
          %v1048 = vmul.f32 %v967, %v1040
          %v1049 = vmul.f32 %v969, %v1041
          %v1050 = vsel %vm913, %v1019, 0.0
          %1051 = vadd.xlane.f32.xlu0 %v1050
          %v1052 = vpop.xlane.xlu0 %1051
          %v1053 = vsel %vm913, %v1021, 0.0
          %1054 = vadd.xlane.f32.xlu0 %v1053
          %v1055 = vpop.xlane.xlu0 %1054
          %v1056 = vsel %vm913, %v1023, 0.0
          %1057 = vadd.xlane.f32.xlu0 %v1056
          %v1058 = vpop.xlane.xlu0 %1057
          %v1059 = vsel %vm913, %v1025, 0.0
          %1060 = vadd.xlane.f32.xlu0 %v1059
          %v1061 = vpop.xlane.xlu0 %1060
          %v1062 = vsel %vm913, %v1027, 0.0
          %1063 = vadd.xlane.f32.xlu0 %v1062
          %v1064 = vpop.xlane.xlu0 %1063
          %v1065 = vsel %vm913, %v1029, 0.0
          %1066 = vadd.xlane.f32.xlu0 %v1065
          %v1067 = vpop.xlane.xlu0 %1066
          %v1068 = vsel %vm913, %v1031, 0.0
          %1069 = vadd.xlane.f32.xlu0 %v1068
          %v1070 = vpop.xlane.xlu0 %1069
          %v1071 = vsel %vm913, %v1033, 0.0
          %1072 = vadd.xlane.f32.xlu0 %v1071
          %v1073 = vpop.xlane.xlu0 %1072
          %v1074 = vadd.f32 %v1042, %v1052
          %v1075 = vadd.f32 %v1043, %v1055
          %v1076 = vadd.f32 %v1044, %v1058
          %v1077 = vadd.f32 %v1045, %v1061
          %v1078 = vadd.f32 %v1046, %v1064
          %v1079 = vadd.f32 %v1047, %v1067
          %v1080 = vadd.f32 %v1048, %v1070
          %v1081 = vadd.f32 %v1049, %v1073
          %vm1082 = vcmask 7168
          %1083 = vst.msk [vmem:[#allocation3] sm:$0xff] %vm1082, %v1074
          %1084 = vst.msk [vmem:[#allocation3 + $0x8] sm:$0xff] %vm1082, %v1075
          %1085 = vst.msk [vmem:[#allocation3 + $0x10] sm:$0xff] %vm1082, %v1076
          %1086 = vst.msk [vmem:[#allocation3 + $0x18] sm:$0xff] %vm1082, %v1077
          %1087 = vst.msk [vmem:[#allocation3 + $0x20] sm:$0xff] %vm1082, %v1078
          %1088 = vst.msk [vmem:[#allocation3 + $0x28] sm:$0xff] %vm1082, %v1079
          %1089 = vst.msk [vmem:[#allocation3 + $0x30] sm:$0xff] %vm1082, %v1080
          %1090 = vst.msk [vmem:[#allocation3 + $0x38] sm:$0xff] %vm1082, %v1081
          %v1091 = vld [vmem:[#allocation4] sm:$0xff]
          %v1092 = vld [vmem:[#allocation4 + $0x8] sm:$0xff]
          %v1093 = vld [vmem:[#allocation4 + $0x10] sm:$0xff]
          %v1094 = vld [vmem:[#allocation4 + $0x18] sm:$0xff]
          %v1095 = vld [vmem:[#allocation4 + $0x20] sm:$0xff]
          %v1096 = vld [vmem:[#allocation4 + $0x28] sm:$0xff]
          %v1097 = vld [vmem:[#allocation4 + $0x30] sm:$0xff]
          %v1098 = vld [vmem:[#allocation4 + $0x38] sm:$0xff]
          %1100 = vset.pattern.permute.xlu0 0
          %1101 = vperm.xlu0 %1100, %v955
          %v1102 = vpop.permute.xlu0 %1101
          %1105 = vset.pattern.permute.xlu0 0
          %1106 = vperm.xlu0 %1105, %v957
          %v1107 = vpop.permute.xlu0 %1106
          %1110 = vset.pattern.permute.xlu0 0
          %1111 = vperm.xlu0 %1110, %v959
          %v1112 = vpop.permute.xlu0 %1111
          %1115 = vset.pattern.permute.xlu0 0
          %1116 = vperm.xlu0 %1115, %v961
          %v1117 = vpop.permute.xlu0 %1116
          %1120 = vset.pattern.permute.xlu0 0
          %1121 = vperm.xlu0 %1120, %v963
          %v1122 = vpop.permute.xlu0 %1121
          %1125 = vset.pattern.permute.xlu0 0
          %1126 = vperm.xlu0 %1125, %v965
          %v1127 = vpop.permute.xlu0 %1126
          %1130 = vset.pattern.permute.xlu0 0
          %1131 = vperm.xlu0 %1130, %v967
          %v1132 = vpop.permute.xlu0 %1131
          %1135 = vset.pattern.permute.xlu0 0
          %1136 = vperm.xlu0 %1135, %v969
          %v1137 = vpop.permute.xlu0 %1136
          %v1139 = vmul.f32 %v1102, %v1091
          %v1140 = vmul.f32 %v1107, %v1092
          %v1141 = vmul.f32 %v1112, %v1093
          %v1142 = vmul.f32 %v1117, %v1094
          %v1143 = vmul.f32 %v1122, %v1095
          %v1144 = vmul.f32 %v1127, %v1096
          %v1145 = vmul.f32 %v1132, %v1097
          %v1146 = vmul.f32 %v1137, %v1098
          %v1148 = vsel %vm913, %v1019, 0
          %v1151 = vsel %vm913, %v1021, 0
          %1153 = vmatprep.subr.mxu0 0.0
          %1154 = vmatpush1.msra.mxu0 %v522
          %1155 = vmatprep.subr.mxu0 0.0
          %1156 = vmatpush1.msra.mxu0 %v523
          %1157 = vmatprep.subr.mxu0 0.0
          %1158 = vmatpush1.msra.mxu0 0.0
          %1159 = vmatprep.subr.mxu0 0.0
          %1160 = vmatpush1.msra.mxu0 0.0
          %1161 = vmatprep.subr.mxu0 0.0
          %1162 = vmatpush1.msra.mxu0 0.0
          %1163 = vmatprep.subr.mxu0 0.0
          %1164 = vmatpush1.msra.mxu0 0.0
          %1165 = vmatprep.subr.mxu0 0.0
          %1166 = vmatpush1.msra.mxu0 0.0
          %1167 = vmatprep.subr.mxu0 0.0
          %1168 = vmatpush1.msra.mxu0 0.0
          %1169 = vmatprep.subr.mxu0 0.0
          %1170 = vmatpush1.msra.mxu0 0.0
          %1171 = vmatprep.subr.mxu0 0.0
          %1172 = vmatpush1.msra.mxu0 0.0
          %1173 = vmatprep.subr.mxu0 0.0
          %1174 = vmatpush1.msra.mxu0 0.0
          %1175 = vmatprep.subr.mxu0 0.0
          %1176 = vmatpush1.msra.mxu0 0.0
          %1177 = vmatprep.subr.mxu0 0.0
          %1178 = vmatpush1.msra.mxu0 0.0
          %1179 = vmatprep.subr.mxu0 0.0
          %1180 = vmatpush1.msra.mxu0 0.0
          %1181 = vmatprep.subr.mxu0 0.0
          %1182 = vmatpush1.msra.mxu0 0.0
          %1183 = vmatprep.subr.mxu0 0.0
          %1184 = vmatpush1.msra.mxu0 0.0
          %1185 = vmatprep.subr.mxu0 0.0
          %1186 = vmatpush1.msra.mxu0 0.0
          %1187 = vmatprep.subr.mxu0 0.0
          %1188 = vmatpush1.msra.mxu0 0.0
          %1189 = vmatprep.subr.mxu0 0.0
          %1190 = vmatpush1.msra.mxu0 0.0
          %1191 = vmatprep.subr.mxu0 0.0
          %1192 = vmatpush1.msra.mxu0 0.0
          %1193 = vmatprep.subr.mxu0 0.0
          %1194 = vmatpush1.msra.mxu0 0.0
          %1195 = vmatprep.subr.mxu0 0.0
          %1196 = vmatpush1.msra.mxu0 0.0
          %1197 = vmatprep.subr.mxu0 0.0
          %1198 = vmatpush1.msra.mxu0 0.0
          %1199 = vmatprep.subr.mxu0 0.0
          %1200 = vmatpush1.msra.mxu0 0.0
          %1201 = vmatprep.subr.mxu0 0.0
          %1202 = vmatpush1.msra.mxu0 0.0
          %1203 = vmatprep.subr.mxu0 0.0
          %1204 = vmatpush1.msra.mxu0 0.0
          %1205 = vmatprep.subr.mxu0 0.0
          %1206 = vmatpush1.msra.mxu0 0.0
          %1207 = vmatprep.subr.mxu0 0.0
          %1208 = vmatpush1.msra.mxu0 0.0
          %1209 = vmatprep.subr.mxu0 0.0
          %1210 = vmatpush1.msra.mxu0 0.0
          %1211 = vmatprep.subr.mxu0 0.0
          %1212 = vmatpush1.msra.mxu0 0.0
          %1213 = vmatprep.subr.mxu0 0.0
          %1214 = vmatpush1.msra.mxu0 0.0
          %1215 = vmatprep.subr.mxu0 0.0
          %1216 = vmatpush1.msra.mxu0 0.0
          %1217 = vmatprep.mubr.f32.mxu0 0.0
          %1218 = vmatmul.mubr.f32.gmra.mrb[0].mxu0 %v1148
          %v1219 = vpop.f32.mrb[0].mxu0
          %v1220 = vadd.f32 0.0, %v1219
          %v1221 = vpop.f32.mrb[0].mxu0
          %1222 = vmatprep.mubr.f32.mxu0 0.0
          %1223 = vmatmul.mubr.f32.gmra.mrb[0].mxu0 %v1151
          %v1224 = vpop.f32.mrb[0].mxu0
          %v1225 = vadd.f32 0.0, %v1224
          %v1226 = vpop.f32.mrb[0].mxu0
          %1227 = vdwg.mxu0
          %v1229 = vsel %vm913, %v1023, 0
          %v1232 = vsel %vm913, %v1025, 0
          %1234 = vmatprep.subr.mxu0 0.0
          %1235 = vmatpush1.msra.mxu0 %v524
          %1236 = vmatprep.subr.mxu0 0.0
          %1237 = vmatpush1.msra.mxu0 %v525
          %1238 = vmatprep.subr.mxu0 0.0
          %1239 = vmatpush1.msra.mxu0 0.0
          %1240 = vmatprep.subr.mxu0 0.0
          %1241 = vmatpush1.msra.mxu0 0.0
          %1242 = vmatprep.subr.mxu0 0.0
          %1243 = vmatpush1.msra.mxu0 0.0
          %1244 = vmatprep.subr.mxu0 0.0
          %1245 = vmatpush1.msra.mxu0 0.0
          %1246 = vmatprep.subr.mxu0 0.0
          %1247 = vmatpush1.msra.mxu0 0.0
          %1248 = vmatprep.subr.mxu0 0.0
          %1249 = vmatpush1.msra.mxu0 0.0
          %1250 = vmatprep.subr.mxu0 0.0
          %1251 = vmatpush1.msra.mxu0 0.0
          %1252 = vmatprep.subr.mxu0 0.0
          %1253 = vmatpush1.msra.mxu0 0.0
          %1254 = vmatprep.subr.mxu0 0.0
          %1255 = vmatpush1.msra.mxu0 0.0
          %1256 = vmatprep.subr.mxu0 0.0
          %1257 = vmatpush1.msra.mxu0 0.0
          %1258 = vmatprep.subr.mxu0 0.0
          %1259 = vmatpush1.msra.mxu0 0.0
          %1260 = vmatprep.subr.mxu0 0.0
          %1261 = vmatpush1.msra.mxu0 0.0
          %1262 = vmatprep.subr.mxu0 0.0
          %1263 = vmatpush1.msra.mxu0 0.0
          %1264 = vmatprep.subr.mxu0 0.0
          %1265 = vmatpush1.msra.mxu0 0.0
          %1266 = vmatprep.subr.mxu0 0.0
          %1267 = vmatpush1.msra.mxu0 0.0
          %1268 = vmatprep.subr.mxu0 0.0
          %1269 = vmatpush1.msra.mxu0 0.0
          %1270 = vmatprep.subr.mxu0 0.0
          %1271 = vmatpush1.msra.mxu0 0.0
          %1272 = vmatprep.subr.mxu0 0.0
          %1273 = vmatpush1.msra.mxu0 0.0
          %1274 = vmatprep.subr.mxu0 0.0
          %1275 = vmatpush1.msra.mxu0 0.0
          %1276 = vmatprep.subr.mxu0 0.0
          %1277 = vmatpush1.msra.mxu0 0.0
          %1278 = vmatprep.subr.mxu0 0.0
          %1279 = vmatpush1.msra.mxu0 0.0
          %1280 = vmatprep.subr.mxu0 0.0
          %1281 = vmatpush1.msra.mxu0 0.0
          %1282 = vmatprep.subr.mxu0 0.0
          %1283 = vmatpush1.msra.mxu0 0.0
          %1284 = vmatprep.subr.mxu0 0.0
          %1285 = vmatpush1.msra.mxu0 0.0
          %1286 = vmatprep.subr.mxu0 0.0
          %1287 = vmatpush1.msra.mxu0 0.0
          %1288 = vmatprep.subr.mxu0 0.0
          %1289 = vmatpush1.msra.mxu0 0.0
          %1290 = vmatprep.subr.mxu0 0.0
          %1291 = vmatpush1.msra.mxu0 0.0
          %1292 = vmatprep.subr.mxu0 0.0
          %1293 = vmatpush1.msra.mxu0 0.0
          %1294 = vmatprep.subr.mxu0 0.0
          %1295 = vmatpush1.msra.mxu0 0.0
          %1296 = vmatprep.subr.mxu0 0.0
          %1297 = vmatpush1.msra.mxu0 0.0
          %1298 = vmatprep.mubr.f32.mxu0 0.0
          %1299 = vmatmul.mubr.f32.gmra.mrb[0].mxu0 %v1229
          %v1300 = vpop.f32.mrb[0].mxu0
          %v1301 = vadd.f32 0.0, %v1300
          %v1302 = vpop.f32.mrb[0].mxu0
          %1303 = vmatprep.mubr.f32.mxu0 0.0
          %1304 = vmatmul.mubr.f32.gmra.mrb[0].mxu0 %v1232
          %v1305 = vpop.f32.mrb[0].mxu0
          %v1306 = vadd.f32 0.0, %v1305
          %v1307 = vpop.f32.mrb[0].mxu0
          %1308 = vdwg.mxu0
          %v1310 = vsel %vm913, %v1027, 0
          %v1313 = vsel %vm913, %v1029, 0
          %1315 = vmatprep.subr.mxu0 0.0
          %1316 = vmatpush1.msra.mxu0 %v526
          %1317 = vmatprep.subr.mxu0 0.0
          %1318 = vmatpush1.msra.mxu0 %v527
          %1319 = vmatprep.subr.mxu0 0.0
          %1320 = vmatpush1.msra.mxu0 0.0
          %1321 = vmatprep.subr.mxu0 0.0
          %1322 = vmatpush1.msra.mxu0 0.0
          %1323 = vmatprep.subr.mxu0 0.0
          %1324 = vmatpush1.msra.mxu0 0.0
          %1325 = vmatprep.subr.mxu0 0.0
          %1326 = vmatpush1.msra.mxu0 0.0
          %1327 = vmatprep.subr.mxu0 0.0
          %1328 = vmatpush1.msra.mxu0 0.0
          %1329 = vmatprep.subr.mxu0 0.0
          %1330 = vmatpush1.msra.mxu0 0.0
          %1331 = vmatprep.subr.mxu0 0.0
          %1332 = vmatpush1.msra.mxu0 0.0
          %1333 = vmatprep.subr.mxu0 0.0
          %1334 = vmatpush1.msra.mxu0 0.0
          %1335 = vmatprep.subr.mxu0 0.0
          %1336 = vmatpush1.msra.mxu0 0.0
          %1337 = vmatprep.subr.mxu0 0.0
          %1338 = vmatpush1.msra.mxu0 0.0
          %1339 = vmatprep.subr.mxu0 0.0
          %1340 = vmatpush1.msra.mxu0 0.0
          %1341 = vmatprep.subr.mxu0 0.0
          %1342 = vmatpush1.msra.mxu0 0.0
          %1343 = vmatprep.subr.mxu0 0.0
          %1344 = vmatpush1.msra.mxu0 0.0
          %1345 = vmatprep.subr.mxu0 0.0
          %1346 = vmatpush1.msra.mxu0 0.0
          %1347 = vmatprep.subr.mxu0 0.0
          %1348 = vmatpush1.msra.mxu0 0.0
          %1349 = vmatprep.subr.mxu0 0.0
          %1350 = vmatpush1.msra.mxu0 0.0
          %1351 = vmatprep.subr.mxu0 0.0
          %1352 = vmatpush1.msra.mxu0 0.0
          %1353 = vmatprep.subr.mxu0 0.0
          %1354 = vmatpush1.msra.mxu0 0.0
          %1355 = vmatprep.subr.mxu0 0.0
          %1356 = vmatpush1.msra.mxu0 0.0
          %1357 = vmatprep.subr.mxu0 0.0
          %1358 = vmatpush1.msra.mxu0 0.0
          %1359 = vmatprep.subr.mxu0 0.0
          %1360 = vmatpush1.msra.mxu0 0.0
          %1361 = vmatprep.subr.mxu0 0.0
          %1362 = vmatpush1.msra.mxu0 0.0
          %1363 = vmatprep.subr.mxu0 0.0
          %1364 = vmatpush1.msra.mxu0 0.0
          %1365 = vmatprep.subr.mxu0 0.0
          %1366 = vmatpush1.msra.mxu0 0.0
          %1367 = vmatprep.subr.mxu0 0.0
          %1368 = vmatpush1.msra.mxu0 0.0
          %1369 = vmatprep.subr.mxu0 0.0
          %1370 = vmatpush1.msra.mxu0 0.0
          %1371 = vmatprep.subr.mxu0 0.0
          %1372 = vmatpush1.msra.mxu0 0.0
          %1373 = vmatprep.subr.mxu0 0.0
          %1374 = vmatpush1.msra.mxu0 0.0
          %1375 = vmatprep.subr.mxu0 0.0
          %1376 = vmatpush1.msra.mxu0 0.0
          %1377 = vmatprep.subr.mxu0 0.0
          %1378 = vmatpush1.msra.mxu0 0.0
          %1379 = vmatprep.mubr.f32.mxu0 0.0
          %1380 = vmatmul.mubr.f32.gmra.mrb[0].mxu0 %v1310
          %v1381 = vpop.f32.mrb[0].mxu0
          %v1382 = vadd.f32 0.0, %v1381
          %v1383 = vpop.f32.mrb[0].mxu0
          %1384 = vmatprep.mubr.f32.mxu0 0.0
          %1385 = vmatmul.mubr.f32.gmra.mrb[0].mxu0 %v1313
          %v1386 = vpop.f32.mrb[0].mxu0
          %v1387 = vadd.f32 0.0, %v1386
          %v1388 = vpop.f32.mrb[0].mxu0
          %1389 = vdwg.mxu0
          %v1391 = vsel %vm913, %v1031, 0
          %v1394 = vsel %vm913, %v1033, 0
          %1396 = vmatprep.subr.mxu0 0.0
          %1397 = vmatpush1.msra.mxu0 %v528
          %1398 = vmatprep.subr.mxu0 0.0
          %1399 = vmatpush1.msra.mxu0 %v529
          %1400 = vmatprep.subr.mxu0 0.0
          %1401 = vmatpush1.msra.mxu0 0.0
          %1402 = vmatprep.subr.mxu0 0.0
          %1403 = vmatpush1.msra.mxu0 0.0
          %1404 = vmatprep.subr.mxu0 0.0
          %1405 = vmatpush1.msra.mxu0 0.0
          %1406 = vmatprep.subr.mxu0 0.0
          %1407 = vmatpush1.msra.mxu0 0.0
          %1408 = vmatprep.subr.mxu0 0.0
          %1409 = vmatpush1.msra.mxu0 0.0
          %1410 = vmatprep.subr.mxu0 0.0
          %1411 = vmatpush1.msra.mxu0 0.0
          %1412 = vmatprep.subr.mxu0 0.0
          %1413 = vmatpush1.msra.mxu0 0.0
          %1414 = vmatprep.subr.mxu0 0.0
          %1415 = vmatpush1.msra.mxu0 0.0
          %1416 = vmatprep.subr.mxu0 0.0
          %1417 = vmatpush1.msra.mxu0 0.0
          %1418 = vmatprep.subr.mxu0 0.0
          %1419 = vmatpush1.msra.mxu0 0.0
          %1420 = vmatprep.subr.mxu0 0.0
          %1421 = vmatpush1.msra.mxu0 0.0
          %1422 = vmatprep.subr.mxu0 0.0
          %1423 = vmatpush1.msra.mxu0 0.0
          %1424 = vmatprep.subr.mxu0 0.0
          %1425 = vmatpush1.msra.mxu0 0.0
          %1426 = vmatprep.subr.mxu0 0.0
          %1427 = vmatpush1.msra.mxu0 0.0
          %1428 = vmatprep.subr.mxu0 0.0
          %1429 = vmatpush1.msra.mxu0 0.0
          %1430 = vmatprep.subr.mxu0 0.0
          %1431 = vmatpush1.msra.mxu0 0.0
          %1432 = vmatprep.subr.mxu0 0.0
          %1433 = vmatpush1.msra.mxu0 0.0
          %1434 = vmatprep.subr.mxu0 0.0
          %1435 = vmatpush1.msra.mxu0 0.0
          %1436 = vmatprep.subr.mxu0 0.0
          %1437 = vmatpush1.msra.mxu0 0.0
          %1438 = vmatprep.subr.mxu0 0.0
          %1439 = vmatpush1.msra.mxu0 0.0
          %1440 = vmatprep.subr.mxu0 0.0
          %1441 = vmatpush1.msra.mxu0 0.0
          %1442 = vmatprep.subr.mxu0 0.0
          %1443 = vmatpush1.msra.mxu0 0.0
          %1444 = vmatprep.subr.mxu0 0.0
          %1445 = vmatpush1.msra.mxu0 0.0
          %1446 = vmatprep.subr.mxu0 0.0
          %1447 = vmatpush1.msra.mxu0 0.0
          %1448 = vmatprep.subr.mxu0 0.0
          %1449 = vmatpush1.msra.mxu0 0.0
          %1450 = vmatprep.subr.mxu0 0.0
          %1451 = vmatpush1.msra.mxu0 0.0
          %1452 = vmatprep.subr.mxu0 0.0
          %1453 = vmatpush1.msra.mxu0 0.0
          %1454 = vmatprep.subr.mxu0 0.0
          %1455 = vmatpush1.msra.mxu0 0.0
          %1456 = vmatprep.subr.mxu0 0.0
          %1457 = vmatpush1.msra.mxu0 0.0
          %1458 = vmatprep.subr.mxu0 0.0
          %1459 = vmatpush1.msra.mxu0 0.0
          %1460 = vmatprep.mubr.f32.mxu0 0.0
          %1461 = vmatmul.mubr.f32.gmra.mrb[0].mxu0 %v1391
          %v1462 = vpop.f32.mrb[0].mxu0
          %v1463 = vadd.f32 0.0, %v1462
          %v1464 = vpop.f32.mrb[0].mxu0
          %1465 = vmatprep.mubr.f32.mxu0 0.0
          %1466 = vmatmul.mubr.f32.gmra.mrb[0].mxu0 %v1394
          %v1467 = vpop.f32.mrb[0].mxu0
          %v1468 = vadd.f32 0.0, %v1467
          %v1469 = vpop.f32.mrb[0].mxu0
          %1470 = vdwg.mxu0
          %v1471 = vadd.f32 %v1139, %v1220
          %v1472 = vadd.f32 %v1140, %v1225
          %v1473 = vadd.f32 %v1141, %v1301
          %v1474 = vadd.f32 %v1142, %v1306
          %v1475 = vadd.f32 %v1143, %v1382
          %v1476 = vadd.f32 %v1144, %v1387
          %v1477 = vadd.f32 %v1145, %v1463
          %v1478 = vadd.f32 %v1146, %v1468
          %1479 = vst.msk [vmem:[#allocation4] sm:$0xff] %vm530, %v1471
          %1480 = vst.msk [vmem:[#allocation4 + $0x8] sm:$0xff] %vm530, %v1472
          %1481 = vst.msk [vmem:[#allocation4 + $0x10] sm:$0xff] %vm530, %v1473
          %1482 = vst.msk [vmem:[#allocation4 + $0x18] sm:$0xff] %vm530, %v1474
          %1483 = vst.msk [vmem:[#allocation4 + $0x20] sm:$0xff] %vm530, %v1475
          %1484 = vst.msk [vmem:[#allocation4 + $0x28] sm:$0xff] %vm530, %v1476
          %1485 = vst.msk [vmem:[#allocation4 + $0x30] sm:$0xff] %vm530, %v1477
          %1486 = vst.msk [vmem:[#allocation4 + $0x38] sm:$0xff] %vm530, %v1478
          %1487 = vst.msk [vmem:[#allocation2] sm:$0xff] %vm1082, %v938
          %1488 = vst.msk [vmem:[#allocation2 + $0x8] sm:$0xff] %vm1082, %v939
          %1489 = vst.msk [vmem:[#allocation2 + $0x10] sm:$0xff] %vm1082, %v940
          %1490 = vst.msk [vmem:[#allocation2 + $0x18] sm:$0xff] %vm1082, %v941
          %1491 = vst.msk [vmem:[#allocation2 + $0x20] sm:$0xff] %vm1082, %v942
          %1492 = vst.msk [vmem:[#allocation2 + $0x28] sm:$0xff] %vm1082, %v943
          %1493 = vst.msk [vmem:[#allocation2 + $0x30] sm:$0xff] %vm1082, %v944
          %1494 = vst.msk [vmem:[#allocation2 + $0x38] sm:$0xff] %vm1082, %v945
        $region76: #{gpt2_forward.8} parent=43 // pred_fallthru
          _
        %p1495 = scmp.eq.s32.totalorder %s37, %s36
        // Predicated region
        $region77: #{gpt2_forward.8} parent=43 // pred_check
          %p1496 = pneg %p1495
        $region78: #{gpt2_forward.8} parent=43 // pred_check_branch
          %1498 = sbr.rel (%p1496) target = $region80
        $region79: #{gpt2_forward.8} parent=43 // pred_region
          %v1499 = vld [vmem:[#allocation3] sm:$0xff]
          %v1500 = vld [vmem:[#allocation3 + $0x8] sm:$0xff]
          %v1501 = vld [vmem:[#allocation3 + $0x10] sm:$0xff]
          %v1502 = vld [vmem:[#allocation3 + $0x18] sm:$0xff]
          %v1503 = vld [vmem:[#allocation3 + $0x20] sm:$0xff]
          %v1504 = vld [vmem:[#allocation3 + $0x28] sm:$0xff]
          %v1505 = vld [vmem:[#allocation3 + $0x30] sm:$0xff]
          %v1506 = vld [vmem:[#allocation3 + $0x38] sm:$0xff]
          %v1507 = vrcp.pop %v1499
          %v1508 = vrcp.pop %v1500
          %v1509 = vrcp.pop %v1501
          %v1510 = vrcp.pop %v1502
          %v1511 = vrcp.pop %v1503
          %v1512 = vrcp.pop %v1504
          %v1513 = vrcp.pop %v1505
          %v1514 = vrcp.pop %v1506
          %v1515 = vld [vmem:[#allocation4] sm:$0xff]
          %v1516 = vld [vmem:[#allocation4 + $0x8] sm:$0xff]
          %v1517 = vld [vmem:[#allocation4 + $0x10] sm:$0xff]
          %v1518 = vld [vmem:[#allocation4 + $0x18] sm:$0xff]
          %v1519 = vld [vmem:[#allocation4 + $0x20] sm:$0xff]
          %v1520 = vld [vmem:[#allocation4 + $0x28] sm:$0xff]
          %v1521 = vld [vmem:[#allocation4 + $0x30] sm:$0xff]
          %v1522 = vld [vmem:[#allocation4 + $0x38] sm:$0xff]
          %1524 = vset.pattern.permute.xlu0 0
          %1525 = vperm.xlu0 %1524, %v1507
          %v1526 = vpop.permute.xlu0 %1525
          %1529 = vset.pattern.permute.xlu0 0
          %1530 = vperm.xlu0 %1529, %v1508
          %v1531 = vpop.permute.xlu0 %1530
          %1534 = vset.pattern.permute.xlu0 0
          %1535 = vperm.xlu0 %1534, %v1509
          %v1536 = vpop.permute.xlu0 %1535
          %1539 = vset.pattern.permute.xlu0 0
          %1540 = vperm.xlu0 %1539, %v1510
          %v1541 = vpop.permute.xlu0 %1540
          %1544 = vset.pattern.permute.xlu0 0
          %1545 = vperm.xlu0 %1544, %v1511
          %v1546 = vpop.permute.xlu0 %1545
          %1549 = vset.pattern.permute.xlu0 0
          %1550 = vperm.xlu0 %1549, %v1512
          %v1551 = vpop.permute.xlu0 %1550
          %1554 = vset.pattern.permute.xlu0 0
          %1555 = vperm.xlu0 %1554, %v1513
          %v1556 = vpop.permute.xlu0 %1555
          %1559 = vset.pattern.permute.xlu0 0
          %1560 = vperm.xlu0 %1559, %v1514
          %v1561 = vpop.permute.xlu0 %1560
          %v1563 = vmul.f32 %v1515, %v1526
          %v1564 = vmul.f32 %v1516, %v1531
          %v1565 = vmul.f32 %v1517, %v1536
          %v1566 = vmul.f32 %v1518, %v1541
          %v1567 = vmul.f32 %v1519, %v1546
          %v1568 = vmul.f32 %v1520, %v1551
          %v1569 = vmul.f32 %v1521, %v1556
          %v1570 = vmul.f32 %v1522, %v1561
          %v1571 = vld [vmem:[#allocation13] sm:$0xff]
          %s1572 = scalar_lea.vmem [#allocation13], 8
          %v1573 = vld [vmem:[%s1572] sm:$0xff]
          %vm1574 = vcmask 64512
          %v1576 = vsel %vm1574, %v1565, 0
          %v1579 = vsel %vm1574, %v1566, 0
          %1581 = vmatprep.subr.mxu0 0.0
          %1582 = vmatpush1.msra.mxu0 %v1573
          %1583 = vmatprep.subr.mxu0 0.0
          %1584 = vmatpush1.msra.mxu0 0.0
          %1585 = vmatprep.subr.mxu0 0.0
          %1586 = vmatpush1.msra.mxu0 0.0
          %1587 = vmatprep.subr.mxu0 0.0
          %1588 = vmatpush1.msra.mxu0 0.0
          %1589 = vmatprep.subr.mxu0 0.0
          %1590 = vmatpush1.msra.mxu0 0.0
          %1591 = vmatprep.subr.mxu0 0.0
          %1592 = vmatpush1.msra.mxu0 0.0
          %1593 = vmatprep.subr.mxu0 0.0
          %1594 = vmatpush1.msra.mxu0 0.0
          %1595 = vmatprep.subr.mxu0 0.0
          %1596 = vmatpush1.msra.mxu0 0.0
          %1597 = vmatprep.subr.mxu0 0.0
          %1598 = vmatpush1.msra.mxu0 0.0
          %1599 = vmatprep.subr.mxu0 0.0
          %1600 = vmatpush1.msra.mxu0 0.0
          %1601 = vmatprep.subr.mxu0 0.0
          %1602 = vmatpush1.msra.mxu0 0.0
          %1603 = vmatprep.subr.mxu0 0.0
          %1604 = vmatpush1.msra.mxu0 0.0
          %1605 = vmatprep.subr.mxu0 0.0
          %1606 = vmatpush1.msra.mxu0 0.0
          %1607 = vmatprep.subr.mxu0 0.0
          %1608 = vmatpush1.msra.mxu0 0.0
          %1609 = vmatprep.subr.mxu0 0.0
          %1610 = vmatpush1.msra.mxu0 0.0
          %1611 = vmatprep.subr.mxu0 0.0
          %1612 = vmatpush1.msra.mxu0 0.0
          %1613 = vmatprep.subr.mxu0 0.0
          %1614 = vmatpush1.msra.mxu0 0.0
          %1615 = vmatprep.subr.mxu0 0.0
          %1616 = vmatpush1.msra.mxu0 0.0
          %1617 = vmatprep.subr.mxu0 0.0
          %1618 = vmatpush1.msra.mxu0 0.0
          %1619 = vmatprep.subr.mxu0 0.0
          %1620 = vmatpush1.msra.mxu0 0.0
          %1621 = vmatprep.subr.mxu0 0.0
          %1622 = vmatpush1.msra.mxu0 0.0
          %1623 = vmatprep.subr.mxu0 0.0
          %1624 = vmatpush1.msra.mxu0 0.0
          %1625 = vmatprep.subr.mxu0 0.0
          %1626 = vmatpush1.msra.mxu0 0.0
          %1627 = vmatprep.subr.mxu0 0.0
          %1628 = vmatpush1.msra.mxu0 0.0
          %1629 = vmatprep.subr.mxu0 0.0
          %1630 = vmatpush1.msra.mxu0 0.0
          %1631 = vmatprep.subr.mxu0 0.0
          %1632 = vmatpush1.msra.mxu0 0.0
          %1633 = vmatprep.subr.mxu0 0.0
          %1634 = vmatpush1.msra.mxu0 0.0
          %1635 = vmatprep.subr.mxu0 0.0
          %1636 = vmatpush1.msra.mxu0 0.0
          %1637 = vmatprep.subr.mxu0 0.0
          %1638 = vmatpush1.msra.mxu0 0.0
          %1639 = vmatprep.subr.mxu0 0.0
          %1640 = vmatpush1.msra.mxu0 0.0
          %1641 = vmatprep.subr.mxu0 0.0
          %1642 = vmatpush1.msra.mxu0 0.0
          %1643 = vmatprep.subr.mxu0 0.0
          %1644 = vmatpush1.msra.mxu0 0.0
          %1645 = vmatprep.mubr.f32.mxu0 0.0
          %1646 = vmatmul.mubr.f32.gmra.mrb[0].mxu0 %v1576
          %v1647 = vpop.f32.mrb[0].mxu0
          %v1648 = vadd.f32 0.0, %v1647
          %v1649 = vpop.f32.mrb[0].mxu0
          %1650 = vmatprep.mubr.f32.mxu0 0.0
          %1651 = vmatmul.mubr.f32.gmra.mrb[0].mxu0 %v1579
          %v1652 = vpop.f32.mrb[0].mxu0
          %v1653 = vadd.f32 0.0, %v1652
          %v1654 = vpop.f32.mrb[0].mxu0
          %1655 = vdwg.mxu0
          %v1657 = vsel %vm1574, %v1563, 0
          %v1660 = vsel %vm1574, %v1564, 0
          %1662 = vmatprep.subr.mxu0 0.0
          %1663 = vmatpush1.msra.mxu0 %v1571
          %1664 = vmatprep.subr.mxu0 0.0
          %1665 = vmatpush1.msra.mxu0 0.0
          %1666 = vmatprep.subr.mxu0 0.0
          %1667 = vmatpush1.msra.mxu0 0.0
          %1668 = vmatprep.subr.mxu0 0.0
          %1669 = vmatpush1.msra.mxu0 0.0
          %1670 = vmatprep.subr.mxu0 0.0
          %1671 = vmatpush1.msra.mxu0 0.0
          %1672 = vmatprep.subr.mxu0 0.0
          %1673 = vmatpush1.msra.mxu0 0.0
          %1674 = vmatprep.subr.mxu0 0.0
          %1675 = vmatpush1.msra.mxu0 0.0
          %1676 = vmatprep.subr.mxu0 0.0
          %1677 = vmatpush1.msra.mxu0 0.0
          %1678 = vmatprep.subr.mxu0 0.0
          %1679 = vmatpush1.msra.mxu0 0.0
          %1680 = vmatprep.subr.mxu0 0.0
          %1681 = vmatpush1.msra.mxu0 0.0
          %1682 = vmatprep.subr.mxu0 0.0
          %1683 = vmatpush1.msra.mxu0 0.0
          %1684 = vmatprep.subr.mxu0 0.0
          %1685 = vmatpush1.msra.mxu0 0.0
          %1686 = vmatprep.subr.mxu0 0.0
          %1687 = vmatpush1.msra.mxu0 0.0
          %1688 = vmatprep.subr.mxu0 0.0
          %1689 = vmatpush1.msra.mxu0 0.0
          %1690 = vmatprep.subr.mxu0 0.0
          %1691 = vmatpush1.msra.mxu0 0.0
          %1692 = vmatprep.subr.mxu0 0.0
          %1693 = vmatpush1.msra.mxu0 0.0
          %1694 = vmatprep.subr.mxu0 0.0
          %1695 = vmatpush1.msra.mxu0 0.0
          %1696 = vmatprep.subr.mxu0 0.0
          %1697 = vmatpush1.msra.mxu0 0.0
          %1698 = vmatprep.subr.mxu0 0.0
          %1699 = vmatpush1.msra.mxu0 0.0
          %1700 = vmatprep.subr.mxu0 0.0
          %1701 = vmatpush1.msra.mxu0 0.0
          %1702 = vmatprep.subr.mxu0 0.0
          %1703 = vmatpush1.msra.mxu0 0.0
          %1704 = vmatprep.subr.mxu0 0.0
          %1705 = vmatpush1.msra.mxu0 0.0
          %1706 = vmatprep.subr.mxu0 0.0
          %1707 = vmatpush1.msra.mxu0 0.0
          %1708 = vmatprep.subr.mxu0 0.0
          %1709 = vmatpush1.msra.mxu0 0.0
          %1710 = vmatprep.subr.mxu0 0.0
          %1711 = vmatpush1.msra.mxu0 0.0
          %1712 = vmatprep.subr.mxu0 0.0
          %1713 = vmatpush1.msra.mxu0 0.0
          %1714 = vmatprep.subr.mxu0 0.0
          %1715 = vmatpush1.msra.mxu0 0.0
          %1716 = vmatprep.subr.mxu0 0.0
          %1717 = vmatpush1.msra.mxu0 0.0
          %1718 = vmatprep.subr.mxu0 0.0
          %1719 = vmatpush1.msra.mxu0 0.0
          %1720 = vmatprep.subr.mxu0 0.0
          %1721 = vmatpush1.msra.mxu0 0.0
          %1722 = vmatprep.subr.mxu0 0.0
          %1723 = vmatpush1.msra.mxu0 0.0
          %1724 = vmatprep.subr.mxu0 0.0
          %1725 = vmatpush1.msra.mxu0 0.0
          %1726 = vmatprep.mubr.f32.mxu0 0.0
          %1727 = vmatmul.mubr.f32.gmra.mrb[0].mxu0 %v1657
          %v1728 = vpop.f32.mrb[0].mxu0
          %v1729 = vadd.f32 %v1648, %v1728
          %v1730 = vpop.f32.mrb[0].mxu0
          %1731 = vmatprep.mubr.f32.mxu0 0.0
          %1732 = vmatmul.mubr.f32.gmra.mrb[0].mxu0 %v1660
          %v1733 = vpop.f32.mrb[0].mxu0
          %v1734 = vadd.f32 %v1653, %v1733
          %v1735 = vpop.f32.mrb[0].mxu0
          %1736 = vdwg.mxu0
          %s1737 = scalar_lea.vmem [#allocation13], 16
          %v1738 = vld [vmem:[%s1737] sm:$0xff]
          %v1740 = vsel %vm1574, %v1567, 0
          %v1743 = vsel %vm1574, %v1568, 0
          %1745 = vmatprep.subr.mxu0 0.0
          %1746 = vmatpush1.msra.mxu0 %v1738
          %1747 = vmatprep.subr.mxu0 0.0
          %1748 = vmatpush1.msra.mxu0 0.0
          %1749 = vmatprep.subr.mxu0 0.0
          %1750 = vmatpush1.msra.mxu0 0.0
          %1751 = vmatprep.subr.mxu0 0.0
          %1752 = vmatpush1.msra.mxu0 0.0
          %1753 = vmatprep.subr.mxu0 0.0
          %1754 = vmatpush1.msra.mxu0 0.0
          %1755 = vmatprep.subr.mxu0 0.0
          %1756 = vmatpush1.msra.mxu0 0.0
          %1757 = vmatprep.subr.mxu0 0.0
          %1758 = vmatpush1.msra.mxu0 0.0
          %1759 = vmatprep.subr.mxu0 0.0
          %1760 = vmatpush1.msra.mxu0 0.0
          %1761 = vmatprep.subr.mxu0 0.0
          %1762 = vmatpush1.msra.mxu0 0.0
          %1763 = vmatprep.subr.mxu0 0.0
          %1764 = vmatpush1.msra.mxu0 0.0
          %1765 = vmatprep.subr.mxu0 0.0
          %1766 = vmatpush1.msra.mxu0 0.0
          %1767 = vmatprep.subr.mxu0 0.0
          %1768 = vmatpush1.msra.mxu0 0.0
          %1769 = vmatprep.subr.mxu0 0.0
          %1770 = vmatpush1.msra.mxu0 0.0
          %1771 = vmatprep.subr.mxu0 0.0
          %1772 = vmatpush1.msra.mxu0 0.0
          %1773 = vmatprep.subr.mxu0 0.0
          %1774 = vmatpush1.msra.mxu0 0.0
          %1775 = vmatprep.subr.mxu0 0.0
          %1776 = vmatpush1.msra.mxu0 0.0
          %1777 = vmatprep.subr.mxu0 0.0
          %1778 = vmatpush1.msra.mxu0 0.0
          %1779 = vmatprep.subr.mxu0 0.0
          %1780 = vmatpush1.msra.mxu0 0.0
          %1781 = vmatprep.subr.mxu0 0.0
          %1782 = vmatpush1.msra.mxu0 0.0
          %1783 = vmatprep.subr.mxu0 0.0
          %1784 = vmatpush1.msra.mxu0 0.0
          %1785 = vmatprep.subr.mxu0 0.0
          %1786 = vmatpush1.msra.mxu0 0.0
          %1787 = vmatprep.subr.mxu0 0.0
          %1788 = vmatpush1.msra.mxu0 0.0
          %1789 = vmatprep.subr.mxu0 0.0
          %1790 = vmatpush1.msra.mxu0 0.0
          %1791 = vmatprep.subr.mxu0 0.0
          %1792 = vmatpush1.msra.mxu0 0.0
          %1793 = vmatprep.subr.mxu0 0.0
          %1794 = vmatpush1.msra.mxu0 0.0
          %1795 = vmatprep.subr.mxu0 0.0
          %1796 = vmatpush1.msra.mxu0 0.0
          %1797 = vmatprep.subr.mxu0 0.0
          %1798 = vmatpush1.msra.mxu0 0.0
          %1799 = vmatprep.subr.mxu0 0.0
          %1800 = vmatpush1.msra.mxu0 0.0
          %1801 = vmatprep.subr.mxu0 0.0
          %1802 = vmatpush1.msra.mxu0 0.0
          %1803 = vmatprep.subr.mxu0 0.0
          %1804 = vmatpush1.msra.mxu0 0.0
          %1805 = vmatprep.subr.mxu0 0.0
          %1806 = vmatpush1.msra.mxu0 0.0
          %1807 = vmatprep.subr.mxu0 0.0
          %1808 = vmatpush1.msra.mxu0 0.0
          %1809 = vmatprep.mubr.f32.mxu0 0.0
          %1810 = vmatmul.mubr.f32.gmra.mrb[0].mxu0 %v1740
          %v1811 = vpop.f32.mrb[0].mxu0
          %v1812 = vadd.f32 0.0, %v1811
          %v1813 = vpop.f32.mrb[0].mxu0
          %1814 = vmatprep.mubr.f32.mxu0 0.0
          %1815 = vmatmul.mubr.f32.gmra.mrb[0].mxu0 %v1743
          %v1816 = vpop.f32.mrb[0].mxu0
          %v1817 = vadd.f32 0.0, %v1816
          %v1818 = vpop.f32.mrb[0].mxu0
          %1819 = vdwg.mxu0
          %v1820 = vadd.f32 %v1729, %v1812
          %v1821 = vadd.f32 %v1734, %v1817
          %s1822 = scalar_lea.vmem [#allocation13], 24
          %v1823 = vld [vmem:[%s1822] sm:$0xff]
          %v1825 = vsel %vm1574, %v1569, 0
          %v1828 = vsel %vm1574, %v1570, 0
          %1830 = vmatprep.subr.mxu0 0.0
          %1831 = vmatpush1.msra.mxu0 %v1823
          %1832 = vmatprep.subr.mxu0 0.0
          %1833 = vmatpush1.msra.mxu0 0.0
          %1834 = vmatprep.subr.mxu0 0.0
          %1835 = vmatpush1.msra.mxu0 0.0
          %1836 = vmatprep.subr.mxu0 0.0
          %1837 = vmatpush1.msra.mxu0 0.0
          %1838 = vmatprep.subr.mxu0 0.0
          %1839 = vmatpush1.msra.mxu0 0.0
          %1840 = vmatprep.subr.mxu0 0.0
          %1841 = vmatpush1.msra.mxu0 0.0
          %1842 = vmatprep.subr.mxu0 0.0
          %1843 = vmatpush1.msra.mxu0 0.0
          %1844 = vmatprep.subr.mxu0 0.0
          %1845 = vmatpush1.msra.mxu0 0.0
          %1846 = vmatprep.subr.mxu0 0.0
          %1847 = vmatpush1.msra.mxu0 0.0
          %1848 = vmatprep.subr.mxu0 0.0
          %1849 = vmatpush1.msra.mxu0 0.0
          %1850 = vmatprep.subr.mxu0 0.0
          %1851 = vmatpush1.msra.mxu0 0.0
          %1852 = vmatprep.subr.mxu0 0.0
          %1853 = vmatpush1.msra.mxu0 0.0
          %1854 = vmatprep.subr.mxu0 0.0
          %1855 = vmatpush1.msra.mxu0 0.0
          %1856 = vmatprep.subr.mxu0 0.0
          %1857 = vmatpush1.msra.mxu0 0.0
          %1858 = vmatprep.subr.mxu0 0.0
          %1859 = vmatpush1.msra.mxu0 0.0
          %1860 = vmatprep.subr.mxu0 0.0
          %1861 = vmatpush1.msra.mxu0 0.0
          %1862 = vmatprep.subr.mxu0 0.0
          %1863 = vmatpush1.msra.mxu0 0.0
          %1864 = vmatprep.subr.mxu0 0.0
          %1865 = vmatpush1.msra.mxu0 0.0
          %1866 = vmatprep.subr.mxu0 0.0
          %1867 = vmatpush1.msra.mxu0 0.0
          %1868 = vmatprep.subr.mxu0 0.0
          %1869 = vmatpush1.msra.mxu0 0.0
          %1870 = vmatprep.subr.mxu0 0.0
          %1871 = vmatpush1.msra.mxu0 0.0
          %1872 = vmatprep.subr.mxu0 0.0
          %1873 = vmatpush1.msra.mxu0 0.0
          %1874 = vmatprep.subr.mxu0 0.0
          %1875 = vmatpush1.msra.mxu0 0.0
          %1876 = vmatprep.subr.mxu0 0.0
          %1877 = vmatpush1.msra.mxu0 0.0
          %1878 = vmatprep.subr.mxu0 0.0
          %1879 = vmatpush1.msra.mxu0 0.0
          %1880 = vmatprep.subr.mxu0 0.0
          %1881 = vmatpush1.msra.mxu0 0.0
          %1882 = vmatprep.subr.mxu0 0.0
          %1883 = vmatpush1.msra.mxu0 0.0
          %1884 = vmatprep.subr.mxu0 0.0
          %1885 = vmatpush1.msra.mxu0 0.0
          %1886 = vmatprep.subr.mxu0 0.0
          %1887 = vmatpush1.msra.mxu0 0.0
          %1888 = vmatprep.subr.mxu0 0.0
          %1889 = vmatpush1.msra.mxu0 0.0
          %1890 = vmatprep.subr.mxu0 0.0
          %1891 = vmatpush1.msra.mxu0 0.0
          %1892 = vmatprep.subr.mxu0 0.0
          %1893 = vmatpush1.msra.mxu0 0.0
          %1894 = vmatprep.mubr.f32.mxu0 0.0
          %1895 = vmatmul.mubr.f32.gmra.mrb[0].mxu0 %v1825
          %v1896 = vpop.f32.mrb[0].mxu0
          %v1897 = vadd.f32 0.0, %v1896
          %v1898 = vpop.f32.mrb[0].mxu0
          %1899 = vmatprep.mubr.f32.mxu0 0.0
          %1900 = vmatmul.mubr.f32.gmra.mrb[0].mxu0 %v1828
          %v1901 = vpop.f32.mrb[0].mxu0
          %v1902 = vadd.f32 0.0, %v1901
          %v1903 = vpop.f32.mrb[0].mxu0
          %1904 = vdwg.mxu0
          %v1905 = vadd.f32 %v1820, %v1897
          %v1906 = vadd.f32 %v1821, %v1902
          %v1907 = vld [vmem:[#allocation14] sm:$0x1]
          %v1909 = vlaneseq
          %v1910 = vshrl.u32 %v1909, 7
          %v1911 = vsub.s32 0, %v1910
          %v1912 = vrot.slane %v1907, %v1911
          %v1914 = vadd.f32 %v1905, %v1912
          %v1915 = vadd.f32 %v1906, %v1912
          %v1916 = vld [vmem:[%s384] sm:$0xff]
          %v1917 = vld [vmem:[%s384 + $0x8] sm:$0xff]
          %v1918 = vadd.f32 %v1916, %v1914
          %v1919 = vadd.f32 %v1917, %v1915
          %vm1920 = vcmask 261120
          %1921 = vst.msk [vmem:[%s462] sm:$0xff] %vm1920, %v1918
          %1922 = vst.msk [vmem:[%s462 + $0x8] sm:$0xff] %vm1920, %v1919
        $region80: #{gpt2_forward.8} parent=43 // pred_fallthru
          _
        %s1923 = sand.u32 %s221, 1
        %s1924 = scalar_lea.sflag [#allocation7], %s1923
        %s1925 = sand.u32 %s221, 1
        %s1926 = smul.addr %s1925, 16
        %s1927 = scalar_lea.vmem [#allocation16], %s1926
        // Predicated region
        $region81: #{gpt2_forward.8} parent=43 // pred_check
          %p1928 = pneg %p231
        $region82: #{gpt2_forward.8} parent=43 // pred_check_branch
          %1930 = sbr.rel (%p1928) target = $region84
        $region83: #{gpt2_forward.8} parent=43 // pred_region
          %s1931 = smul.u32 2, %s36
          %s1933 = ssub.s32 256, 256
          %1934 = vsyncadd %s1924, %s1933
          %s1935 = smul.addr %s35, 2
          %s1936 = sadd.s32 %s1931, %s1935
          %s1937 = smul.addr %s1936, 128
          %s1938 = scalar_lea.hbm %s6, %s1937
          %s1939 = sshll.u32 %s1927, 4
          %s1940 = int_to_ptr.vmem [resolvable:$true] %s1939
          %1945 = dma.vmem_to_hbm [thread:$0]  %s1940, 256, %s1938, %s1924, 128, 128, 8
        $region84: #{gpt2_forward.8} parent=43 // pred_fallthru
          _
      $region44: #{gpt2_forward.8} parent=5 // pred_fallthru
        _
      %p1946 = scmp.le.s32.totalorder 2, %s25
      // Predicated region
      $region85: #{gpt2_forward.8} parent=5 // pred_check
        %p1947 = pneg %p1946
      $region86: #{gpt2_forward.8} parent=5 // pred_check_branch
        %1949 = sbr.rel (%p1947) target = $region88
      $region87: #{gpt2_forward.8} parent=5 // pred_region
        %s1950 = ssub.s32 %s25, 2
        // Predicated region
        $region89: #{gpt2_forward.8} parent=87 // pred_check
          %p1951 = pneg %p237
        $region90: #{gpt2_forward.8} parent=87 // pred_check_branch
          %1953 = sbr.rel (%p1951) target = $region92
        $region91: #{gpt2_forward.8} parent=87 // pred_region
          %s1954 = sand.u32 %s222, 1
          %s1955 = scalar_lea.sflag [#allocation7], %s1954
          %s1956 = sand.u32 %s222, 1
          %s1957 = smul.addr %s1956, 16
          %s1958 = scalar_lea.vmem [#allocation16], %s1957
          %1959 = dma.done %s1955, 256
        $region92: #{gpt2_forward.8} parent=87 // pred_fallthru
          _
      $region88: #{gpt2_forward.8} parent=5 // pred_fallthru
        _
    $region6: #{gpt2_forward.8} parent=1 // loop_footer
      %s29 = sadd.s32 1, %s25
    $region7: #{gpt2_forward.8} parent=1 // loop_footer_branch
      %24 = sbr.rel target = $region3
    $region8: #{gpt2_forward.8} parent=1 // loop_exit
      _
    %1960 = vsyncpa [#allocation6], 1
    %s1961 = scalar_lea.sflag [#allocation6], 1
    %1962 = vsyncpa %s1961, 1
    %1963 = vsyncpa [#allocation9], 1
    %s1964 = scalar_lea.sflag [#allocation9], 1
    %1965 = vsyncpa %s1964, 1
    %1966 = vsyncpa [#allocation12], 1
    %s1967 = scalar_lea.sflag [#allocation12], 1
    %1968 = vsyncpa %s1967, 1
    %1969 = vsyncpa [#allocation15], 1
    %1970 = vsyncpa [#allocation7], 1
    %s1971 = scalar_lea.sflag [#allocation7], 1
    %1972 = vsyncpa %s1971, 1

</llo_original>
